<compile_context>
chip_gen: v7x
topology: tpu7x:2x2x1
jax: 0.10.0
libtpu: 0.0.40
codegen_flags: <defaults>
</compile_context>

<pallas_src>
import functools
import math

import jax
import jax.numpy as jnp
from jax.experimental import pallas as pl
from jax.experimental.pallas import tpu as pltpu

_LANES = 128


def _round_up(x, m):
    return ((x + m - 1) // m) * m


# ----------------------------------------------------------------------------
# Pallas kernels
# ----------------------------------------------------------------------------
def _encoder_kernel(n_pts, xcm_ref, w1t_ref, b1t_ref, w2_ref, b2_ref, out_ref):
    """PointNet-style shared MLP (3 -> H -> D) + per-cloud max-pool.

    xcm_ref: (3, gt*n_pts) channel-major, lane-dense point coordinates.
    w1t/b1t: (H, 3) / (H, 1) first layer (transposed).
    w2/b2:   (H, D) bf16 / (1, D) second layer.
    out_ref: (gt, D) pooled features.
    """
    D = w2_ref.shape[1]
    M = xcm_ref.shape[1]
    gt = M // n_pts

    xc = xcm_ref[...]                                           # (3, M) f32
    w1t = w1t_ref[...]                                          # (H, 3) f32
    # Layer 1 in the transposed domain: K=3 contraction as 3 VPU broadcast-FMAs.
    h_t = (w1t[:, 0:1] * xc[0:1, :]
           + w1t[:, 1:2] * xc[1:2, :]
           + w1t[:, 2:3] * xc[2:3, :]
           + b1t_ref[...])                                      # (H, M)
    h_t = jnp.maximum(h_t, 0.0)

    # One XLU transpose back to row-major points, then the MXU matmul.
    h = jnp.transpose(h_t).astype(jnp.bfloat16)                 # (M, H)
    f = jnp.dot(h, w2_ref[...], preferred_element_type=jnp.float32)   # (M, D)

    # Max-pool over the points of each cloud (sublane-group reduce); bias and
    # ReLU deferred to the pooled tensor (identical result, ~n_pts x fewer ops).
    pooled = jnp.max(f.reshape(gt, n_pts, D), axis=1)           # (gt, D)
    out_ref[...] = jnp.maximum(pooled + b2_ref[...], 0.0)


def _fused_head_kernel(n_patch, rows_ref, wqkv_ref, pw1_ref, pb1_ref,
                       pw2_ref, pb2_ref, qw1_ref, qb1_ref, qw2_ref, qb2_ref,
                       out_ref):
    """Per-sample: online+target cross-attn, fused projectors, predictor, loss.

    rows_ref: (1, 2+P, D)  rows = [gf1, gf2, patch_0 ... patch_{P-1}]
    wqkv_ref: (D, 6D) bf16 = [Wq_on|Wk_on|Wv_on|Wq_tg|Wk_tg|Wv_tg]
    pw1/pb1:  (D, 2Hm) bf16 / (1, 2Hm)   fused [online|target] projector layer 1
    pw2/pb2:  (2Hm, 2DP) bf16 / (1, 2DP) block-diag projector layer 2
    qw*/qb*:  predictor params
    out_ref:  (1, 1, 128) lane-dense per-sample (loss_1 + loss_2)
    """
    D = wqkv_ref.shape[0]
    DP = qw2_ref.shape[1]
    P = n_patch
    scale = 1.0 / math.sqrt(D)

    rows = rows_ref[0].astype(jnp.bfloat16)                      # (2+P, D)
    # One fused QKV matmul for BOTH branches; K/V shared by both queries.
    qkv = jnp.dot(rows, wqkv_ref[...],
                  preferred_element_type=jnp.float32)            # (2+P, 6D)

    q_on = qkv[0:2, 0:D]
    k_on = qkv[2:2 + P, D:2 * D]
    v_on = qkv[2:2 + P, 2 * D:3 * D]
    q_tg = qkv[0:2, 3 * D:4 * D]
    k_tg = qkv[2:2 + P, 4 * D:5 * D]
    v_tg = qkv[2:2 + P, 5 * D:6 * D]

    def attend(q, k, v):
        s = jax.lax.dot_general(
            q.astype(jnp.bfloat16), k.astype(jnp.bfloat16),
            (((1,), (1,)), ((), ())),
            preferred_element_type=jnp.float32) * scale          # (2, P)
        s = s - jnp.max(s, axis=-1, keepdims=True)
        e = jnp.exp(s)
        probs = e / jnp.sum(e, axis=-1, keepdims=True)           # exact softmax
        return jnp.dot(probs.astype(jnp.bfloat16), v.astype(jnp.bfloat16),
                       preferred_element_type=jnp.float32)       # (2, D)

    a_on = attend(q_on, k_on, v_on)       # online attn for queries [gf1, gf2]
    a_tg = attend(q_tg, k_tg, v_tg)       # target attn for queries [gf1, gf2]

    # Fused projectors: both branches through [w1_on | w1_tg], then the
    # block-diagonal [w2_on 0; 0 w2_tg] (built host-side).  BN affine folded.
    a_all = jnp.concatenate([a_on, a_tg], axis=0).astype(jnp.bfloat16)   # (4, D)
    h = jnp.dot(a_all, pw1_ref[...],
                preferred_element_type=jnp.float32) + pb1_ref[...]
    h = jnp.maximum(h, 0.0)                                              # (4, 2Hm)
    z = jnp.dot(h.astype(jnp.bfloat16), pw2_ref[...],
                preferred_element_type=jnp.float32) + pb2_ref[...]       # (4, 2DP)
    z_on = z[0:2, 0:DP]            # online projector(online attn(gf1, gf2))
    z_tg = z[2:4, DP:2 * DP]       # target projector(target attn(gf1, gf2))

    # Predictor on the online branch only.
    ph = jnp.maximum(
        jnp.dot(z_on.astype(jnp.bfloat16), qw1_ref[...],
                preferred_element_type=jnp.float32) + qb1_ref[...], 0.0)
    p_on = jnp.dot(ph.astype(jnp.bfloat16), qw2_ref[...],
                   preferred_element_type=jnp.float32) + qb2_ref[...]    # (2, DP)

    def cos_loss(x, y):            # BYOL-style: 2 - 2 * <x/|x|, y/|y|>
        xn = x * jax.lax.rsqrt(jnp.maximum(jnp.sum(x * x, -1, keepdims=True), 1e-16))
        yn = y * jax.lax.rsqrt(jnp.maximum(jnp.sum(y * y, -1, keepdims=True), 1e-16))
        return 2.0 - 2.0 * jnp.sum(xn * yn, -1, keepdims=True)           # (1, 1)

    # loss_1 = loss(pred(proj(onl_attn(gf1))), tgt_proj(tgt_attn(gf2)))
    # loss_2 = loss(pred(proj(onl_attn(gf2))), tgt_proj(tgt_attn(gf1)))
    l = cos_loss(p_on[0:1, :], z_tg[1:2, :]) + cos_loss(p_on[1:2, :], z_tg[0:1, :])
    out_ref[...] = jnp.broadcast_to(l, (1, 1, out_ref.shape[-1]))        # lane-dense


# ----------------------------------------------------------------------------
# Pallas wrappers
# ----------------------------------------------------------------------------
def encode(points, p, *, g_tile=64, m_cap=4096):
    """points: (G, N, 3) -> features (G, D), one pallas_call."""
    G, N, _ = points.shape
    H = p["w1t"].shape[0]
    D = p["w2"].shape[1]

    # Pad point count per cloud to a multiple of 8 by repeating points
    # (max-pool invariant).
    n_pts = _round_up(max(N, 8), 8)
    if n_pts != N:
        idx = jnp.arange(n_pts) % N
        points = points[:, idx, :]

    # Cloud-tile size: multiple of 8, gt*n_pts a multiple of 128 (lane-dense
    # block), capped so intermediates stay a few MiB on every generation.
    # TODO(synk): for very large clouds (n_pts >> 4096) the point axis should
    # additionally be streamed inside the kernel with a running max.
    g_align = math.lcm(8, 128 // math.gcd(n_pts, 128))
    gp_min = _round_up(G, g_align)
    cap = max(g_align, ((max(m_cap // n_pts, 1)) // g_align) * g_align)
    gt = max(g_align, min(gp_min, _round_up(g_tile, g_align), cap))
    Gp = _round_up(G, gt)
    if Gp != G:
        points = jnp.concatenate(
            [points, jnp.zeros((Gp - G, n_pts, 3), points.dtype)], axis=0)

    # Channel-major, lane-dense layout for the DMA: (3, Gp*n_pts).
    x_cm = jnp.transpose(points, (2, 0, 1)).reshape(3, Gp * n_pts)

    out = pl.pallas_call(
        functools.partial(_encoder_kernel, n_pts),
        out_shape=jax.ShapeDtypeStruct((Gp, D), jnp.float32),
        grid=(Gp // gt,),
        in_specs=[
            pl.BlockSpec((3, gt * n_pts), lambda i: (0, i)),
            pl.BlockSpec((H, 3), lambda i: (0, 0)),
            pl.BlockSpec((H, 1), lambda i: (0, 0)),
            pl.BlockSpec((H, D), lambda i: (0, 0)),
            pl.BlockSpec((1, D), lambda i: (0, 0)),
        ],
        out_specs=pl.BlockSpec((gt, D), lambda i: (i, 0)),
        compiler_params=pltpu.CompilerParams(dimension_semantics=("parallel",)),
    )(x_cm, p["w1t"], p["b1t"], p["w2"], p["b2"])
    return out[:G]


def fused_attn_proj_pred_loss(gf1, gf2, pf, head):
    """Fused cross-attn + projector/predictor + cosine loss.  Returns (B,)."""
    # TODO(synk): for large B, process several samples per grid step (Bt > 1)
    # to amortize per-step overhead; kept at 1 sample/step here (grid >= 2
    # already keeps both v7x TensorCores busy at B >= 2).
    B, P, D = pf.shape
    R = 2 + P
    rows = jnp.concatenate([gf1[:, None, :], gf2[:, None, :], pf], axis=1)  # (B,R,D)
    Hm2 = head["pw1"].shape[1]
    DP2 = head["pw2"].shape[1]
    Hm = head["qw1"].shape[1]
    DP = head["qw2"].shape[1]

    out = pl.pallas_call(
        functools.partial(_fused_head_kernel, P),
        out_shape=jax.ShapeDtypeStruct((B, 1, _LANES), jnp.float32),
        grid=(B,),
        in_specs=[
            pl.BlockSpec((1, R, D), lambda b: (b, 0, 0)),
            pl.BlockSpec((D, 6 * D), lambda b: (0, 0)),
            pl.BlockSpec((D, Hm2), lambda b: (0, 0)),
            pl.BlockSpec((1, Hm2), lambda b: (0, 0)),
            pl.BlockSpec((Hm2, DP2), lambda b: (0, 0)),
            pl.BlockSpec((1, DP2), lambda b: (0, 0)),
            pl.BlockSpec((DP, Hm), lambda b: (0, 0)),
            pl.BlockSpec((1, Hm), lambda b: (0, 0)),
            pl.BlockSpec((Hm, DP), lambda b: (0, 0)),
            pl.BlockSpec((1, DP), lambda b: (0, 0)),
        ],
        out_specs=pl.BlockSpec((1, 1, _LANES), lambda b: (b, 0, 0)),
        compiler_params=pltpu.CompilerParams(dimension_semantics=("parallel",)),
    )(rows, head["w_qkv"], head["pw1"], head["pb1"], head["pw2"], head["pb2"],
      head["qw1"], head["qb1"], head["qw2"], head["qb2"])
    return out[:, 0, 0]                                          # (B,)


# ----------------------------------------------------------------------------
# Parameter preparation (one-time, plain JAX): transposes, BN folding, bf16.
# ----------------------------------------------------------------------------
def prepare_encoder(p):
    return dict(w1t=jnp.transpose(p["w1"]),            # (H, 3) f32
                b1t=jnp.transpose(p["b1"]),             # (H, 1) f32
                w2=p["w2"].astype(jnp.bfloat16),        # (H, D)
                b2=p["b2"])                             # (1, D) f32


def _fold_bn(p):
    # TODO(synk): train-mode BatchNorm1d batch statistics not reproduced;
    # eval-mode affine (gamma/beta) is folded into the first conv.
    w1 = p["w1"] * p["gamma"]
    b1 = p["b1"] * p["gamma"] + p["beta"]
    return w1, b1, p["w2"], p["b2"]


def prepare_head(online_attn, target_attn, online_proj, target_proj, predictor):
    w_qkv = jnp.concatenate(
        [online_attn["wq"], online_attn["wk"], online_attn["wv"],
         target_attn["wq"], target_attn["wk"], target_attn["wv"]],
        axis=1).astype(jnp.bfloat16)                             # (D, 6D)

    ow1, ob1, ow2, ob2 = _fold_bn(online_proj)
    tw1, tb1, tw2, tb2 = _fold_bn(target_proj)
    Hm, DP = ow2.shape
    pw1 = jnp.concatenate([ow1, tw1], axis=1).astype(jnp.bfloat16)   # (D, 2Hm)
    pb1 = jnp.concatenate([ob1, tb1], axis=1)                        # (1, 2Hm)
    pw2 = jnp.zeros((2 * Hm, 2 * DP), jnp.float32)
    pw2 = pw2.at[:Hm, :DP].set(ow2).at[Hm:, DP:].set(tw2).astype(jnp.bfloat16)
    pb2 = jnp.concatenate([ob2, tb2], axis=1)                        # (1, 2DP)

    qw1, qb1, qw2, qb2 = _fold_bn(predictor)
    return dict(w_qkv=w_qkv, pw1=pw1, pb1=pb1, pw2=pw2, pb2=pb2,
                qw1=qw1.astype(jnp.bfloat16), qb1=qb1,
                qw2=qw2.astype(jnp.bfloat16), qb2=qb2)


# ----------------------------------------------------------------------------
# Plain-JAX glue: FPS, kNN patch gathering, momentum update
# ----------------------------------------------------------------------------
def b_fps(points, n):
    """Batched farthest point sampling: [B,N,3] -> (indices [B,n], samples [B,n,3])."""
    # TODO(synk): FPS is an inherently sequential data-dependent argmax loop;
    # kept in plain JAX.
    def one(pts):
        def body(i, state):
            idxs, dists = state
            last = pts[idxs[i - 1]]
            d = jnp.sum((pts - last) ** 2, axis=-1)
            dists = jnp.minimum(dists, d)
            nxt = jnp.argmax(dists).astype(jnp.int32)
            return idxs.at[i].set(nxt), dists

        idxs0 = jnp.zeros((n,), jnp.int32)
        dists0 = jnp.full((pts.shape[0],), 1e10, jnp.float32)
        idxs, _ = jax.lax.fori_loop(1, n, body, (idxs0, dists0))
        return idxs

    idxs = jax.vmap(one)(points)
    sampled = jax.vmap(lambda p, i: p[i])(points, idxs)
    return idxs, sampled


def knn_patches(points, centers, k):
    """points [B,N,3], centers [B,M,3] -> patches [B,M,k,3]."""
    d = jnp.sum((centers[:, :, None, :] - points[:, None, :, :]) ** 2, axis=-1)
    _, idx = jax.lax.top_k(-d, k)
    return jax.vmap(lambda p, i: p[i])(points, idx)


def _pad_points(x, n_to):
    """Pad the point axis (-2) of a cloud by repeating points (max-pool invariant)."""
    n = x.shape[-2]
    if n == n_to:
        return x
    idx = jnp.arange(n_to) % n
    return jnp.take(x, idx, axis=-2)


def momentum_update(online, target, m=0.99):
    """First call (target is None) copies the online params, as in the reference."""
    if target is None:
        return jax.tree_util.tree_map(lambda p: p, online)
    return jax.tree_util.tree_map(lambda o, t: m * t + (1.0 - m) * o, online, target)


# ----------------------------------------------------------------------------
# Full forward pass (mirrors SimAttention_Multi_X_Attn.forward)
# ----------------------------------------------------------------------------
def sim_attention_multi_x_attn_forward(params, aug1, aug2, patch_num_list,
                                       n_global=16, knn_k=8):
    target_enc = momentum_update(params["encoder"], None)
    target_proj = momentum_update(params["projector"], None)
    target_attn = momentum_update(params["attn"], None)
    # TODO(synk): pallas_call has no autodiff rule; stop_gradient documents the
    # BYOL target-branch semantics should a custom VJP be added later.
    target_enc, target_proj, target_attn = jax.lax.stop_gradient(
        (target_enc, target_proj, target_attn))

    enc_on = prepare_encoder(params["encoder"])
    enc_tg = prepare_encoder(target_enc)
    head = prepare_head(params["attn"], target_attn,
                        params["projector"], target_proj, params["predictor"])

    B = aug1.shape[0]
    D = params["encoder"]["w2"].shape[1]

    _, gs1 = b_fps(aug1, n_global)                     # (B, n_global, 3)
    _, gs2 = b_fps(aug2, n_global)

    # Patch clouds from both augmentations (FPS + kNN in plain JAX).
    clouds = []
    for n in patch_num_list:
        for aug in (aug1, aug2):
            _, centers = b_fps(aug, n)
            clouds.append(knn_patches(aug, centers, knn_k))   # (B, n, k, 3)
    total = 2 * sum(patch_num_list)

    # Fold the online-encoder global sample into the big patch encode so the
    # online encoder runs in a single pallas_call.
    n_pts = _round_up(max(n_global, knn_k, 8), 8)
    all_on = jnp.concatenate(
        [_pad_points(gs1[:, None], n_pts)]
        + [_pad_points(c, n_pts) for c in clouds], axis=1)    # (B, 1+total, n_pts, 3)
    feat_on = encode(all_on.reshape(B * (1 + total), n_pts, 3), enc_on)
    feat_on = feat_on.reshape(B, 1 + total, D)
    gf1 = feat_on[:, 0, :]              # online_encoder(global_sample1)
    pf = feat_on[:, 1:, :]              # patch features (shared keys/values)

    gf2 = encode(gs2, enc_tg)           # target_encoder(global_sample2)
    # gf3 = online(gs2), gf4 = target(gs1) are computed-then-unused in the
    # reference; dropped here (pure ops, result never consumed).

    per_sample = fused_attn_proj_pred_loss(gf1, gf2, pf, head)
    return jnp.mean(per_sample)         # mean over batch of (loss_1 + loss_2)


# ----------------------------------------------------------------------------
# Deterministic parameter init
# ----------------------------------------------------------------------------
def init_params(key, D=128, H_ENC=128, H_MLP=128, DP=128):
    ks = jax.random.split(key, 9)

    def lin(k, i, o):
        return (jax.random.normal(k, (i, o), jnp.float32) / math.sqrt(i)).astype(jnp.float32)

    encoder = dict(w1=lin(ks[0], 3, H_ENC), b1=jnp.zeros((1, H_ENC), jnp.float32),
                   w2=lin(ks[1], H_ENC, D), b2=jnp.zeros((1, D), jnp.float32))
    attn = dict(wq=lin(ks[2], D, D), wk=lin(ks[3], D, D), wv=lin(ks[4], D, D))

    def mlp(k1, k2, din, h, dout):
        return dict(w1=lin(k1, din, h), b1=jnp.zeros((1, h), jnp.float32),
                    gamma=jnp.ones((1, h), jnp.float32), beta=jnp.zeros((1, h), jnp.float32),
                    w2=lin(k2, h, dout), b2=jnp.zeros((1, dout), jnp.float32))

    projector = mlp(ks[5], ks[6], D, H_MLP, DP)
    predictor = mlp(ks[7], ks[8], DP, H_MLP, DP)
    return dict(encoder=encoder, attn=attn, projector=projector, predictor=predictor)


if __name__ == "__main__":
    key = jax.random.PRNGKey(0)
    k_in1, k_in2 = jax.random.split(key, 2)

    B, N = 2, 64                       # small point clouds
    aug1 = jax.random.normal(k_in1, (B, N, 3), jnp.float32)
    aug2 = jax.random.normal(k_in2, (B, N, 3), jnp.float32)

    params = init_params(jax.random.PRNGKey(42))
    patch_num_list = (2, 3)            # -> 2*(2+3) = 10 patch features per sample

    fwd = jax.jit(sim_attention_multi_x_attn_forward,
                  static_argnames=("patch_num_list", "n_global", "knn_k"))
    loss = fwd(params, aug1, aug2, patch_num_list, n_global=16, knn_k=8)
    jax.block_until_ready(loss)
    assert loss.shape == () and jnp.isfinite(loss)
    print("KERNEL_OK")
</pallas_src>

<mosaic_0001>
module attributes {stable_mosaic.version = 11 : i64} {
  func.func @_encoder_kernel(%arg0: i32, %arg1: memref<3x384xf32, #tpu.memory_space<vmem>>, %arg2: memref<128x3xf32, #tpu.memory_space<vmem>>, %arg3: memref<128x1xf32, #tpu.memory_space<vmem>>, %arg4: memref<128x128xbf16, #tpu.memory_space<vmem>>, %arg5: memref<1x128xf32, #tpu.memory_space<vmem>>, %arg6: memref<24x128xf32, #tpu.memory_space<vmem>>) attributes {dimension_semantics = [#tpu.dimension_semantics<parallel>], iteration_bounds = array<i64: 1>, scalar_prefetch = 0 : i64, scratch_operands = 0 : i64, tpu.core_type = #tpu.core_type<tc>, window_params = [{transform_indices = @transform_0, window_bounds = array<i64: 3, 384>}, {pipeline_mode = #tpu.pipeline_mode<synchronous>, transform_indices = @transform_1, window_bounds = array<i64: 128, 3>}, {pipeline_mode = #tpu.pipeline_mode<synchronous>, transform_indices = @transform_2, window_bounds = array<i64: 128, 1>}, {pipeline_mode = #tpu.pipeline_mode<synchronous>, transform_indices = @transform_3, window_bounds = array<i64: 128, 128>}, {pipeline_mode = #tpu.pipeline_mode<synchronous>, transform_indices = @transform_4, window_bounds = array<i64: 1, 128>}, {transform_indices = @transform_5, window_bounds = array<i64: 24, 128>}]} {
    %c0 = arith.constant 0 : index
    %c0_0 = arith.constant 0 : index
    %0 = vector.load %arg1[%c0, %c0_0] : memref<3x384xf32, #tpu.memory_space<vmem>>, vector<3x384xf32>
    %c0_1 = arith.constant 0 : index
    %c0_2 = arith.constant 0 : index
    %1 = vector.load %arg2[%c0_1, %c0_2] : memref<128x3xf32, #tpu.memory_space<vmem>>, vector<128x3xf32>
    %2 = vector.extract_strided_slice %1 {offsets = [0, 0], sizes = [128, 1], strides = [1, 1]} : vector<128x3xf32> to vector<128x1xf32>
    %3 = vector.extract_strided_slice %0 {offsets = [0, 0], sizes = [1, 384], strides = [1, 1]} : vector<3x384xf32> to vector<1x384xf32>
    %4 = vector.broadcast %2 : vector<128x1xf32> to vector<128x384xf32>
    %5 = vector.broadcast %3 : vector<1x384xf32> to vector<128x384xf32>
    %6 = arith.mulf %4, %5 : vector<128x384xf32>
    %7 = vector.extract_strided_slice %1 {offsets = [0, 1], sizes = [128, 1], strides = [1, 1]} : vector<128x3xf32> to vector<128x1xf32>
    %8 = vector.extract_strided_slice %0 {offsets = [1, 0], sizes = [1, 384], strides = [1, 1]} : vector<3x384xf32> to vector<1x384xf32>
    %9 = vector.broadcast %7 : vector<128x1xf32> to vector<128x384xf32>
    %10 = vector.broadcast %8 : vector<1x384xf32> to vector<128x384xf32>
    %11 = arith.mulf %9, %10 : vector<128x384xf32>
    %12 = arith.addf %6, %11 : vector<128x384xf32>
    %13 = vector.extract_strided_slice %1 {offsets = [0, 2], sizes = [128, 1], strides = [1, 1]} : vector<128x3xf32> to vector<128x1xf32>
    %14 = vector.extract_strided_slice %0 {offsets = [2, 0], sizes = [1, 384], strides = [1, 1]} : vector<3x384xf32> to vector<1x384xf32>
    %15 = vector.broadcast %13 : vector<128x1xf32> to vector<128x384xf32>
    %16 = vector.broadcast %14 : vector<1x384xf32> to vector<128x384xf32>
    %17 = arith.mulf %15, %16 : vector<128x384xf32>
    %18 = arith.addf %12, %17 : vector<128x384xf32>
    %c0_3 = arith.constant 0 : index
    %c0_4 = arith.constant 0 : index
    %19 = vector.load %arg3[%c0_3, %c0_4] : memref<128x1xf32, #tpu.memory_space<vmem>>, vector<128x1xf32>
    %20 = vector.broadcast %19 : vector<128x1xf32> to vector<128x384xf32>
    %21 = arith.addf %18, %20 : vector<128x384xf32>
    %cst = arith.constant 0.000000e+00 : f32
    %22 = vector.broadcast %cst : f32 to vector<128x384xf32>
    %23 = arith.maximumf %21, %22 : vector<128x384xf32>
    %24 = tpu.transpose %23, [1, 0] : vector<128x384xf32> -> vector<384x128xf32>
    %25 = arith.truncf %24 : vector<384x128xf32> to vector<384x128xbf16>
    %c0_5 = arith.constant 0 : index
    %c0_6 = arith.constant 0 : index
    %26 = vector.load %arg4[%c0_5, %c0_6] : memref<128x128xbf16, #tpu.memory_space<vmem>>, vector<128x128xbf16>
    %cst_7 = arith.constant dense<0.000000e+00> : vector<384x128xf32>
    %27 = tpu.matmul %25, %26, %cst_7 {dimension_numbers = #tpu.dot_dimension_numbers<[1], [0], [0], [1], [0, 0, 1, 1], [], []>} : vector<384x128xbf16>, vector<128x128xbf16>, vector<384x128xf32> -> vector<384x128xf32>
    %28 = vector.shape_cast %27 : vector<384x128xf32> to vector<24x16x128xf32>
    %cst_8 = arith.constant dense<0xFF800000> : vector<24x128xf32>
    %29 = vector.multi_reduction <maximumf>, %28, %cst_8 [1] : vector<24x16x128xf32> to vector<24x128xf32>
    %c0_9 = arith.constant 0 : index
    %c0_10 = arith.constant 0 : index
    %30 = vector.load %arg5[%c0_9, %c0_10] : memref<1x128xf32, #tpu.memory_space<vmem>>, vector<1x128xf32>
    %31 = vector.broadcast %30 : vector<1x128xf32> to vector<24x128xf32>
    %32 = arith.addf %29, %31 : vector<24x128xf32>
    %cst_11 = arith.constant 0.000000e+00 : f32
    %33 = vector.broadcast %cst_11 : f32 to vector<24x128xf32>
    %34 = arith.maximumf %32, %33 : vector<24x128xf32>
    %c0_12 = arith.constant 0 : index
    %c0_13 = arith.constant 0 : index
    %35 = vector.load %arg6[%c0_12, %c0_13] : memref<24x128xf32, #tpu.memory_space<vmem>>, vector<24x128xf32>
    tpu.vector_store %arg6[%c0_12, %c0_13], %34 {strides = array<i32>} : memref<24x128xf32, #tpu.memory_space<vmem>>, vector<24x128xf32>,
    return
  }
  func.func @transform_0(%arg0: i32) -> (i32, i32) {
    %c0_i32 = arith.constant 0 : i32
    %c0_i32_0 = arith.constant 0 : i32
    return %c0_i32, %arg0 : i32, i32
  }
  func.func @transform_1(%arg0: i32) -> (i32, i32) {
    %c0_i32 = arith.constant 0 : i32
    %c0_i32_0 = arith.constant 0 : i32
    %c0_i32_1 = arith.constant 0 : i32
    return %c0_i32, %c0_i32_0 : i32, i32
  }
  func.func @transform_2(%arg0: i32) -> (i32, i32) {
    %c0_i32 = arith.constant 0 : i32
    %c0_i32_0 = arith.constant 0 : i32
    %c0_i32_1 = arith.constant 0 : i32
    return %c0_i32, %c0_i32_0 : i32, i32
  }
  func.func @transform_3(%arg0: i32) -> (i32, i32) {
    %c0_i32 = arith.constant 0 : i32
    %c0_i32_0 = arith.constant 0 : i32
    %c0_i32_1 = arith.constant 0 : i32
    return %c0_i32, %c0_i32_0 : i32, i32
  }
  func.func @transform_4(%arg0: i32) -> (i32, i32) {
    %c0_i32 = arith.constant 0 : i32
    %c0_i32_0 = arith.constant 0 : i32
    %c0_i32_1 = arith.constant 0 : i32
    return %c0_i32, %c0_i32_0 : i32, i32
  }
  func.func @transform_5(%arg0: i32) -> (i32, i32) {
    %c0_i32 = arith.constant 0 : i32
    %c0_i32_0 = arith.constant 0 : i32
    return %arg0, %c0_i32 : i32, i32
  }
}

module attributes {stable_mosaic.version = 11 : i64} {
  func.func @_encoder_kernel(%arg0: i32, %arg1: memref<3x128xf32, #tpu.memory_space<vmem>>, %arg2: memref<128x3xf32, #tpu.memory_space<vmem>>, %arg3: memref<128x1xf32, #tpu.memory_space<vmem>>, %arg4: memref<128x128xbf16, #tpu.memory_space<vmem>>, %arg5: memref<1x128xf32, #tpu.memory_space<vmem>>, %arg6: memref<8x128xf32, #tpu.memory_space<vmem>>) attributes {dimension_semantics = [#tpu.dimension_semantics<parallel>], iteration_bounds = array<i64: 1>, scalar_prefetch = 0 : i64, scratch_operands = 0 : i64, tpu.core_type = #tpu.core_type<tc>, window_params = [{transform_indices = @transform_0, window_bounds = array<i64: 3, 128>}, {pipeline_mode = #tpu.pipeline_mode<synchronous>, transform_indices = @transform_1, window_bounds = array<i64: 128, 3>}, {pipeline_mode = #tpu.pipeline_mode<synchronous>, transform_indices = @transform_2, window_bounds = array<i64: 128, 1>}, {pipeline_mode = #tpu.pipeline_mode<synchronous>, transform_indices = @transform_3, window_bounds = array<i64: 128, 128>}, {pipeline_mode = #tpu.pipeline_mode<synchronous>, transform_indices = @transform_4, window_bounds = array<i64: 1, 128>}, {transform_indices = @transform_5, window_bounds = array<i64: 8, 128>}]} {
    %c0 = arith.constant 0 : index
    %c0_0 = arith.constant 0 : index
    %0 = vector.load %arg1[%c0, %c0_0] : memref<3x128xf32, #tpu.memory_space<vmem>>, vector<3x128xf32>
    %c0_1 = arith.constant 0 : index
    %c0_2 = arith.constant 0 : index
    %1 = vector.load %arg2[%c0_1, %c0_2] : memref<128x3xf32, #tpu.memory_space<vmem>>, vector<128x3xf32>
    %2 = vector.extract_strided_slice %1 {offsets = [0, 0], sizes = [128, 1], strides = [1, 1]} : vector<128x3xf32> to vector<128x1xf32>
    %3 = vector.extract_strided_slice %0 {offsets = [0, 0], sizes = [1, 128], strides = [1, 1]} : vector<3x128xf32> to vector<1x128xf32>
    %4 = vector.broadcast %2 : vector<128x1xf32> to vector<128x128xf32>
    %5 = vector.broadcast %3 : vector<1x128xf32> to vector<128x128xf32>
    %6 = arith.mulf %4, %5 : vector<128x128xf32>
    %7 = vector.extract_strided_slice %1 {offsets = [0, 1], sizes = [128, 1], strides = [1, 1]} : vector<128x3xf32> to vector<128x1xf32>
    %8 = vector.extract_strided_slice %0 {offsets = [1, 0], sizes = [1, 128], strides = [1, 1]} : vector<3x128xf32> to vector<1x128xf32>
    %9 = vector.broadcast %7 : vector<128x1xf32> to vector<128x128xf32>
    %10 = vector.broadcast %8 : vector<1x128xf32> to vector<128x128xf32>
    %11 = arith.mulf %9, %10 : vector<128x128xf32>
    %12 = arith.addf %6, %11 : vector<128x128xf32>
    %13 = vector.extract_strided_slice %1 {offsets = [0, 2], sizes = [128, 1], strides = [1, 1]} : vector<128x3xf32> to vector<128x1xf32>
    %14 = vector.extract_strided_slice %0 {offsets = [2, 0], sizes = [1, 128], strides = [1, 1]} : vector<3x128xf32> to vector<1x128xf32>
    %15 = vector.broadcast %13 : vector<128x1xf32> to vector<128x128xf32>
    %16 = vector.broadcast %14 : vector<1x128xf32> to vector<128x128xf32>
    %17 = arith.mulf %15, %16 : vector<128x128xf32>
    %18 = arith.addf %12, %17 : vector<128x128xf32>
    %c0_3 = arith.constant 0 : index
    %c0_4 = arith.constant 0 : index
    %19 = vector.load %arg3[%c0_3, %c0_4] : memref<128x1xf32, #tpu.memory_space<vmem>>, vector<128x1xf32>
    %20 = vector.broadcast %19 : vector<128x1xf32> to vector<128x128xf32>
    %21 = arith.addf %18, %20 : vector<128x128xf32>
    %cst = arith.constant 0.000000e+00 : f32
    %22 = vector.broadcast %cst : f32 to vector<128x128xf32>
    %23 = arith.maximumf %21, %22 : vector<128x128xf32>
    %24 = tpu.transpose %23, [1, 0] : vector<128x128xf32> -> vector<128x128xf32>
    %25 = arith.truncf %24 : vector<128x128xf32> to vector<128x128xbf16>
    %c0_5 = arith.constant 0 : index
    %c0_6 = arith.constant 0 : index
    %26 = vector.load %arg4[%c0_5, %c0_6] : memref<128x128xbf16, #tpu.memory_space<vmem>>, vector<128x128xbf16>
    %cst_7 = arith.constant dense<0.000000e+00> : vector<128x128xf32>
    %27 = tpu.matmul %25, %26, %cst_7 {dimension_numbers = #tpu.dot_dimension_numbers<[1], [0], [0], [1], [0, 0, 1, 1], [], []>} : vector<128x128xbf16>, vector<128x128xbf16>, vector<128x128xf32> -> vector<128x128xf32>
    %28 = vector.shape_cast %27 : vector<128x128xf32> to vector<8x16x128xf32>
    %cst_8 = arith.constant dense<0xFF800000> : vector<8x128xf32>
    %29 = vector.multi_reduction <maximumf>, %28, %cst_8 [1] : vector<8x16x128xf32> to vector<8x128xf32>
    %c0_9 = arith.constant 0 : index
    %c0_10 = arith.constant 0 : index
    %30 = vector.load %arg5[%c0_9, %c0_10] : memref<1x128xf32, #tpu.memory_space<vmem>>, vector<1x128xf32>
    %31 = vector.broadcast %30 : vector<1x128xf32> to vector<8x128xf32>
    %32 = arith.addf %29, %31 : vector<8x128xf32>
    %cst_11 = arith.constant 0.000000e+00 : f32
    %33 = vector.broadcast %cst_11 : f32 to vector<8x128xf32>
    %34 = arith.maximumf %32, %33 : vector<8x128xf32>
    %c0_12 = arith.constant 0 : index
    %c0_13 = arith.constant 0 : index
    %35 = vector.load %arg6[%c0_12, %c0_13] : memref<8x128xf32, #tpu.memory_space<vmem>>, vector<8x128xf32>
    tpu.vector_store %arg6[%c0_12, %c0_13], %34 {strides = array<i32>} : memref<8x128xf32, #tpu.memory_space<vmem>>, vector<8x128xf32>,
    return
  }
  func.func @transform_0(%arg0: i32) -> (i32, i32) {
    %c0_i32 = arith.constant 0 : i32
    %c0_i32_0 = arith.constant 0 : i32
    return %c0_i32, %arg0 : i32, i32
  }
  func.func @transform_1(%arg0: i32) -> (i32, i32) {
    %c0_i32 = arith.constant 0 : i32
    %c0_i32_0 = arith.constant 0 : i32
    %c0_i32_1 = arith.constant 0 : i32
    return %c0_i32, %c0_i32_0 : i32, i32
  }
  func.func @transform_2(%arg0: i32) -> (i32, i32) {
    %c0_i32 = arith.constant 0 : i32
    %c0_i32_0 = arith.constant 0 : i32
    %c0_i32_1 = arith.constant 0 : i32
    return %c0_i32, %c0_i32_0 : i32, i32
  }
  func.func @transform_3(%arg0: i32) -> (i32, i32) {
    %c0_i32 = arith.constant 0 : i32
    %c0_i32_0 = arith.constant 0 : i32
    %c0_i32_1 = arith.constant 0 : i32
    return %c0_i32, %c0_i32_0 : i32, i32
  }
  func.func @transform_4(%arg0: i32) -> (i32, i32) {
    %c0_i32 = arith.constant 0 : i32
    %c0_i32_0 = arith.constant 0 : i32
    %c0_i32_1 = arith.constant 0 : i32
    return %c0_i32, %c0_i32_0 : i32, i32
  }
  func.func @transform_5(%arg0: i32) -> (i32, i32) {
    %c0_i32 = arith.constant 0 : i32
    %c0_i32_0 = arith.constant 0 : i32
    return %arg0, %c0_i32 : i32, i32
  }
}

module attributes {stable_mosaic.version = 11 : i64} {
  func.func @_fused_head_kernel(%arg0: i32, %arg1: memref<1x12x128xf32, #tpu.memory_space<vmem>>, %arg2: memref<128x768xbf16, #tpu.memory_space<vmem>>, %arg3: memref<128x256xbf16, #tpu.memory_space<vmem>>, %arg4: memref<1x256xf32, #tpu.memory_space<vmem>>, %arg5: memref<256x256xbf16, #tpu.memory_space<vmem>>, %arg6: memref<1x256xf32, #tpu.memory_space<vmem>>, %arg7: memref<128x128xbf16, #tpu.memory_space<vmem>>, %arg8: memref<1x128xf32, #tpu.memory_space<vmem>>, %arg9: memref<128x128xbf16, #tpu.memory_space<vmem>>, %arg10: memref<1x128xf32, #tpu.memory_space<vmem>>, %arg11: memref<1x1x128xf32, #tpu.memory_space<vmem>>) attributes {dimension_semantics = [#tpu.dimension_semantics<parallel>], iteration_bounds = array<i64: 2>, scalar_prefetch = 0 : i64, scratch_operands = 0 : i64, tpu.core_type = #tpu.core_type<tc>, window_params = [{transform_indices = @transform_0, window_bounds = array<i64: 1, 12, 128>}, {pipeline_mode = #tpu.pipeline_mode<synchronous>, transform_indices = @transform_1, window_bounds = array<i64: 128, 768>}, {pipeline_mode = #tpu.pipeline_mode<synchronous>, transform_indices = @transform_2, window_bounds = array<i64: 128, 256>}, {pipeline_mode = #tpu.pipeline_mode<synchronous>, transform_indices = @transform_3, window_bounds = array<i64: 1, 256>}, {pipeline_mode = #tpu.pipeline_mode<synchronous>, transform_indices = @transform_4, window_bounds = array<i64: 256, 256>}, {pipeline_mode = #tpu.pipeline_mode<synchronous>, transform_indices = @transform_5, window_bounds = array<i64: 1, 256>}, {pipeline_mode = #tpu.pipeline_mode<synchronous>, transform_indices = @transform_6, window_bounds = array<i64: 128, 128>}, {pipeline_mode = #tpu.pipeline_mode<synchronous>, transform_indices = @transform_7, window_bounds = array<i64: 1, 128>}, {pipeline_mode = #tpu.pipeline_mode<synchronous>, transform_indices = @transform_8, window_bounds = array<i64: 128, 128>}, {pipeline_mode = #tpu.pipeline_mode<synchronous>, transform_indices = @transform_9, window_bounds = array<i64: 1, 128>}, {transform_indices = @transform_10, window_bounds = array<i64: 1, 1, 128>}]} {
    %c0 = arith.constant 0 : index
    %c0_0 = arith.constant 0 : index
    %c0_1 = arith.constant 0 : index
    %0 = vector.load %arg1[%c0, %c0_0, %c0_1] : memref<1x12x128xf32, #tpu.memory_space<vmem>>, vector<1x12x128xf32>
    %1 = vector.shape_cast %0 : vector<1x12x128xf32> to vector<12x128xf32>
    %2 = arith.truncf %1 : vector<12x128xf32> to vector<12x128xbf16>
    %c0_2 = arith.constant 0 : index
    %c0_3 = arith.constant 0 : index
    %3 = vector.load %arg2[%c0_2, %c0_3] : memref<128x768xbf16, #tpu.memory_space<vmem>>, vector<128x768xbf16>
    %cst = arith.constant dense<0.000000e+00> : vector<12x768xf32>
    %4 = tpu.matmul %2, %3, %cst {dimension_numbers = #tpu.dot_dimension_numbers<[1], [0], [0], [1], [0, 0, 1, 1], [], []>} : vector<12x128xbf16>, vector<128x768xbf16>, vector<12x768xf32> -> vector<12x768xf32>
    %5 = vector.extract_strided_slice %4 {offsets = [0, 0], sizes = [2, 128], strides = [1, 1]} : vector<12x768xf32> to vector<2x128xf32>
    %6 = vector.extract_strided_slice %4 {offsets = [2, 128], sizes = [10, 128], strides = [1, 1]} : vector<12x768xf32> to vector<10x128xf32>
    %7 = vector.extract_strided_slice %4 {offsets = [2, 256], sizes = [10, 128], strides = [1, 1]} : vector<12x768xf32> to vector<10x128xf32>
    %8 = vector.extract_strided_slice %4 {offsets = [0, 384], sizes = [2, 128], strides = [1, 1]} : vector<12x768xf32> to vector<2x128xf32>
    %9 = vector.extract_strided_slice %4 {offsets = [2, 512], sizes = [10, 128], strides = [1, 1]} : vector<12x768xf32> to vector<10x128xf32>
    %10 = vector.extract_strided_slice %4 {offsets = [2, 640], sizes = [10, 128], strides = [1, 1]} : vector<12x768xf32> to vector<10x128xf32>
    %11 = arith.truncf %5 : vector<2x128xf32> to vector<2x128xbf16>
    %12 = arith.truncf %6 : vector<10x128xf32> to vector<10x128xbf16>
    %cst_4 = arith.constant dense<0.000000e+00> : vector<2x10xf32>
    %13 = tpu.matmul %11, %12, %cst_4 {dimension_numbers = #tpu.dot_dimension_numbers<[1], [1], [0], [0], [0, 0, 1, 0], [], []>} : vector<2x128xbf16>, vector<10x128xbf16>, vector<2x10xf32> -> vector<2x10xf32>
    %cst_5 = arith.constant 0.0883883461 : f32
    %14 = vector.broadcast %cst_5 : f32 to vector<2x10xf32>
    %15 = arith.mulf %13, %14 : vector<2x10xf32>
    %cst_6 = arith.constant dense<0xFF800000> : vector<2xf32>
    %16 = vector.multi_reduction <maximumf>, %15, %cst_6 [1] : vector<2x10xf32> to vector<2xf32>
    %17 = vector.shape_cast %16 : vector<2xf32> to vector<2x1xf32>
    %18 = vector.broadcast %17 : vector<2x1xf32> to vector<2x10xf32>
    %19 = arith.subf %15, %18 : vector<2x10xf32>
    %20 = math.exp %19 : vector<2x10xf32>
    %cst_7 = arith.constant dense<0.000000e+00> : vector<2xf32>
    %21 = vector.multi_reduction <add>, %20, %cst_7 [1] : vector<2x10xf32> to vector<2xf32>
    %22 = vector.shape_cast %21 : vector<2xf32> to vector<2x1xf32>
    %23 = vector.broadcast %22 : vector<2x1xf32> to vector<2x10xf32>
    %24 = arith.divf %20, %23 : vector<2x10xf32>
    %25 = arith.truncf %24 : vector<2x10xf32> to vector<2x10xbf16>
    %26 = arith.truncf %7 : vector<10x128xf32> to vector<10x128xbf16>
    %cst_8 = arith.constant dense<0.000000e+00> : vector<2x128xf32>
    %27 = tpu.matmul %25, %26, %cst_8 {dimension_numbers = #tpu.dot_dimension_numbers<[1], [0], [0], [1], [0, 0, 1, 1], [], []>} : vector<2x10xbf16>, vector<10x128xbf16>, vector<2x128xf32> -> vector<2x128xf32>
    %28 = arith.truncf %8 : vector<2x128xf32> to vector<2x128xbf16>
    %29 = arith.truncf %9 : vector<10x128xf32> to vector<10x128xbf16>
    %cst_9 = arith.constant dense<0.000000e+00> : vector<2x10xf32>
    %30 = tpu.matmul %28, %29, %cst_9 {dimension_numbers = #tpu.dot_dimension_numbers<[1], [1], [0], [0], [0, 0, 1, 0], [], []>} : vector<2x128xbf16>, vector<10x128xbf16>, vector<2x10xf32> -> vector<2x10xf32>
    %cst_10 = arith.constant 0.0883883461 : f32
    %31 = vector.broadcast %cst_10 : f32 to vector<2x10xf32>
    %32 = arith.mulf %30, %31 : vector<2x10xf32>
    %cst_11 = arith.constant dense<0xFF800000> : vector<2xf32>
    %33 = vector.multi_reduction <maximumf>, %32, %cst_11 [1] : vector<2x10xf32> to vector<2xf32>
    %34 = vector.shape_cast %33 : vector<2xf32> to vector<2x1xf32>
    %35 = vector.broadcast %34 : vector<2x1xf32> to vector<2x10xf32>
    %36 = arith.subf %32, %35 : vector<2x10xf32>
    %37 = math.exp %36 : vector<2x10xf32>
    %cst_12 = arith.constant dense<0.000000e+00> : vector<2xf32>
    %38 = vector.multi_reduction <add>, %37, %cst_12 [1] : vector<2x10xf32> to vector<2xf32>
    %39 = vector.shape_cast %38 : vector<2xf32> to vector<2x1xf32>
    %40 = vector.broadcast %39 : vector<2x1xf32> to vector<2x10xf32>
    %41 = arith.divf %37, %40 : vector<2x10xf32>
    %42 = arith.truncf %41 : vector<2x10xf32> to vector<2x10xbf16>
    %43 = arith.truncf %10 : vector<10x128xf32> to vector<10x128xbf16>
    %cst_13 = arith.constant dense<0.000000e+00> : vector<2x128xf32>
    %44 = tpu.matmul %42, %43, %cst_13 {dimension_numbers = #tpu.dot_dimension_numbers<[1], [0], [0], [1], [0, 0, 1, 1], [], []>} : vector<2x10xbf16>, vector<10x128xbf16>, vector<2x128xf32> -> vector<2x128xf32>
    %45 = tpu.concatenate %27, %44 in 0 : vector<2x128xf32>, vector<2x128xf32> -> vector<4x128xf32>
    %46 = arith.truncf %45 : vector<4x128xf32> to vector<4x128xbf16>
    %c0_14 = arith.constant 0 : index
    %c0_15 = arith.constant 0 : index
    %47 = vector.load %arg3[%c0_14, %c0_15] : memref<128x256xbf16, #tpu.memory_space<vmem>>, vector<128x256xbf16>
    %cst_16 = arith.constant dense<0.000000e+00> : vector<4x256xf32>
    %48 = tpu.matmul %46, %47, %cst_16 {dimension_numbers = #tpu.dot_dimension_numbers<[1], [0], [0], [1], [0, 0, 1, 1], [], []>} : vector<4x128xbf16>, vector<128x256xbf16>, vector<4x256xf32> -> vector<4x256xf32>
    %c0_17 = arith.constant 0 : index
    %c0_18 = arith.constant 0 : index
    %49 = vector.load %arg4[%c0_17, %c0_18] : memref<1x256xf32, #tpu.memory_space<vmem>>, vector<1x256xf32>
    %50 = vector.broadcast %49 : vector<1x256xf32> to vector<4x256xf32>
    %51 = arith.addf %48, %50 : vector<4x256xf32>
    %cst_19 = arith.constant 0.000000e+00 : f32
    %52 = vector.broadcast %cst_19 : f32 to vector<4x256xf32>
    %53 = arith.maximumf %51, %52 : vector<4x256xf32>
    %54 = arith.truncf %53 : vector<4x256xf32> to vector<4x256xbf16>
    %c0_20 = arith.constant 0 : index
    %c0_21 = arith.constant 0 : index
    %55 = vector.load %arg5[%c0_20, %c0_21] : memref<256x256xbf16, #tpu.memory_space<vmem>>, vector<256x256xbf16>
    %cst_22 = arith.constant dense<0.000000e+00> : vector<4x256xf32>
    %56 = tpu.matmul %54, %55, %cst_22 {dimension_numbers = #tpu.dot_dimension_numbers<[1], [0], [0], [1], [0, 0, 1, 1], [], []>} : vector<4x256xbf16>, vector<256x256xbf16>, vector<4x256xf32> -> vector<4x256xf32>
    %c0_23 = arith.constant 0 : index
    %c0_24 = arith.constant 0 : index
    %57 = vector.load %arg6[%c0_23, %c0_24] : memref<1x256xf32, #tpu.memory_space<vmem>>, vector<1x256xf32>
    %58 = vector.broadcast %57 : vector<1x256xf32> to vector<4x256xf32>
    %59 = arith.addf %56, %58 : vector<4x256xf32>
    %60 = vector.extract_strided_slice %59 {offsets = [0, 0], sizes = [2, 128], strides = [1, 1]} : vector<4x256xf32> to vector<2x128xf32>
    %61 = vector.extract_strided_slice %59 {offsets = [2, 128], sizes = [2, 128], strides = [1, 1]} : vector<4x256xf32> to vector<2x128xf32>
    %62 = arith.truncf %60 : vector<2x128xf32> to vector<2x128xbf16>
    %c0_25 = arith.constant 0 : index
    %c0_26 = arith.constant 0 : index
    %63 = vector.load %arg7[%c0_25, %c0_26] : memref<128x128xbf16, #tpu.memory_space<vmem>>, vector<128x128xbf16>
    %cst_27 = arith.constant dense<0.000000e+00> : vector<2x128xf32>
    %64 = tpu.matmul %62, %63, %cst_27 {dimension_numbers = #tpu.dot_dimension_numbers<[1], [0], [0], [1], [0, 0, 1, 1], [], []>} : vector<2x128xbf16>, vector<128x128xbf16>, vector<2x128xf32> -> vector<2x128xf32>
    %c0_28 = arith.constant 0 : index
    %c0_29 = arith.constant 0 : index
    %65 = vector.load %arg8[%c0_28, %c0_29] : memref<1x128xf32, #tpu.memory_space<vmem>>, vector<1x128xf32>
    %66 = vector.broadcast %65 : vector<1x128xf32> to vector<2x128xf32>
    %67 = arith.addf %64, %66 : vector<2x128xf32>
    %cst_30 = arith.constant 0.000000e+00 : f32
    %68 = vector.broadcast %cst_30 : f32 to vector<2x128xf32>
    %69 = arith.maximumf %67, %68 : vector<2x128xf32>
    %70 = arith.truncf %69 : vector<2x128xf32> to vector<2x128xbf16>
    %c0_31 = arith.constant 0 : index
    %c0_32 = arith.constant 0 : index
    %71 = vector.load %arg9[%c0_31, %c0_32] : memref<128x128xbf16, #tpu.memory_space<vmem>>, vector<128x128xbf16>
    %cst_33 = arith.constant dense<0.000000e+00> : vector<2x128xf32>
    %72 = tpu.matmul %70, %71, %cst_33 {dimension_numbers = #tpu.dot_dimension_numbers<[1], [0], [0], [1], [0, 0, 1, 1], [], []>} : vector<2x128xbf16>, vector<128x128xbf16>, vector<2x128xf32> -> vector<2x128xf32>
    %c0_34 = arith.constant 0 : index
    %c0_35 = arith.constant 0 : index
    %73 = vector.load %arg10[%c0_34, %c0_35] : memref<1x128xf32, #tpu.memory_space<vmem>>, vector<1x128xf32>
    %74 = vector.broadcast %73 : vector<1x128xf32> to vector<2x128xf32>
    %75 = arith.addf %72, %74 : vector<2x128xf32>
    %76 = vector.extract_strided_slice %75 {offsets = [0, 0], sizes = [1, 128], strides = [1, 1]} : vector<2x128xf32> to vector<1x128xf32>
    %77 = vector.extract_strided_slice %61 {offsets = [1, 0], sizes = [1, 128], strides = [1, 1]} : vector<2x128xf32> to vector<1x128xf32>
    %78 = arith.mulf %76, %76 : vector<1x128xf32>
    %cst_36 = arith.constant dense<0.000000e+00> : vector<1xf32>
    %79 = vector.multi_reduction <add>, %78, %cst_36 [1] : vector<1x128xf32> to vector<1xf32>
    %80 = vector.shape_cast %79 : vector<1xf32> to vector<1x1xf32>
    %cst_37 = arith.constant 1.000000e-16 : f32
    %81 = vector.broadcast %cst_37 : f32 to vector<1x1xf32>
    %82 = arith.maximumf %80, %81 : vector<1x1xf32>
    %83 = math.rsqrt %82 : vector<1x1xf32>
    %84 = vector.broadcast %83 : vector<1x1xf32> to vector<1x128xf32>
    %85 = arith.mulf %76, %84 : vector<1x128xf32>
    %86 = arith.mulf %77, %77 : vector<1x128xf32>
    %cst_38 = arith.constant dense<0.000000e+00> : vector<1xf32>
    %87 = vector.multi_reduction <add>, %86, %cst_38 [1] : vector<1x128xf32> to vector<1xf32>
    %88 = vector.shape_cast %87 : vector<1xf32> to vector<1x1xf32>
    %cst_39 = arith.constant 1.000000e-16 : f32
    %89 = vector.broadcast %cst_39 : f32 to vector<1x1xf32>
    %90 = arith.maximumf %88, %89 : vector<1x1xf32>
    %91 = math.rsqrt %90 : vector<1x1xf32>
    %92 = vector.broadcast %91 : vector<1x1xf32> to vector<1x128xf32>
    %93 = arith.mulf %77, %92 : vector<1x128xf32>
    %94 = arith.mulf %85, %93 : vector<1x128xf32>
    %cst_40 = arith.constant dense<0.000000e+00> : vector<1xf32>
    %95 = vector.multi_reduction <add>, %94, %cst_40 [1] : vector<1x128xf32> to vector<1xf32>
    %96 = vector.shape_cast %95 : vector<1xf32> to vector<1x1xf32>
    %cst_41 = arith.constant 2.000000e+00 : f32
    %97 = vector.broadcast %cst_41 : f32 to vector<1x1xf32>
    %98 = arith.mulf %97, %96 : vector<1x1xf32>
    %cst_42 = arith.constant 2.000000e+00 : f32
    %99 = vector.broadcast %cst_42 : f32 to vector<1x1xf32>
    %100 = arith.subf %99, %98 : vector<1x1xf32>
    %101 = vector.extract_strided_slice %75 {offsets = [1, 0], sizes = [1, 128], strides = [1, 1]} : vector<2x128xf32> to vector<1x128xf32>
    %102 = vector.extract_strided_slice %61 {offsets = [0, 0], sizes = [1, 128], strides = [1, 1]} : vector<2x128xf32> to vector<1x128xf32>
    %103 = arith.mulf %101, %101 : vector<1x128xf32>
    %cst_43 = arith.constant dense<0.000000e+00> : vector<1xf32>
    %104 = vector.multi_reduction <add>, %103, %cst_43 [1] : vector<1x128xf32> to vector<1xf32>
    %105 = vector.shape_cast %104 : vector<1xf32> to vector<1x1xf32>
    %cst_44 = arith.constant 1.000000e-16 : f32
    %106 = vector.broadcast %cst_44 : f32 to vector<1x1xf32>
    %107 = arith.maximumf %105, %106 : vector<1x1xf32>
    %108 = math.rsqrt %107 : vector<1x1xf32>
    %109 = vector.broadcast %108 : vector<1x1xf32> to vector<1x128xf32>
    %110 = arith.mulf %101, %109 : vector<1x128xf32>
    %111 = arith.mulf %102, %102 : vector<1x128xf32>
    %cst_45 = arith.constant dense<0.000000e+00> : vector<1xf32>
    %112 = vector.multi_reduction <add>, %111, %cst_45 [1] : vector<1x128xf32> to vector<1xf32>
    %113 = vector.shape_cast %112 : vector<1xf32> to vector<1x1xf32>
    %cst_46 = arith.constant 1.000000e-16 : f32
    %114 = vector.broadcast %cst_46 : f32 to vector<1x1xf32>
    %115 = arith.maximumf %113, %114 : vector<1x1xf32>
    %116 = math.rsqrt %115 : vector<1x1xf32>
    %117 = vector.broadcast %116 : vector<1x1xf32> to vector<1x128xf32>
    %118 = arith.mulf %102, %117 : vector<1x128xf32>
    %119 = arith.mulf %110, %118 : vector<1x128xf32>
    %cst_47 = arith.constant dense<0.000000e+00> : vector<1xf32>
    %120 = vector.multi_reduction <add>, %119, %cst_47 [1] : vector<1x128xf32> to vector<1xf32>
    %121 = vector.shape_cast %120 : vector<1xf32> to vector<1x1xf32>
    %cst_48 = arith.constant 2.000000e+00 : f32
    %122 = vector.broadcast %cst_48 : f32 to vector<1x1xf32>
    %123 = arith.mulf %122, %121 : vector<1x1xf32>
    %cst_49 = arith.constant 2.000000e+00 : f32
    %124 = vector.broadcast %cst_49 : f32 to vector<1x1xf32>
    %125 = arith.subf %124, %123 : vector<1x1xf32>
    %126 = arith.addf %100, %125 : vector<1x1xf32>
    %127 = vector.shape_cast %126 : vector<1x1xf32> to vector<1x1x1xf32>
    %128 = vector.broadcast %127 : vector<1x1x1xf32> to vector<1x1x128xf32>
    %c0_50 = arith.constant 0 : index
    %c0_51 = arith.constant 0 : index
    %c0_52 = arith.constant 0 : index
    %129 = vector.load %arg11[%c0_50, %c0_51, %c0_52] : memref<1x1x128xf32, #tpu.memory_space<vmem>>, vector<1x1x128xf32>
    tpu.vector_store %arg11[%c0_50, %c0_51, %c0_52], %128 {strides = array<i32>} : memref<1x1x128xf32, #tpu.memory_space<vmem>>, vector<1x1x128xf32>,
    return
  }
  func.func @transform_0(%arg0: i32) -> (i32, i32, i32) {
    %c0_i32 = arith.constant 0 : i32
    %c0_i32_0 = arith.constant 0 : i32
    %c0_i32_1 = arith.constant 0 : i32
    return %arg0, %c0_i32, %c0_i32_0 : i32, i32, i32
  }
  func.func @transform_1(%arg0: i32) -> (i32, i32) {
    %c0_i32 = arith.constant 0 : i32
    %c0_i32_0 = arith.constant 0 : i32
    %c0_i32_1 = arith.constant 0 : i32
    return %c0_i32, %c0_i32_0 : i32, i32
  }
  func.func @transform_2(%arg0: i32) -> (i32, i32) {
    %c0_i32 = arith.constant 0 : i32
    %c0_i32_0 = arith.constant 0 : i32
    %c0_i32_1 = arith.constant 0 : i32
    return %c0_i32, %c0_i32_0 : i32, i32
  }
  func.func @transform_3(%arg0: i32) -> (i32, i32) {
    %c0_i32 = arith.constant 0 : i32
    %c0_i32_0 = arith.constant 0 : i32
    %c0_i32_1 = arith.constant 0 : i32
    return %c0_i32, %c0_i32_0 : i32, i32
  }
  func.func @transform_4(%arg0: i32) -> (i32, i32) {
    %c0_i32 = arith.constant 0 : i32
    %c0_i32_0 = arith.constant 0 : i32
    %c0_i32_1 = arith.constant 0 : i32
    return %c0_i32, %c0_i32_0 : i32, i32
  }
  func.func @transform_5(%arg0: i32) -> (i32, i32) {
    %c0_i32 = arith.constant 0 : i32
    %c0_i32_0 = arith.constant 0 : i32
    %c0_i32_1 = arith.constant 0 : i32
    return %c0_i32, %c0_i32_0 : i32, i32
  }
  func.func @transform_6(%arg0: i32) -> (i32, i32) {
    %c0_i32 = arith.constant 0 : i32
    %c0_i32_0 = arith.constant 0 : i32
    %c0_i32_1 = arith.constant 0 : i32
    return %c0_i32, %c0_i32_0 : i32, i32
  }
  func.func @transform_7(%arg0: i32) -> (i32, i32) {
    %c0_i32 = arith.constant 0 : i32
    %c0_i32_0 = arith.constant 0 : i32
    %c0_i32_1 = arith.constant 0 : i32
    return %c0_i32, %c0_i32_0 : i32, i32
  }
  func.func @transform_8(%arg0: i32) -> (i32, i32) {
    %c0_i32 = arith.constant 0 : i32
    %c0_i32_0 = arith.constant 0 : i32
    %c0_i32_1 = arith.constant 0 : i32
    return %c0_i32, %c0_i32_0 : i32, i32
  }
  func.func @transform_9(%arg0: i32) -> (i32, i32) {
    %c0_i32 = arith.constant 0 : i32
    %c0_i32_0 = arith.constant 0 : i32
    %c0_i32_1 = arith.constant 0 : i32
    return %c0_i32, %c0_i32_0 : i32, i32
  }
  func.func @transform_10(%arg0: i32) -> (i32, i32, i32) {
    %c0_i32 = arith.constant 0 : i32
    %c0_i32_0 = arith.constant 0 : i32
    %c0_i32_1 = arith.constant 0 : i32
    return %arg0, %c0_i32, %c0_i32_0 : i32, i32, i32
  }
}

</mosaic_0001>

<llo_original>
// kernel: neg.4
$region0: #{neg.4}
  #allocation0 [shape = 's32[1]{0}', space=sflag, size = 0x4, scoped, tag = 'scoped memory for neg.4']
  %s0 = inlined_call_operand.vmem [shape: f32[2,2,64], index: 0, kind: input, shape index: {}]
  %s1 = inlined_call_operand.vmem [shape: f32[2,2,64], index: 1, kind: output, shape index: {}]
  %v2 = vld [vmem:[%s0] sm:$0x3]
  %3 = xla_tuple %v2
  %4 = xla_tuple %3
  %v5 = vxor.u32 %v2, 2147483648
  %6 = xla_tuple %v5
  %7 = vst [vmem:[%s1] sm:$0x3] %v5
  %s8 = scalar_lea.vmem %s0, 2
  %v9 = vld [vmem:[%s8] sm:$0x3]
  %10 = xla_tuple %v9
  %11 = xla_tuple %10
  %v12 = vxor.u32 %v9, 2147483648
  %13 = xla_tuple %v12
  %s14 = scalar_lea.vmem %s1, 2
  %15 = vst [vmem:[%s14] sm:$0x3] %v12

// kernel: custom-call.32
$region0: #{custom-call.32}
  %s0 = inlined_call_operand.vmem [shape: f32[2,64], index: 0, kind: output, shape index: {}]

// kernel: neg.6
$region0: #{neg.6}
  #allocation0 [shape = 's32[1]{0}', space=sflag, size = 0x4, scoped, tag = 'scoped memory for neg.6']
  %s0 = inlined_call_operand.vmem [shape: f32[2,3,64], index: 0, kind: input, shape index: {}]
  %s1 = inlined_call_operand.vmem [shape: f32[2,3,64], index: 1, kind: output, shape index: {}]
  %v2 = vld [vmem:[%s0] sm:$0x3]
  %3 = xla_tuple %v2
  %4 = xla_tuple %3
  %v5 = vxor.u32 %v2, 2147483648
  %6 = xla_tuple %v5
  %7 = vst [vmem:[%s1] sm:$0x3] %v5
  %s8 = scalar_lea.vmem %s0, 2
  %v9 = vld [vmem:[%s8] sm:$0x3]
  %10 = xla_tuple %v9
  %11 = xla_tuple %10
  %v12 = vxor.u32 %v9, 2147483648
  %13 = xla_tuple %v12
  %s14 = scalar_lea.vmem %s1, 2
  %15 = vst [vmem:[%s14] sm:$0x3] %v12
  %s16 = scalar_lea.vmem %s0, 4
  %v17 = vld [vmem:[%s16] sm:$0x3]
  %18 = xla_tuple %v17
  %19 = xla_tuple %18
  %v20 = vxor.u32 %v17, 2147483648
  %21 = xla_tuple %v20
  %s22 = scalar_lea.vmem %s1, 4
  %23 = vst [vmem:[%s22] sm:$0x3] %v20

// kernel: sim_attention_multi_x_attn_forward.4
$region0: #{sim_attention_multi_x_attn_forward.4}
  #allocation0 [shape = 'u32[]', space=smem, size = 0x4, offset = 0x4, fixed_abs, tag = 'smem constant byte address 0x4 - core index']
  #allocation1 [shape = 'u32[144,128]{1,0:T(1,128)}', space=vmem, size = 0x12000, scoped, tag = 'internal scratch']
  %s0 = inlined_call_operand.vmem [shape: f32[3,128], index: 0, kind: input, shape index: {}]
  %s1 = inlined_call_operand.vmem [shape: f32[128,3], index: 1, kind: input, shape index: {}]
  %s2 = inlined_call_operand.vmem [shape: f32[128,1], index: 2, kind: input, shape index: {}]
  %s3 = inlined_call_operand.vmem [shape: bf16[128,128], index: 3, kind: input, shape index: {}]
  %s4 = inlined_call_operand.vmem [shape: f32[1,128], index: 4, kind: input, shape index: {}]
  %s5 = inlined_call_operand.vmem [shape: f32[8,128], index: 5, kind: output, shape index: {}]
  %s6 = sld [smem:[#allocation0]]
  $region30: #{sim_attention_multi_x_attn_forward.4} parent=0
    _
  %s8 = ssub.s32 1, %s6
  %s9 = scalar_select 0, %s8, %s6
  // Predicated region
  $region2: #{sim_attention_multi_x_attn_forward.4} parent=0 // pred_check
    _
  $region3: #{sim_attention_multi_x_attn_forward.4} parent=0 // pred_check_branch
    %11 = sbr.rel (0) target = $region5
  $region4: #{sim_attention_multi_x_attn_forward.4} parent=0 // pred_region
    _
  $region5: #{sim_attention_multi_x_attn_forward.4} parent=0 // pred_fallthru
    _
  // Predicated region
  $region6: #{sim_attention_multi_x_attn_forward.4} parent=0 // pred_check
    _
  $region7: #{sim_attention_multi_x_attn_forward.4} parent=0 // pred_check_branch
    %13 = sbr.rel (0) target = $region9
  $region8: #{sim_attention_multi_x_attn_forward.4} parent=0 // pred_region
    _
  $region9: #{sim_attention_multi_x_attn_forward.4} parent=0 // pred_fallthru
    _
  // Predicated region
  $region10: #{sim_attention_multi_x_attn_forward.4} parent=0 // pred_check
    _
  $region11: #{sim_attention_multi_x_attn_forward.4} parent=0 // pred_check_branch
    %15 = sbr.rel (0) target = $region13
  $region12: #{sim_attention_multi_x_attn_forward.4} parent=0 // pred_region
    _
  $region13: #{sim_attention_multi_x_attn_forward.4} parent=0 // pred_fallthru
    _
  // Predicated region
  $region14: #{sim_attention_multi_x_attn_forward.4} parent=0 // pred_check
    _
  $region15: #{sim_attention_multi_x_attn_forward.4} parent=0 // pred_check_branch
    %17 = sbr.rel (0) target = $region17
  $region16: #{sim_attention_multi_x_attn_forward.4} parent=0 // pred_region
    _
  $region17: #{sim_attention_multi_x_attn_forward.4} parent=0 // pred_fallthru
    _
  // Predicated region
  $region18: #{sim_attention_multi_x_attn_forward.4} parent=0 // pred_check
    _
  $region19: #{sim_attention_multi_x_attn_forward.4} parent=0 // pred_check_branch
    %19 = sbr.rel (0) target = $region21
  $region20: #{sim_attention_multi_x_attn_forward.4} parent=0 // pred_region
    _
  $region21: #{sim_attention_multi_x_attn_forward.4} parent=0 // pred_fallthru
    _
  %v21 = vld [vmem:[%s0] sm:$0x7]
  %v22 = vld [vmem:[%s1] sm:$0xff]
  %v23 = vld [vmem:[%s1 + $0x8] sm:$0xff]
  %v24 = vld [vmem:[%s1 + $0x10] sm:$0xff]
  %v25 = vld [vmem:[%s1 + $0x18] sm:$0xff]
  %v26 = vld [vmem:[%s1 + $0x20] sm:$0xff]
  %v27 = vld [vmem:[%s1 + $0x28] sm:$0xff]
  %v28 = vld [vmem:[%s1 + $0x30] sm:$0xff]
  %v29 = vld [vmem:[%s1 + $0x38] sm:$0xff]
  %v30 = vld [vmem:[%s1 + $0x40] sm:$0xff]
  %v31 = vld [vmem:[%s1 + $0x48] sm:$0xff]
  %v32 = vld [vmem:[%s1 + $0x50] sm:$0xff]
  %v33 = vld [vmem:[%s1 + $0x58] sm:$0xff]
  %v34 = vld [vmem:[%s1 + $0x60] sm:$0xff]
  %v35 = vld [vmem:[%s1 + $0x68] sm:$0xff]
  %v36 = vld [vmem:[%s1 + $0x70] sm:$0xff]
  %v37 = vld [vmem:[%s1 + $0x78] sm:$0xff]
  %39 = vset.pattern.permute.xlu0 0
  %40 = vperm.xlu0 %39, %v22
  %v41 = vpop.permute.xlu0 %40
  %44 = vset.pattern.permute.xlu0 0
  %45 = vperm.xlu0 %44, %v23
  %v46 = vpop.permute.xlu0 %45
  %49 = vset.pattern.permute.xlu0 0
  %50 = vperm.xlu0 %49, %v24
  %v51 = vpop.permute.xlu0 %50
  %54 = vset.pattern.permute.xlu0 0
  %55 = vperm.xlu0 %54, %v25
  %v56 = vpop.permute.xlu0 %55
  %59 = vset.pattern.permute.xlu0 0
  %60 = vperm.xlu0 %59, %v26
  %v61 = vpop.permute.xlu0 %60
  %64 = vset.pattern.permute.xlu0 0
  %65 = vperm.xlu0 %64, %v27
  %v66 = vpop.permute.xlu0 %65
  %69 = vset.pattern.permute.xlu0 0
  %70 = vperm.xlu0 %69, %v28
  %v71 = vpop.permute.xlu0 %70
  %74 = vset.pattern.permute.xlu0 0
  %75 = vperm.xlu0 %74, %v29
  %v76 = vpop.permute.xlu0 %75
  %79 = vset.pattern.permute.xlu0 0
  %80 = vperm.xlu0 %79, %v30
  %v81 = vpop.permute.xlu0 %80
  %84 = vset.pattern.permute.xlu0 0
  %85 = vperm.xlu0 %84, %v31
  %v86 = vpop.permute.xlu0 %85
  %89 = vset.pattern.permute.xlu0 0
  %90 = vperm.xlu0 %89, %v32
  %v91 = vpop.permute.xlu0 %90
  %94 = vset.pattern.permute.xlu0 0
  %95 = vperm.xlu0 %94, %v33
  %v96 = vpop.permute.xlu0 %95
  %99 = vset.pattern.permute.xlu0 0
  %100 = vperm.xlu0 %99, %v34
  %v101 = vpop.permute.xlu0 %100
  %104 = vset.pattern.permute.xlu0 0
  %105 = vperm.xlu0 %104, %v35
  %v106 = vpop.permute.xlu0 %105
  %109 = vset.pattern.permute.xlu0 0
  %110 = vperm.xlu0 %109, %v36
  %v111 = vpop.permute.xlu0 %110
  %114 = vset.pattern.permute.xlu0 0
  %115 = vperm.xlu0 %114, %v37
  %v116 = vpop.permute.xlu0 %115
  %v118 = vlaneseq
  %v119 = vshrl.u32 %v118, 7
  %v120 = vsub.s32 0, %v119
  %v121 = vrot.slane %v21, %v120
  %v122 = vmul.f32 %v41, %v121
  %v123 = vmul.f32 %v46, %v121
  %v124 = vmul.f32 %v51, %v121
  %v125 = vmul.f32 %v56, %v121
  %v126 = vmul.f32 %v61, %v121
  %v127 = vmul.f32 %v66, %v121
  %v128 = vmul.f32 %v71, %v121
  %v129 = vmul.f32 %v76, %v121
  %v130 = vmul.f32 %v81, %v121
  %v131 = vmul.f32 %v86, %v121
  %v132 = vmul.f32 %v91, %v121
  %v133 = vmul.f32 %v96, %v121
  %v134 = vmul.f32 %v101, %v121
  %v135 = vmul.f32 %v106, %v121
  %v136 = vmul.f32 %v111, %v121
  %v137 = vmul.f32 %v116, %v121
  %138 = vset.pattern.permute.xlu0 1
  %139 = vperm.xlu0 %138, %v22
  %v140 = vpop.permute.xlu0 %139
  %142 = vset.pattern.permute.xlu0 1
  %143 = vperm.xlu0 %142, %v23
  %v144 = vpop.permute.xlu0 %143
  %146 = vset.pattern.permute.xlu0 1
  %147 = vperm.xlu0 %146, %v24
  %v148 = vpop.permute.xlu0 %147
  %150 = vset.pattern.permute.xlu0 1
  %151 = vperm.xlu0 %150, %v25
  %v152 = vpop.permute.xlu0 %151
  %154 = vset.pattern.permute.xlu0 1
  %155 = vperm.xlu0 %154, %v26
  %v156 = vpop.permute.xlu0 %155
  %158 = vset.pattern.permute.xlu0 1
  %159 = vperm.xlu0 %158, %v27
  %v160 = vpop.permute.xlu0 %159
  %162 = vset.pattern.permute.xlu0 1
  %163 = vperm.xlu0 %162, %v28
  %v164 = vpop.permute.xlu0 %163
  %166 = vset.pattern.permute.xlu0 1
  %167 = vperm.xlu0 %166, %v29
  %v168 = vpop.permute.xlu0 %167
  %170 = vset.pattern.permute.xlu0 1
  %171 = vperm.xlu0 %170, %v30
  %v172 = vpop.permute.xlu0 %171
  %174 = vset.pattern.permute.xlu0 1
  %175 = vperm.xlu0 %174, %v31
  %v176 = vpop.permute.xlu0 %175
  %178 = vset.pattern.permute.xlu0 1
  %179 = vperm.xlu0 %178, %v32
  %v180 = vpop.permute.xlu0 %179
  %182 = vset.pattern.permute.xlu0 1
  %183 = vperm.xlu0 %182, %v33
  %v184 = vpop.permute.xlu0 %183
  %186 = vset.pattern.permute.xlu0 1
  %187 = vperm.xlu0 %186, %v34
  %v188 = vpop.permute.xlu0 %187
  %190 = vset.pattern.permute.xlu0 1
  %191 = vperm.xlu0 %190, %v35
  %v192 = vpop.permute.xlu0 %191
  %194 = vset.pattern.permute.xlu0 1
  %195 = vperm.xlu0 %194, %v36
  %v196 = vpop.permute.xlu0 %195
  %198 = vset.pattern.permute.xlu0 1
  %199 = vperm.xlu0 %198, %v37
  %v200 = vpop.permute.xlu0 %199
  %v202 = vlaneseq
  %v203 = vshrl.u32 %v202, 7
  %v204 = vsub.s32 1, %v203
  %v205 = vrot.slane %v21, %v204
  %v206 = vmul.f32 %v140, %v205
  %v207 = vmul.f32 %v144, %v205
  %v208 = vmul.f32 %v148, %v205
  %v209 = vmul.f32 %v152, %v205
  %v210 = vmul.f32 %v156, %v205
  %v211 = vmul.f32 %v160, %v205
  %v212 = vmul.f32 %v164, %v205
  %v213 = vmul.f32 %v168, %v205
  %v214 = vmul.f32 %v172, %v205
  %v215 = vmul.f32 %v176, %v205
  %v216 = vmul.f32 %v180, %v205
  %v217 = vmul.f32 %v184, %v205
  %v218 = vmul.f32 %v188, %v205
  %v219 = vmul.f32 %v192, %v205
  %v220 = vmul.f32 %v196, %v205
  %v221 = vmul.f32 %v200, %v205
  %v222 = vadd.f32 %v122, %v206
  %v223 = vadd.f32 %v123, %v207
  %v224 = vadd.f32 %v124, %v208
  %v225 = vadd.f32 %v125, %v209
  %v226 = vadd.f32 %v126, %v210
  %v227 = vadd.f32 %v127, %v211
  %v228 = vadd.f32 %v128, %v212
  %v229 = vadd.f32 %v129, %v213
  %v230 = vadd.f32 %v130, %v214
  %v231 = vadd.f32 %v131, %v215
  %v232 = vadd.f32 %v132, %v216
  %v233 = vadd.f32 %v133, %v217
  %v234 = vadd.f32 %v134, %v218
  %v235 = vadd.f32 %v135, %v219
  %v236 = vadd.f32 %v136, %v220
  %v237 = vadd.f32 %v137, %v221
  %238 = vset.pattern.permute.xlu0 2
  %239 = vperm.xlu0 %238, %v22
  %v240 = vpop.permute.xlu0 %239
  %242 = vset.pattern.permute.xlu0 2
  %243 = vperm.xlu0 %242, %v23
  %v244 = vpop.permute.xlu0 %243
  %246 = vset.pattern.permute.xlu0 2
  %247 = vperm.xlu0 %246, %v24
  %v248 = vpop.permute.xlu0 %247
  %250 = vset.pattern.permute.xlu0 2
  %251 = vperm.xlu0 %250, %v25
  %v252 = vpop.permute.xlu0 %251
  %254 = vset.pattern.permute.xlu0 2
  %255 = vperm.xlu0 %254, %v26
  %v256 = vpop.permute.xlu0 %255
  %258 = vset.pattern.permute.xlu0 2
  %259 = vperm.xlu0 %258, %v27
  %v260 = vpop.permute.xlu0 %259
  %262 = vset.pattern.permute.xlu0 2
  %263 = vperm.xlu0 %262, %v28
  %v264 = vpop.permute.xlu0 %263
  %266 = vset.pattern.permute.xlu0 2
  %267 = vperm.xlu0 %266, %v29
  %v268 = vpop.permute.xlu0 %267
  %270 = vset.pattern.permute.xlu0 2
  %271 = vperm.xlu0 %270, %v30
  %v272 = vpop.permute.xlu0 %271
  %274 = vset.pattern.permute.xlu0 2
  %275 = vperm.xlu0 %274, %v31
  %v276 = vpop.permute.xlu0 %275
  %278 = vset.pattern.permute.xlu0 2
  %279 = vperm.xlu0 %278, %v32
  %v280 = vpop.permute.xlu0 %279
  %282 = vset.pattern.permute.xlu0 2
  %283 = vperm.xlu0 %282, %v33
  %v284 = vpop.permute.xlu0 %283
  %286 = vset.pattern.permute.xlu0 2
  %287 = vperm.xlu0 %286, %v34
  %v288 = vpop.permute.xlu0 %287
  %290 = vset.pattern.permute.xlu0 2
  %291 = vperm.xlu0 %290, %v35
  %v292 = vpop.permute.xlu0 %291
  %294 = vset.pattern.permute.xlu0 2
  %295 = vperm.xlu0 %294, %v36
  %v296 = vpop.permute.xlu0 %295
  %298 = vset.pattern.permute.xlu0 2
  %299 = vperm.xlu0 %298, %v37
  %v300 = vpop.permute.xlu0 %299
  %v302 = vlaneseq
  %v303 = vshrl.u32 %v302, 7
  %v304 = vsub.s32 2, %v303
  %v305 = vrot.slane %v21, %v304
  %v306 = vmul.f32 %v240, %v305
  %v307 = vmul.f32 %v244, %v305
  %v308 = vmul.f32 %v248, %v305
  %v309 = vmul.f32 %v252, %v305
  %v310 = vmul.f32 %v256, %v305
  %v311 = vmul.f32 %v260, %v305
  %v312 = vmul.f32 %v264, %v305
  %v313 = vmul.f32 %v268, %v305
  %v314 = vmul.f32 %v272, %v305
  %v315 = vmul.f32 %v276, %v305
  %v316 = vmul.f32 %v280, %v305
  %v317 = vmul.f32 %v284, %v305
  %v318 = vmul.f32 %v288, %v305
  %v319 = vmul.f32 %v292, %v305
  %v320 = vmul.f32 %v296, %v305
  %v321 = vmul.f32 %v300, %v305
  %v322 = vadd.f32 %v222, %v306
  %v323 = vadd.f32 %v223, %v307
  %v324 = vadd.f32 %v224, %v308
  %v325 = vadd.f32 %v225, %v309
  %v326 = vadd.f32 %v226, %v310
  %v327 = vadd.f32 %v227, %v311
  %v328 = vadd.f32 %v228, %v312
  %v329 = vadd.f32 %v229, %v313
  %v330 = vadd.f32 %v230, %v314
  %v331 = vadd.f32 %v231, %v315
  %v332 = vadd.f32 %v232, %v316
  %v333 = vadd.f32 %v233, %v317
  %v334 = vadd.f32 %v234, %v318
  %v335 = vadd.f32 %v235, %v319
  %v336 = vadd.f32 %v236, %v320
  %v337 = vadd.f32 %v237, %v321
  %v338 = vld [vmem:[%s2] sm:$0xff]
  %v339 = vld [vmem:[%s2 + $0x8] sm:$0xff]
  %v340 = vld [vmem:[%s2 + $0x10] sm:$0xff]
  %v341 = vld [vmem:[%s2 + $0x18] sm:$0xff]
  %v342 = vld [vmem:[%s2 + $0x20] sm:$0xff]
  %v343 = vld [vmem:[%s2 + $0x28] sm:$0xff]
  %v344 = vld [vmem:[%s2 + $0x30] sm:$0xff]
  %v345 = vld [vmem:[%s2 + $0x38] sm:$0xff]
  %v346 = vld [vmem:[%s2 + $0x40] sm:$0xff]
  %v347 = vld [vmem:[%s2 + $0x48] sm:$0xff]
  %v348 = vld [vmem:[%s2 + $0x50] sm:$0xff]
  %v349 = vld [vmem:[%s2 + $0x58] sm:$0xff]
  %v350 = vld [vmem:[%s2 + $0x60] sm:$0xff]
  %v351 = vld [vmem:[%s2 + $0x68] sm:$0xff]
  %v352 = vld [vmem:[%s2 + $0x70] sm:$0xff]
  %v353 = vld [vmem:[%s2 + $0x78] sm:$0xff]
  %355 = vset.pattern.permute.xlu0 0
  %356 = vperm.xlu0 %355, %v338
  %v357 = vpop.permute.xlu0 %356
  %360 = vset.pattern.permute.xlu0 0
  %361 = vperm.xlu0 %360, %v339
  %v362 = vpop.permute.xlu0 %361
  %365 = vset.pattern.permute.xlu0 0
  %366 = vperm.xlu0 %365, %v340
  %v367 = vpop.permute.xlu0 %366
  %370 = vset.pattern.permute.xlu0 0
  %371 = vperm.xlu0 %370, %v341
  %v372 = vpop.permute.xlu0 %371
  %375 = vset.pattern.permute.xlu0 0
  %376 = vperm.xlu0 %375, %v342
  %v377 = vpop.permute.xlu0 %376
  %380 = vset.pattern.permute.xlu0 0
  %381 = vperm.xlu0 %380, %v343
  %v382 = vpop.permute.xlu0 %381
  %385 = vset.pattern.permute.xlu0 0
  %386 = vperm.xlu0 %385, %v344
  %v387 = vpop.permute.xlu0 %386
  %390 = vset.pattern.permute.xlu0 0
  %391 = vperm.xlu0 %390, %v345
  %v392 = vpop.permute.xlu0 %391
  %395 = vset.pattern.permute.xlu0 0
  %396 = vperm.xlu0 %395, %v346
  %v397 = vpop.permute.xlu0 %396
  %400 = vset.pattern.permute.xlu0 0
  %401 = vperm.xlu0 %400, %v347
  %v402 = vpop.permute.xlu0 %401
  %405 = vset.pattern.permute.xlu0 0
  %406 = vperm.xlu0 %405, %v348
  %v407 = vpop.permute.xlu0 %406
  %410 = vset.pattern.permute.xlu0 0
  %411 = vperm.xlu0 %410, %v349
  %v412 = vpop.permute.xlu0 %411
  %415 = vset.pattern.permute.xlu0 0
  %416 = vperm.xlu0 %415, %v350
  %v417 = vpop.permute.xlu0 %416
  %420 = vset.pattern.permute.xlu0 0
  %421 = vperm.xlu0 %420, %v351
  %v422 = vpop.permute.xlu0 %421
  %425 = vset.pattern.permute.xlu0 0
  %426 = vperm.xlu0 %425, %v352
  %v427 = vpop.permute.xlu0 %426
  %430 = vset.pattern.permute.xlu0 0
  %431 = vperm.xlu0 %430, %v353
  %v432 = vpop.permute.xlu0 %431
  %v434 = vadd.f32 %v322, %v357
  %v435 = vadd.f32 %v323, %v362
  %v436 = vadd.f32 %v324, %v367
  %v437 = vadd.f32 %v325, %v372
  %v438 = vadd.f32 %v326, %v377
  %v439 = vadd.f32 %v327, %v382
  %v440 = vadd.f32 %v328, %v387
  %v441 = vadd.f32 %v329, %v392
  %v442 = vadd.f32 %v330, %v397
  %v443 = vadd.f32 %v331, %v402
  %v444 = vadd.f32 %v332, %v407
  %v445 = vadd.f32 %v333, %v412
  %v446 = vadd.f32 %v334, %v417
  %v447 = vadd.f32 %v335, %v422
  %v448 = vadd.f32 %v336, %v427
  %v449 = vadd.f32 %v337, %v432
  %v450 = vmax.f32 %v434, 0.0
  %v451 = vmax.f32 %v435, 0.0
  %v452 = vmax.f32 %v436, 0.0
  %v453 = vmax.f32 %v437, 0.0
  %v454 = vmax.f32 %v438, 0.0
  %v455 = vmax.f32 %v439, 0.0
  %v456 = vmax.f32 %v440, 0.0
  %v457 = vmax.f32 %v441, 0.0
  %v458 = vmax.f32 %v442, 0.0
  %v459 = vmax.f32 %v443, 0.0
  %v460 = vmax.f32 %v444, 0.0
  %v461 = vmax.f32 %v445, 0.0
  %v462 = vmax.f32 %v446, 0.0
  %v463 = vmax.f32 %v447, 0.0
  %v464 = vmax.f32 %v448, 0.0
  %v465 = vmax.f32 %v449, 0.0
  %466 = vxpose.xlu0.b32.start [1/16] %v450, 128
  %467 = vxpose.xlu0.b32.cont [2/16] %v451, 128
  %468 = vxpose.xlu0.b32.cont [3/16] %v452, 128
  %469 = vxpose.xlu0.b32.cont [4/16] %v453, 128
  %470 = vxpose.xlu0.b32.cont [5/16] %v454, 128
  %471 = vxpose.xlu0.b32.cont [6/16] %v455, 128
  %472 = vxpose.xlu0.b32.cont [7/16] %v456, 128
  %473 = vxpose.xlu0.b32.cont [8/16] %v457, 128
  %474 = vxpose.xlu0.b32.cont [9/16] %v458, 128
  %475 = vxpose.xlu0.b32.cont [10/16] %v459, 128
  %476 = vxpose.xlu0.b32.cont [11/16] %v460, 128
  %477 = vxpose.xlu0.b32.cont [12/16] %v461, 128
  %478 = vxpose.xlu0.b32.cont [13/16] %v462, 128
  %479 = vxpose.xlu0.b32.cont [14/16] %v463, 128
  %480 = vxpose.xlu0.b32.cont [15/16] %v464, 128
  %481 = vxpose.xlu0.b32.end [16/16] %v465, 128
  %v482 = vpop.trf.xlu0
  %v483 = vpop.trf.xlu0
  %v484 = vpop.trf.xlu0
  %v485 = vpop.trf.xlu0
  %v486 = vpop.trf.xlu0
  %v487 = vpop.trf.xlu0
  %v488 = vpop.trf.xlu0
  %v489 = vpop.trf.xlu0
  %v490 = vpop.trf.xlu0
  %v491 = vpop.trf.xlu0
  %v492 = vpop.trf.xlu0
  %v493 = vpop.trf.xlu0
  %v494 = vpop.trf.xlu0
  %v495 = vpop.trf.xlu0
  %v496 = vpop.trf.xlu0
  %v497 = vpop.trf.xlu0
  %v498 = vpack.c.bf16 %v483, %v482
  %v499 = vpack.c.bf16 %v485, %v484
  %v500 = vpack.c.bf16 %v487, %v486
  %v501 = vpack.c.bf16 %v489, %v488
  %v502 = vpack.c.bf16 %v491, %v490
  %v503 = vpack.c.bf16 %v493, %v492
  %v504 = vpack.c.bf16 %v495, %v494
  %v505 = vpack.c.bf16 %v497, %v496
  %v506 = vld [vmem:[%s3] sm:$0xf]
  %v507 = vld [vmem:[%s3 + $0x4] sm:$0xf]
  %v508 = vld [vmem:[%s3 + $0x8] sm:$0xf]
  %v509 = vld [vmem:[%s3 + $0xc] sm:$0xf]
  %v510 = vld [vmem:[%s3 + $0x10] sm:$0xf]
  %v511 = vld [vmem:[%s3 + $0x14] sm:$0xf]
  %v512 = vld [vmem:[%s3 + $0x18] sm:$0xf]
  %v513 = vld [vmem:[%s3 + $0x1c] sm:$0xf]
  %v514 = vld [vmem:[%s3 + $0x20] sm:$0xf]
  %v515 = vld [vmem:[%s3 + $0x24] sm:$0xf]
  %v516 = vld [vmem:[%s3 + $0x28] sm:$0xf]
  %v517 = vld [vmem:[%s3 + $0x2c] sm:$0xf]
  %v518 = vld [vmem:[%s3 + $0x30] sm:$0xf]
  %v519 = vld [vmem:[%s3 + $0x34] sm:$0xf]
  %v520 = vld [vmem:[%s3 + $0x38] sm:$0xf]
  %v521 = vld [vmem:[%s3 + $0x3c] sm:$0xf]
  %v538 = vunpack.c.l.b16 %v506
  %v539 = vunpack.c.l.b16 %v507
  %v540 = vunpack.c.l.b16 %v508
  %v541 = vunpack.c.l.b16 %v509
  %v542 = vunpack.c.l.b16 %v510
  %v543 = vunpack.c.l.b16 %v511
  %v544 = vunpack.c.l.b16 %v512
  %v545 = vunpack.c.l.b16 %v513
  %v546 = vunpack.c.l.b16 %v514
  %v547 = vunpack.c.l.b16 %v515
  %v548 = vunpack.c.l.b16 %v516
  %v549 = vunpack.c.l.b16 %v517
  %v550 = vunpack.c.l.b16 %v518
  %v551 = vunpack.c.l.b16 %v519
  %v552 = vunpack.c.l.b16 %v520
  %v553 = vunpack.c.l.b16 %v521
  %v554 = vpack.c.b16 %v539, %v538
  %v555 = vpack.c.b16 %v541, %v540
  %v556 = vpack.c.b16 %v543, %v542
  %v557 = vpack.c.b16 %v545, %v544
  %v558 = vpack.c.b16 %v547, %v546
  %v559 = vpack.c.b16 %v549, %v548
  %v560 = vpack.c.b16 %v551, %v550
  %v561 = vpack.c.b16 %v553, %v552
  %570 = vmatprep.subr.bf16.mxu0 0
  %571 = vmatpush1.bf16.msra.mxu0 %v554
  %572 = vmatprep.subr.bf16.mxu0 0
  %573 = vmatpush1.bf16.msra.mxu0 %v555
  %574 = vmatprep.subr.bf16.mxu0 0
  %575 = vmatpush1.bf16.msra.mxu0 %v556
  %576 = vmatprep.subr.bf16.mxu0 0
  %577 = vmatpush1.bf16.msra.mxu0 %v557
  %578 = vmatprep.subr.bf16.mxu0 0
  %579 = vmatpush1.bf16.msra.mxu0 %v558
  %580 = vmatprep.subr.bf16.mxu0 0
  %581 = vmatpush1.bf16.msra.mxu0 %v559
  %582 = vmatprep.subr.bf16.mxu0 0
  %583 = vmatpush1.bf16.msra.mxu0 %v560
  %584 = vmatprep.subr.bf16.mxu0 0
  %585 = vmatpush1.bf16.msra.mxu0 %v561
  %586 = vmatprep.subr.bf16.mxu0 0
  %587 = vmatpush1.bf16.msra.mxu0 0
  %588 = vmatprep.subr.bf16.mxu0 0
  %589 = vmatpush1.bf16.msra.mxu0 0
  %590 = vmatprep.subr.bf16.mxu0 0
  %591 = vmatpush1.bf16.msra.mxu0 0
  %592 = vmatprep.subr.bf16.mxu0 0
  %593 = vmatpush1.bf16.msra.mxu0 0
  %594 = vmatprep.subr.bf16.mxu0 0
  %595 = vmatpush1.bf16.msra.mxu0 0
  %596 = vmatprep.subr.bf16.mxu0 0
  %597 = vmatpush1.bf16.msra.mxu0 0
  %598 = vmatprep.subr.bf16.mxu0 0
  %599 = vmatpush1.bf16.msra.mxu0 0
  %600 = vmatprep.subr.bf16.mxu0 0
  %601 = vmatpush1.bf16.msra.mxu0 0
  %602 = vmatprep.mubr.bf16.mxu0 0
  %603 = vmatmul.mubr.bf16.gmra.mrb[0].mxu0 %v498
  %v604 = vpop.f32.mrb[0].mxu0
  %v605 = vadd.f32 0.0, %v604
  %v606 = vpop.f32.mrb[0].mxu0
  %v607 = vpop.f32.mrb[0].mxu0
  %v608 = vadd.f32 0.0, %v607
  %v609 = vpop.f32.mrb[0].mxu0
  %610 = vmatprep.mubr.bf16.mxu0 0
  %611 = vmatmul.mubr.bf16.gmra.mrb[0].mxu0 %v499
  %v612 = vpop.f32.mrb[0].mxu0
  %v613 = vadd.f32 0.0, %v612
  %v614 = vpop.f32.mrb[0].mxu0
  %v615 = vpop.f32.mrb[0].mxu0
  %v616 = vadd.f32 0.0, %v615
  %v617 = vpop.f32.mrb[0].mxu0
  %618 = vmatprep.mubr.bf16.mxu0 0
  %619 = vmatmul.mubr.bf16.gmra.mrb[0].mxu0 %v500
  %v620 = vpop.f32.mrb[0].mxu0
  %v621 = vadd.f32 0.0, %v620
  %v622 = vpop.f32.mrb[0].mxu0
  %v623 = vpop.f32.mrb[0].mxu0
  %v624 = vadd.f32 0.0, %v623
  %v625 = vpop.f32.mrb[0].mxu0
  %626 = vmatprep.mubr.bf16.mxu0 0
  %627 = vmatmul.mubr.bf16.gmra.mrb[0].mxu0 %v501
  %v628 = vpop.f32.mrb[0].mxu0
  %v629 = vadd.f32 0.0, %v628
  %v630 = vpop.f32.mrb[0].mxu0
  %v631 = vpop.f32.mrb[0].mxu0
  %v632 = vadd.f32 0.0, %v631
  %v633 = vpop.f32.mrb[0].mxu0
  %634 = vmatprep.mubr.bf16.mxu0 0
  %635 = vmatmul.mubr.bf16.gmra.mrb[0].mxu0 %v502
  %v636 = vpop.f32.mrb[0].mxu0
  %v637 = vadd.f32 0.0, %v636
  %v638 = vpop.f32.mrb[0].mxu0
  %v639 = vpop.f32.mrb[0].mxu0
  %v640 = vadd.f32 0.0, %v639
  %v641 = vpop.f32.mrb[0].mxu0
  %642 = vmatprep.mubr.bf16.mxu0 0
  %643 = vmatmul.mubr.bf16.gmra.mrb[0].mxu0 %v503
  %v644 = vpop.f32.mrb[0].mxu0
  %v645 = vadd.f32 0.0, %v644
  %v646 = vpop.f32.mrb[0].mxu0
  %v647 = vpop.f32.mrb[0].mxu0
  %v648 = vadd.f32 0.0, %v647
  %v649 = vpop.f32.mrb[0].mxu0
  %650 = vmatprep.mubr.bf16.mxu0 0
  %651 = vmatmul.mubr.bf16.gmra.mrb[0].mxu0 %v504
  %v652 = vpop.f32.mrb[0].mxu0
  %v653 = vadd.f32 0.0, %v652
  %v654 = vpop.f32.mrb[0].mxu0
  %v655 = vpop.f32.mrb[0].mxu0
  %v656 = vadd.f32 0.0, %v655
  %v657 = vpop.f32.mrb[0].mxu0
  %658 = vmatprep.mubr.bf16.mxu0 0
  %659 = vmatmul.mubr.bf16.gmra.mrb[0].mxu0 %v505
  %v660 = vpop.f32.mrb[0].mxu0
  %v661 = vadd.f32 0.0, %v660
  %v662 = vpop.f32.mrb[0].mxu0
  %v663 = vpop.f32.mrb[0].mxu0
  %v664 = vadd.f32 0.0, %v663
  %v665 = vpop.f32.mrb[0].mxu0
  %666 = vdwg.mxu0
  %v667 = vmax.f32 %v605, %v608
  %v668 = vrot.slane %v667, 4
  %v669 = vmax.f32 %v667, %v668
  %v670 = vrot.slane %v669, 2
  %v671 = vmax.f32 %v669, %v670
  %v672 = vrot.slane %v671, 1
  %v673 = vmax.f32 %v671, %v672
  %v674 = vmax.f32 %v613, %v616
  %v675 = vrot.slane %v674, 4
  %v676 = vmax.f32 %v674, %v675
  %v677 = vrot.slane %v676, 2
  %v678 = vmax.f32 %v676, %v677
  %v679 = vrot.slane %v678, 1
  %v680 = vmax.f32 %v678, %v679
  %v681 = vmax.f32 %v621, %v624
  %v682 = vrot.slane %v681, 4
  %v683 = vmax.f32 %v681, %v682
  %v684 = vrot.slane %v683, 2
  %v685 = vmax.f32 %v683, %v684
  %v686 = vrot.slane %v685, 1
  %v687 = vmax.f32 %v685, %v686
  %v688 = vmax.f32 %v629, %v632
  %v689 = vrot.slane %v688, 4
  %v690 = vmax.f32 %v688, %v689
  %v691 = vrot.slane %v690, 2
  %v692 = vmax.f32 %v690, %v691
  %v693 = vrot.slane %v692, 1
  %v694 = vmax.f32 %v692, %v693
  %v695 = vmax.f32 %v637, %v640
  %v696 = vrot.slane %v695, 4
  %v697 = vmax.f32 %v695, %v696
  %v698 = vrot.slane %v697, 2
  %v699 = vmax.f32 %v697, %v698
  %v700 = vrot.slane %v699, 1
  %v701 = vmax.f32 %v699, %v700
  %v702 = vmax.f32 %v645, %v648
  %v703 = vrot.slane %v702, 4
  %v704 = vmax.f32 %v702, %v703
  %v705 = vrot.slane %v704, 2
  %v706 = vmax.f32 %v704, %v705
  %v707 = vrot.slane %v706, 1
  %v708 = vmax.f32 %v706, %v707
  %v709 = vmax.f32 %v653, %v656
  %v710 = vrot.slane %v709, 4
  %v711 = vmax.f32 %v709, %v710
  %v712 = vrot.slane %v711, 2
  %v713 = vmax.f32 %v711, %v712
  %v714 = vrot.slane %v713, 1
  %v715 = vmax.f32 %v713, %v714
  %v716 = vmax.f32 %v661, %v664
  %v717 = vrot.slane %v716, 4
  %v718 = vmax.f32 %v716, %v717
  %v719 = vrot.slane %v718, 2
  %v720 = vmax.f32 %v718, %v719
  %v721 = vrot.slane %v720, 1
  %v722 = vmax.f32 %v720, %v721
  %v723 = vld [vmem:[%s4] sm:$0x1]
  %v725 = vlaneseq
  %v726 = vshrl.u32 %v725, 7
  %v727 = vsub.s32 0, %v726
  %v728 = vrot.slane %v723, %v727
  %v730 = vadd.f32 %v673, %v728
  %v731 = vadd.f32 %v680, %v728
  %v732 = vadd.f32 %v687, %v728
  %v733 = vadd.f32 %v694, %v728
  %v734 = vadd.f32 %v701, %v728
  %v735 = vadd.f32 %v708, %v728
  %v736 = vadd.f32 %v715, %v728
  %v737 = vadd.f32 %v722, %v728
  %v738 = vmax.f32 %v730, 0.0
  %v739 = vmax.f32 %v731, 0.0
  %v740 = vmax.f32 %v732, 0.0
  %v741 = vmax.f32 %v733, 0.0
  %v742 = vmax.f32 %v734, 0.0
  %v743 = vmax.f32 %v735, 0.0
  %v744 = vmax.f32 %v736, 0.0
  %v745 = vmax.f32 %v737, 0.0
  %v754 = vrot.slane %v739, 7
  %vm755 = vcmask 1041409
  %v756 = vsel %vm755, %v754, %v738
  %v757 = vrot.slane %v740, 6
  %vm758 = vcmask 1042434
  %v759 = vsel %vm758, %v757, %v756
  %v760 = vrot.slane %v741, 5
  %vm761 = vcmask 1043459
  %v762 = vsel %vm761, %v760, %v759
  %v763 = vrot.slane %v742, 4
  %vm764 = vcmask 1044484
  %v765 = vsel %vm764, %v763, %v762
  %v766 = vrot.slane %v743, 3
  %vm767 = vcmask 1045509
  %v768 = vsel %vm767, %v766, %v765
  %v769 = vrot.slane %v744, 2
  %vm770 = vcmask 1046534
  %v771 = vsel %vm770, %v769, %v768
  %v772 = vrot.slane %v745, 1
  %vm773 = vcmask 1047559
  %v774 = vsel %vm773, %v772, %v771
  %776 = vst [vmem:[%s5] sm:$0xff] %v774
  // Predicated region
  $region22: #{sim_attention_multi_x_attn_forward.4} parent=0 // pred_check
    _
  $region23: #{sim_attention_multi_x_attn_forward.4} parent=0 // pred_check_branch
    %778 = sbr.rel (0) target = $region25
  $region24: #{sim_attention_multi_x_attn_forward.4} parent=0 // pred_region
    _
  $region25: #{sim_attention_multi_x_attn_forward.4} parent=0 // pred_fallthru
    _
  // Predicated region
  $region26: #{sim_attention_multi_x_attn_forward.4} parent=0 // pred_check
    _
  $region27: #{sim_attention_multi_x_attn_forward.4} parent=0 // pred_check_branch
    %780 = sbr.rel (0) target = $region29
  $region28: #{sim_attention_multi_x_attn_forward.4} parent=0 // pred_region
    _
  $region29: #{sim_attention_multi_x_attn_forward.4} parent=0 // pred_fallthru
    _

// kernel: sim_attention_multi_x_attn_forward.3
$region0: #{sim_attention_multi_x_attn_forward.3}
  #allocation0 [shape = 'u32[]', space=smem, size = 0x4, offset = 0x4, fixed_abs, tag = 'smem constant byte address 0x4 - core index']
  #allocation1 [shape = 'u32[144,128]{1,0:T(1,128)}', space=vmem, size = 0x12000, scoped, tag = 'internal scratch']
  %s0 = inlined_call_operand.vmem [shape: f32[3,384], index: 0, kind: input, shape index: {}]
  %s1 = inlined_call_operand.vmem [shape: f32[128,3], index: 1, kind: input, shape index: {}]
  %s2 = inlined_call_operand.vmem [shape: f32[128,1], index: 2, kind: input, shape index: {}]
  %s3 = inlined_call_operand.vmem [shape: bf16[128,128], index: 3, kind: input, shape index: {}]
  %s4 = inlined_call_operand.vmem [shape: f32[1,128], index: 4, kind: input, shape index: {}]
  %s5 = inlined_call_operand.vmem [shape: f32[24,128], index: 5, kind: output, shape index: {}]
  %s6 = sld [smem:[#allocation0]]
  $region30: #{sim_attention_multi_x_attn_forward.3} parent=0
    _
  %s8 = ssub.s32 1, %s6
  %s9 = scalar_select 0, %s8, %s6
  // Predicated region
  $region2: #{sim_attention_multi_x_attn_forward.3} parent=0 // pred_check
    _
  $region3: #{sim_attention_multi_x_attn_forward.3} parent=0 // pred_check_branch
    %11 = sbr.rel (0) target = $region5
  $region4: #{sim_attention_multi_x_attn_forward.3} parent=0 // pred_region
    _
  $region5: #{sim_attention_multi_x_attn_forward.3} parent=0 // pred_fallthru
    _
  // Predicated region
  $region6: #{sim_attention_multi_x_attn_forward.3} parent=0 // pred_check
    _
  $region7: #{sim_attention_multi_x_attn_forward.3} parent=0 // pred_check_branch
    %13 = sbr.rel (0) target = $region9
  $region8: #{sim_attention_multi_x_attn_forward.3} parent=0 // pred_region
    _
  $region9: #{sim_attention_multi_x_attn_forward.3} parent=0 // pred_fallthru
    _
  // Predicated region
  $region10: #{sim_attention_multi_x_attn_forward.3} parent=0 // pred_check
    _
  $region11: #{sim_attention_multi_x_attn_forward.3} parent=0 // pred_check_branch
    %15 = sbr.rel (0) target = $region13
  $region12: #{sim_attention_multi_x_attn_forward.3} parent=0 // pred_region
    _
  $region13: #{sim_attention_multi_x_attn_forward.3} parent=0 // pred_fallthru
    _
  // Predicated region
  $region14: #{sim_attention_multi_x_attn_forward.3} parent=0 // pred_check
    _
  $region15: #{sim_attention_multi_x_attn_forward.3} parent=0 // pred_check_branch
    %17 = sbr.rel (0) target = $region17
  $region16: #{sim_attention_multi_x_attn_forward.3} parent=0 // pred_region
    _
  $region17: #{sim_attention_multi_x_attn_forward.3} parent=0 // pred_fallthru
    _
  // Predicated region
  $region18: #{sim_attention_multi_x_attn_forward.3} parent=0 // pred_check
    _
  $region19: #{sim_attention_multi_x_attn_forward.3} parent=0 // pred_check_branch
    %19 = sbr.rel (0) target = $region21
  $region20: #{sim_attention_multi_x_attn_forward.3} parent=0 // pred_region
    _
  $region21: #{sim_attention_multi_x_attn_forward.3} parent=0 // pred_fallthru
    _
  %v21 = vld [vmem:[%s0] sm:$0x77]
  %v22 = vld [vmem:[%s0 + $0x8] sm:$0x7]
  %v23 = vld [vmem:[%s1] sm:$0xff]
  %v24 = vld [vmem:[%s1 + $0x8] sm:$0xff]
  %v25 = vld [vmem:[%s1 + $0x10] sm:$0xff]
  %v26 = vld [vmem:[%s1 + $0x18] sm:$0xff]
  %v27 = vld [vmem:[%s1 + $0x20] sm:$0xff]
  %v28 = vld [vmem:[%s1 + $0x28] sm:$0xff]
  %v29 = vld [vmem:[%s1 + $0x30] sm:$0xff]
  %v30 = vld [vmem:[%s1 + $0x38] sm:$0xff]
  %v31 = vld [vmem:[%s1 + $0x40] sm:$0xff]
  %v32 = vld [vmem:[%s1 + $0x48] sm:$0xff]
  %v33 = vld [vmem:[%s1 + $0x50] sm:$0xff]
  %v34 = vld [vmem:[%s1 + $0x58] sm:$0xff]
  %v35 = vld [vmem:[%s1 + $0x60] sm:$0xff]
  %v36 = vld [vmem:[%s1 + $0x68] sm:$0xff]
  %v37 = vld [vmem:[%s1 + $0x70] sm:$0xff]
  %v38 = vld [vmem:[%s1 + $0x78] sm:$0xff]
  %40 = vset.pattern.permute.xlu0 0
  %41 = vperm.xlu0 %40, %v23
  %v42 = vpop.permute.xlu0 %41
  %45 = vset.pattern.permute.xlu0 0
  %46 = vperm.xlu0 %45, %v24
  %v47 = vpop.permute.xlu0 %46
  %50 = vset.pattern.permute.xlu0 0
  %51 = vperm.xlu0 %50, %v25
  %v52 = vpop.permute.xlu0 %51
  %55 = vset.pattern.permute.xlu0 0
  %56 = vperm.xlu0 %55, %v26
  %v57 = vpop.permute.xlu0 %56
  %60 = vset.pattern.permute.xlu0 0
  %61 = vperm.xlu0 %60, %v27
  %v62 = vpop.permute.xlu0 %61
  %65 = vset.pattern.permute.xlu0 0
  %66 = vperm.xlu0 %65, %v28
  %v67 = vpop.permute.xlu0 %66
  %70 = vset.pattern.permute.xlu0 0
  %71 = vperm.xlu0 %70, %v29
  %v72 = vpop.permute.xlu0 %71
  %75 = vset.pattern.permute.xlu0 0
  %76 = vperm.xlu0 %75, %v30
  %v77 = vpop.permute.xlu0 %76
  %80 = vset.pattern.permute.xlu0 0
  %81 = vperm.xlu0 %80, %v31
  %v82 = vpop.permute.xlu0 %81
  %85 = vset.pattern.permute.xlu0 0
  %86 = vperm.xlu0 %85, %v32
  %v87 = vpop.permute.xlu0 %86
  %90 = vset.pattern.permute.xlu0 0
  %91 = vperm.xlu0 %90, %v33
  %v92 = vpop.permute.xlu0 %91
  %95 = vset.pattern.permute.xlu0 0
  %96 = vperm.xlu0 %95, %v34
  %v97 = vpop.permute.xlu0 %96
  %100 = vset.pattern.permute.xlu0 0
  %101 = vperm.xlu0 %100, %v35
  %v102 = vpop.permute.xlu0 %101
  %105 = vset.pattern.permute.xlu0 0
  %106 = vperm.xlu0 %105, %v36
  %v107 = vpop.permute.xlu0 %106
  %110 = vset.pattern.permute.xlu0 0
  %111 = vperm.xlu0 %110, %v37
  %v112 = vpop.permute.xlu0 %111
  %115 = vset.pattern.permute.xlu0 0
  %116 = vperm.xlu0 %115, %v38
  %v117 = vpop.permute.xlu0 %116
  %v121 = vlaneseq
  %v122 = vshrl.u32 %v121, 7
  %v123 = vsub.s32 0, %v122
  %v124 = vrot.slane %v21, %v123
  %v125 = vlaneseq
  %v126 = vshrl.u32 %v125, 7
  %v127 = vsub.s32 4, %v126
  %v128 = vrot.slane %v21, %v127
  %v129 = vlaneseq
  %v130 = vshrl.u32 %v129, 7
  %v131 = vsub.s32 0, %v130
  %v132 = vrot.slane %v22, %v131
  %v136 = vlaneseq
  %v137 = vshrl.u32 %v136, 7
  %v138 = vsub.s32 0, %v137
  %v139 = vrot.slane %v124, %v138
  %v140 = vlaneseq
  %v141 = vshrl.u32 %v140, 7
  %v142 = vsub.s32 0, %v141
  %v143 = vrot.slane %v128, %v142
  %v144 = vlaneseq
  %v145 = vshrl.u32 %v144, 7
  %v146 = vsub.s32 0, %v145
  %v147 = vrot.slane %v132, %v146
  %v148 = vmul.f32 %v42, %v139
  %v149 = vmul.f32 %v42, %v143
  %v150 = vmul.f32 %v42, %v147
  %v151 = vmul.f32 %v47, %v139
  %v152 = vmul.f32 %v47, %v143
  %v153 = vmul.f32 %v47, %v147
  %v154 = vmul.f32 %v52, %v139
  %v155 = vmul.f32 %v52, %v143
  %v156 = vmul.f32 %v52, %v147
  %v157 = vmul.f32 %v57, %v139
  %v158 = vmul.f32 %v57, %v143
  %v159 = vmul.f32 %v57, %v147
  %v160 = vmul.f32 %v62, %v139
  %v161 = vmul.f32 %v62, %v143
  %v162 = vmul.f32 %v62, %v147
  %v163 = vmul.f32 %v67, %v139
  %v164 = vmul.f32 %v67, %v143
  %v165 = vmul.f32 %v67, %v147
  %v166 = vmul.f32 %v72, %v139
  %v167 = vmul.f32 %v72, %v143
  %v168 = vmul.f32 %v72, %v147
  %v169 = vmul.f32 %v77, %v139
  %v170 = vmul.f32 %v77, %v143
  %v171 = vmul.f32 %v77, %v147
  %v172 = vmul.f32 %v82, %v139
  %v173 = vmul.f32 %v82, %v143
  %v174 = vmul.f32 %v82, %v147
  %v175 = vmul.f32 %v87, %v139
  %v176 = vmul.f32 %v87, %v143
  %v177 = vmul.f32 %v87, %v147
  %v178 = vmul.f32 %v92, %v139
  %v179 = vmul.f32 %v92, %v143
  %v180 = vmul.f32 %v92, %v147
  %v181 = vmul.f32 %v97, %v139
  %v182 = vmul.f32 %v97, %v143
  %v183 = vmul.f32 %v97, %v147
  %v184 = vmul.f32 %v102, %v139
  %v185 = vmul.f32 %v102, %v143
  %v186 = vmul.f32 %v102, %v147
  %v187 = vmul.f32 %v107, %v139
  %v188 = vmul.f32 %v107, %v143
  %v189 = vmul.f32 %v107, %v147
  %v190 = vmul.f32 %v112, %v139
  %v191 = vmul.f32 %v112, %v143
  %v192 = vmul.f32 %v112, %v147
  %v193 = vmul.f32 %v117, %v139
  %v194 = vmul.f32 %v117, %v143
  %v195 = vmul.f32 %v117, %v147
  %196 = vset.pattern.permute.xlu0 1
  %197 = vperm.xlu0 %196, %v23
  %v198 = vpop.permute.xlu0 %197
  %200 = vset.pattern.permute.xlu0 1
  %201 = vperm.xlu0 %200, %v24
  %v202 = vpop.permute.xlu0 %201
  %204 = vset.pattern.permute.xlu0 1
  %205 = vperm.xlu0 %204, %v25
  %v206 = vpop.permute.xlu0 %205
  %208 = vset.pattern.permute.xlu0 1
  %209 = vperm.xlu0 %208, %v26
  %v210 = vpop.permute.xlu0 %209
  %212 = vset.pattern.permute.xlu0 1
  %213 = vperm.xlu0 %212, %v27
  %v214 = vpop.permute.xlu0 %213
  %216 = vset.pattern.permute.xlu0 1
  %217 = vperm.xlu0 %216, %v28
  %v218 = vpop.permute.xlu0 %217
  %220 = vset.pattern.permute.xlu0 1
  %221 = vperm.xlu0 %220, %v29
  %v222 = vpop.permute.xlu0 %221
  %224 = vset.pattern.permute.xlu0 1
  %225 = vperm.xlu0 %224, %v30
  %v226 = vpop.permute.xlu0 %225
  %228 = vset.pattern.permute.xlu0 1
  %229 = vperm.xlu0 %228, %v31
  %v230 = vpop.permute.xlu0 %229
  %232 = vset.pattern.permute.xlu0 1
  %233 = vperm.xlu0 %232, %v32
  %v234 = vpop.permute.xlu0 %233
  %236 = vset.pattern.permute.xlu0 1
  %237 = vperm.xlu0 %236, %v33
  %v238 = vpop.permute.xlu0 %237
  %240 = vset.pattern.permute.xlu0 1
  %241 = vperm.xlu0 %240, %v34
  %v242 = vpop.permute.xlu0 %241
  %244 = vset.pattern.permute.xlu0 1
  %245 = vperm.xlu0 %244, %v35
  %v246 = vpop.permute.xlu0 %245
  %248 = vset.pattern.permute.xlu0 1
  %249 = vperm.xlu0 %248, %v36
  %v250 = vpop.permute.xlu0 %249
  %252 = vset.pattern.permute.xlu0 1
  %253 = vperm.xlu0 %252, %v37
  %v254 = vpop.permute.xlu0 %253
  %256 = vset.pattern.permute.xlu0 1
  %257 = vperm.xlu0 %256, %v38
  %v258 = vpop.permute.xlu0 %257
  %v260 = vlaneseq
  %v261 = vshrl.u32 %v260, 7
  %v262 = vsub.s32 1, %v261
  %v263 = vrot.slane %v21, %v262
  %v264 = vlaneseq
  %v265 = vshrl.u32 %v264, 7
  %v266 = vsub.s32 5, %v265
  %v267 = vrot.slane %v21, %v266
  %v268 = vlaneseq
  %v269 = vshrl.u32 %v268, 7
  %v270 = vsub.s32 1, %v269
  %v271 = vrot.slane %v22, %v270
  %v275 = vlaneseq
  %v276 = vshrl.u32 %v275, 7
  %v277 = vsub.s32 1, %v276
  %v278 = vrot.slane %v263, %v277
  %v279 = vlaneseq
  %v280 = vshrl.u32 %v279, 7
  %v281 = vsub.s32 1, %v280
  %v282 = vrot.slane %v267, %v281
  %v283 = vlaneseq
  %v284 = vshrl.u32 %v283, 7
  %v285 = vsub.s32 1, %v284
  %v286 = vrot.slane %v271, %v285
  %v287 = vmul.f32 %v198, %v278
  %v288 = vmul.f32 %v198, %v282
  %v289 = vmul.f32 %v198, %v286
  %v290 = vmul.f32 %v202, %v278
  %v291 = vmul.f32 %v202, %v282
  %v292 = vmul.f32 %v202, %v286
  %v293 = vmul.f32 %v206, %v278
  %v294 = vmul.f32 %v206, %v282
  %v295 = vmul.f32 %v206, %v286
  %v296 = vmul.f32 %v210, %v278
  %v297 = vmul.f32 %v210, %v282
  %v298 = vmul.f32 %v210, %v286
  %v299 = vmul.f32 %v214, %v278
  %v300 = vmul.f32 %v214, %v282
  %v301 = vmul.f32 %v214, %v286
  %v302 = vmul.f32 %v218, %v278
  %v303 = vmul.f32 %v218, %v282
  %v304 = vmul.f32 %v218, %v286
  %v305 = vmul.f32 %v222, %v278
  %v306 = vmul.f32 %v222, %v282
  %v307 = vmul.f32 %v222, %v286
  %v308 = vmul.f32 %v226, %v278
  %v309 = vmul.f32 %v226, %v282
  %v310 = vmul.f32 %v226, %v286
  %v311 = vmul.f32 %v230, %v278
  %v312 = vmul.f32 %v230, %v282
  %v313 = vmul.f32 %v230, %v286
  %v314 = vmul.f32 %v234, %v278
  %v315 = vmul.f32 %v234, %v282
  %v316 = vmul.f32 %v234, %v286
  %v317 = vmul.f32 %v238, %v278
  %v318 = vmul.f32 %v238, %v282
  %v319 = vmul.f32 %v238, %v286
  %v320 = vmul.f32 %v242, %v278
  %v321 = vmul.f32 %v242, %v282
  %v322 = vmul.f32 %v242, %v286
  %v323 = vmul.f32 %v246, %v278
  %v324 = vmul.f32 %v246, %v282
  %v325 = vmul.f32 %v246, %v286
  %v326 = vmul.f32 %v250, %v278
  %v327 = vmul.f32 %v250, %v282
  %v328 = vmul.f32 %v250, %v286
  %v329 = vmul.f32 %v254, %v278
  %v330 = vmul.f32 %v254, %v282
  %v331 = vmul.f32 %v254, %v286
  %v332 = vmul.f32 %v258, %v278
  %v333 = vmul.f32 %v258, %v282
  %v334 = vmul.f32 %v258, %v286
  %v335 = vadd.f32 %v148, %v287
  %v336 = vadd.f32 %v149, %v288
  %v337 = vadd.f32 %v150, %v289
  %v338 = vadd.f32 %v151, %v290
  %v339 = vadd.f32 %v152, %v291
  %v340 = vadd.f32 %v153, %v292
  %v341 = vadd.f32 %v154, %v293
  %v342 = vadd.f32 %v155, %v294
  %v343 = vadd.f32 %v156, %v295
  %v344 = vadd.f32 %v157, %v296
  %v345 = vadd.f32 %v158, %v297
  %v346 = vadd.f32 %v159, %v298
  %v347 = vadd.f32 %v160, %v299
  %v348 = vadd.f32 %v161, %v300
  %v349 = vadd.f32 %v162, %v301
  %v350 = vadd.f32 %v163, %v302
  %v351 = vadd.f32 %v164, %v303
  %v352 = vadd.f32 %v165, %v304
  %v353 = vadd.f32 %v166, %v305
  %v354 = vadd.f32 %v167, %v306
  %v355 = vadd.f32 %v168, %v307
  %v356 = vadd.f32 %v169, %v308
  %v357 = vadd.f32 %v170, %v309
  %v358 = vadd.f32 %v171, %v310
  %v359 = vadd.f32 %v172, %v311
  %v360 = vadd.f32 %v173, %v312
  %v361 = vadd.f32 %v174, %v313
  %v362 = vadd.f32 %v175, %v314
  %v363 = vadd.f32 %v176, %v315
  %v364 = vadd.f32 %v177, %v316
  %v365 = vadd.f32 %v178, %v317
  %v366 = vadd.f32 %v179, %v318
  %v367 = vadd.f32 %v180, %v319
  %v368 = vadd.f32 %v181, %v320
  %v369 = vadd.f32 %v182, %v321
  %v370 = vadd.f32 %v183, %v322
  %v371 = vadd.f32 %v184, %v323
  %v372 = vadd.f32 %v185, %v324
  %v373 = vadd.f32 %v186, %v325
  %v374 = vadd.f32 %v187, %v326
  %v375 = vadd.f32 %v188, %v327
  %v376 = vadd.f32 %v189, %v328
  %v377 = vadd.f32 %v190, %v329
  %v378 = vadd.f32 %v191, %v330
  %v379 = vadd.f32 %v192, %v331
  %v380 = vadd.f32 %v193, %v332
  %v381 = vadd.f32 %v194, %v333
  %v382 = vadd.f32 %v195, %v334
  %383 = vset.pattern.permute.xlu0 2
  %384 = vperm.xlu0 %383, %v23
  %v385 = vpop.permute.xlu0 %384
  %387 = vset.pattern.permute.xlu0 2
  %388 = vperm.xlu0 %387, %v24
  %v389 = vpop.permute.xlu0 %388
  %391 = vset.pattern.permute.xlu0 2
  %392 = vperm.xlu0 %391, %v25
  %v393 = vpop.permute.xlu0 %392
  %395 = vset.pattern.permute.xlu0 2
  %396 = vperm.xlu0 %395, %v26
  %v397 = vpop.permute.xlu0 %396
  %399 = vset.pattern.permute.xlu0 2
  %400 = vperm.xlu0 %399, %v27
  %v401 = vpop.permute.xlu0 %400
  %403 = vset.pattern.permute.xlu0 2
  %404 = vperm.xlu0 %403, %v28
  %v405 = vpop.permute.xlu0 %404
  %407 = vset.pattern.permute.xlu0 2
  %408 = vperm.xlu0 %407, %v29
  %v409 = vpop.permute.xlu0 %408
  %411 = vset.pattern.permute.xlu0 2
  %412 = vperm.xlu0 %411, %v30
  %v413 = vpop.permute.xlu0 %412
  %415 = vset.pattern.permute.xlu0 2
  %416 = vperm.xlu0 %415, %v31
  %v417 = vpop.permute.xlu0 %416
  %419 = vset.pattern.permute.xlu0 2
  %420 = vperm.xlu0 %419, %v32
  %v421 = vpop.permute.xlu0 %420
  %423 = vset.pattern.permute.xlu0 2
  %424 = vperm.xlu0 %423, %v33
  %v425 = vpop.permute.xlu0 %424
  %427 = vset.pattern.permute.xlu0 2
  %428 = vperm.xlu0 %427, %v34
  %v429 = vpop.permute.xlu0 %428
  %431 = vset.pattern.permute.xlu0 2
  %432 = vperm.xlu0 %431, %v35
  %v433 = vpop.permute.xlu0 %432
  %435 = vset.pattern.permute.xlu0 2
  %436 = vperm.xlu0 %435, %v36
  %v437 = vpop.permute.xlu0 %436
  %439 = vset.pattern.permute.xlu0 2
  %440 = vperm.xlu0 %439, %v37
  %v441 = vpop.permute.xlu0 %440
  %443 = vset.pattern.permute.xlu0 2
  %444 = vperm.xlu0 %443, %v38
  %v445 = vpop.permute.xlu0 %444
  %v447 = vlaneseq
  %v448 = vshrl.u32 %v447, 7
  %v449 = vsub.s32 2, %v448
  %v450 = vrot.slane %v21, %v449
  %v451 = vlaneseq
  %v452 = vshrl.u32 %v451, 7
  %v453 = vsub.s32 6, %v452
  %v454 = vrot.slane %v21, %v453
  %v455 = vlaneseq
  %v456 = vshrl.u32 %v455, 7
  %v457 = vsub.s32 2, %v456
  %v458 = vrot.slane %v22, %v457
  %v462 = vlaneseq
  %v463 = vshrl.u32 %v462, 7
  %v464 = vsub.s32 2, %v463
  %v465 = vrot.slane %v450, %v464
  %v466 = vlaneseq
  %v467 = vshrl.u32 %v466, 7
  %v468 = vsub.s32 2, %v467
  %v469 = vrot.slane %v454, %v468
  %v470 = vlaneseq
  %v471 = vshrl.u32 %v470, 7
  %v472 = vsub.s32 2, %v471
  %v473 = vrot.slane %v458, %v472
  %v474 = vmul.f32 %v385, %v465
  %v475 = vmul.f32 %v385, %v469
  %v476 = vmul.f32 %v385, %v473
  %v477 = vmul.f32 %v389, %v465
  %v478 = vmul.f32 %v389, %v469
  %v479 = vmul.f32 %v389, %v473
  %v480 = vmul.f32 %v393, %v465
  %v481 = vmul.f32 %v393, %v469
  %v482 = vmul.f32 %v393, %v473
  %v483 = vmul.f32 %v397, %v465
  %v484 = vmul.f32 %v397, %v469
  %v485 = vmul.f32 %v397, %v473
  %v486 = vmul.f32 %v401, %v465
  %v487 = vmul.f32 %v401, %v469
  %v488 = vmul.f32 %v401, %v473
  %v489 = vmul.f32 %v405, %v465
  %v490 = vmul.f32 %v405, %v469
  %v491 = vmul.f32 %v405, %v473
  %v492 = vmul.f32 %v409, %v465
  %v493 = vmul.f32 %v409, %v469
  %v494 = vmul.f32 %v409, %v473
  %v495 = vmul.f32 %v413, %v465
  %v496 = vmul.f32 %v413, %v469
  %v497 = vmul.f32 %v413, %v473
  %v498 = vmul.f32 %v417, %v465
  %v499 = vmul.f32 %v417, %v469
  %v500 = vmul.f32 %v417, %v473
  %v501 = vmul.f32 %v421, %v465
  %v502 = vmul.f32 %v421, %v469
  %v503 = vmul.f32 %v421, %v473
  %v504 = vmul.f32 %v425, %v465
  %v505 = vmul.f32 %v425, %v469
  %v506 = vmul.f32 %v425, %v473
  %v507 = vmul.f32 %v429, %v465
  %v508 = vmul.f32 %v429, %v469
  %v509 = vmul.f32 %v429, %v473
  %v510 = vmul.f32 %v433, %v465
  %v511 = vmul.f32 %v433, %v469
  %v512 = vmul.f32 %v433, %v473
  %v513 = vmul.f32 %v437, %v465
  %v514 = vmul.f32 %v437, %v469
  %v515 = vmul.f32 %v437, %v473
  %v516 = vmul.f32 %v441, %v465
  %v517 = vmul.f32 %v441, %v469
  %v518 = vmul.f32 %v441, %v473
  %v519 = vmul.f32 %v445, %v465
  %v520 = vmul.f32 %v445, %v469
  %v521 = vmul.f32 %v445, %v473
  %v522 = vadd.f32 %v335, %v474
  %v523 = vadd.f32 %v336, %v475
  %v524 = vadd.f32 %v337, %v476
  %v525 = vadd.f32 %v338, %v477
  %v526 = vadd.f32 %v339, %v478
  %v527 = vadd.f32 %v340, %v479
  %v528 = vadd.f32 %v341, %v480
  %v529 = vadd.f32 %v342, %v481
  %v530 = vadd.f32 %v343, %v482
  %v531 = vadd.f32 %v344, %v483
  %v532 = vadd.f32 %v345, %v484
  %v533 = vadd.f32 %v346, %v485
  %v534 = vadd.f32 %v347, %v486
  %v535 = vadd.f32 %v348, %v487
  %v536 = vadd.f32 %v349, %v488
  %v537 = vadd.f32 %v350, %v489
  %v538 = vadd.f32 %v351, %v490
  %v539 = vadd.f32 %v352, %v491
  %v540 = vadd.f32 %v353, %v492
  %v541 = vadd.f32 %v354, %v493
  %v542 = vadd.f32 %v355, %v494
  %v543 = vadd.f32 %v356, %v495
  %v544 = vadd.f32 %v357, %v496
  %v545 = vadd.f32 %v358, %v497
  %v546 = vadd.f32 %v359, %v498
  %v547 = vadd.f32 %v360, %v499
  %v548 = vadd.f32 %v361, %v500
  %v549 = vadd.f32 %v362, %v501
  %v550 = vadd.f32 %v363, %v502
  %v551 = vadd.f32 %v364, %v503
  %v552 = vadd.f32 %v365, %v504
  %v553 = vadd.f32 %v366, %v505
  %v554 = vadd.f32 %v367, %v506
  %v555 = vadd.f32 %v368, %v507
  %v556 = vadd.f32 %v369, %v508
  %v557 = vadd.f32 %v370, %v509
  %v558 = vadd.f32 %v371, %v510
  %v559 = vadd.f32 %v372, %v511
  %v560 = vadd.f32 %v373, %v512
  %v561 = vadd.f32 %v374, %v513
  %v562 = vadd.f32 %v375, %v514
  %v563 = vadd.f32 %v376, %v515
  %v564 = vadd.f32 %v377, %v516
  %v565 = vadd.f32 %v378, %v517
  %v566 = vadd.f32 %v379, %v518
  %v567 = vadd.f32 %v380, %v519
  %v568 = vadd.f32 %v381, %v520
  %v569 = vadd.f32 %v382, %v521
  %v570 = vld [vmem:[%s2] sm:$0xff]
  %v571 = vld [vmem:[%s2 + $0x8] sm:$0xff]
  %v572 = vld [vmem:[%s2 + $0x10] sm:$0xff]
  %v573 = vld [vmem:[%s2 + $0x18] sm:$0xff]
  %v574 = vld [vmem:[%s2 + $0x20] sm:$0xff]
  %v575 = vld [vmem:[%s2 + $0x28] sm:$0xff]
  %v576 = vld [vmem:[%s2 + $0x30] sm:$0xff]
  %v577 = vld [vmem:[%s2 + $0x38] sm:$0xff]
  %v578 = vld [vmem:[%s2 + $0x40] sm:$0xff]
  %v579 = vld [vmem:[%s2 + $0x48] sm:$0xff]
  %v580 = vld [vmem:[%s2 + $0x50] sm:$0xff]
  %v581 = vld [vmem:[%s2 + $0x58] sm:$0xff]
  %v582 = vld [vmem:[%s2 + $0x60] sm:$0xff]
  %v583 = vld [vmem:[%s2 + $0x68] sm:$0xff]
  %v584 = vld [vmem:[%s2 + $0x70] sm:$0xff]
  %v585 = vld [vmem:[%s2 + $0x78] sm:$0xff]
  %587 = vset.pattern.permute.xlu0 0
  %588 = vperm.xlu0 %587, %v570
  %v589 = vpop.permute.xlu0 %588
  %592 = vset.pattern.permute.xlu0 0
  %593 = vperm.xlu0 %592, %v571
  %v594 = vpop.permute.xlu0 %593
  %597 = vset.pattern.permute.xlu0 0
  %598 = vperm.xlu0 %597, %v572
  %v599 = vpop.permute.xlu0 %598
  %602 = vset.pattern.permute.xlu0 0
  %603 = vperm.xlu0 %602, %v573
  %v604 = vpop.permute.xlu0 %603
  %607 = vset.pattern.permute.xlu0 0
  %608 = vperm.xlu0 %607, %v574
  %v609 = vpop.permute.xlu0 %608
  %612 = vset.pattern.permute.xlu0 0
  %613 = vperm.xlu0 %612, %v575
  %v614 = vpop.permute.xlu0 %613
  %617 = vset.pattern.permute.xlu0 0
  %618 = vperm.xlu0 %617, %v576
  %v619 = vpop.permute.xlu0 %618
  %622 = vset.pattern.permute.xlu0 0
  %623 = vperm.xlu0 %622, %v577
  %v624 = vpop.permute.xlu0 %623
  %627 = vset.pattern.permute.xlu0 0
  %628 = vperm.xlu0 %627, %v578
  %v629 = vpop.permute.xlu0 %628
  %632 = vset.pattern.permute.xlu0 0
  %633 = vperm.xlu0 %632, %v579
  %v634 = vpop.permute.xlu0 %633
  %637 = vset.pattern.permute.xlu0 0
  %638 = vperm.xlu0 %637, %v580
  %v639 = vpop.permute.xlu0 %638
  %642 = vset.pattern.permute.xlu0 0
  %643 = vperm.xlu0 %642, %v581
  %v644 = vpop.permute.xlu0 %643
  %647 = vset.pattern.permute.xlu0 0
  %648 = vperm.xlu0 %647, %v582
  %v649 = vpop.permute.xlu0 %648
  %652 = vset.pattern.permute.xlu0 0
  %653 = vperm.xlu0 %652, %v583
  %v654 = vpop.permute.xlu0 %653
  %657 = vset.pattern.permute.xlu0 0
  %658 = vperm.xlu0 %657, %v584
  %v659 = vpop.permute.xlu0 %658
  %662 = vset.pattern.permute.xlu0 0
  %663 = vperm.xlu0 %662, %v585
  %v664 = vpop.permute.xlu0 %663
  %v666 = vadd.f32 %v522, %v589
  %v667 = vadd.f32 %v523, %v589
  %v668 = vadd.f32 %v524, %v589
  %v669 = vadd.f32 %v525, %v594
  %v670 = vadd.f32 %v526, %v594
  %v671 = vadd.f32 %v527, %v594
  %v672 = vadd.f32 %v528, %v599
  %v673 = vadd.f32 %v529, %v599
  %v674 = vadd.f32 %v530, %v599
  %v675 = vadd.f32 %v531, %v604
  %v676 = vadd.f32 %v532, %v604
  %v677 = vadd.f32 %v533, %v604
  %v678 = vadd.f32 %v534, %v609
  %v679 = vadd.f32 %v535, %v609
  %v680 = vadd.f32 %v536, %v609
  %v681 = vadd.f32 %v537, %v614
  %v682 = vadd.f32 %v538, %v614
  %v683 = vadd.f32 %v539, %v614
  %v684 = vadd.f32 %v540, %v619
  %v685 = vadd.f32 %v541, %v619
  %v686 = vadd.f32 %v542, %v619
  %v687 = vadd.f32 %v543, %v624
  %v688 = vadd.f32 %v544, %v624
  %v689 = vadd.f32 %v545, %v624
  %v690 = vadd.f32 %v546, %v629
  %v691 = vadd.f32 %v547, %v629
  %v692 = vadd.f32 %v548, %v629
  %v693 = vadd.f32 %v549, %v634
  %v694 = vadd.f32 %v550, %v634
  %v695 = vadd.f32 %v551, %v634
  %v696 = vadd.f32 %v552, %v639
  %v697 = vadd.f32 %v553, %v639
  %v698 = vadd.f32 %v554, %v639
  %v699 = vadd.f32 %v555, %v644
  %v700 = vadd.f32 %v556, %v644
  %v701 = vadd.f32 %v557, %v644
  %v702 = vadd.f32 %v558, %v649
  %v703 = vadd.f32 %v559, %v649
  %v704 = vadd.f32 %v560, %v649
  %v705 = vadd.f32 %v561, %v654
  %v706 = vadd.f32 %v562, %v654
  %v707 = vadd.f32 %v563, %v654
  %v708 = vadd.f32 %v564, %v659
  %v709 = vadd.f32 %v565, %v659
  %v710 = vadd.f32 %v566, %v659
  %v711 = vadd.f32 %v567, %v664
  %v712 = vadd.f32 %v568, %v664
  %v713 = vadd.f32 %v569, %v664
  %v714 = vmax.f32 %v666, 0.0
  %v715 = vmax.f32 %v667, 0.0
  %v716 = vmax.f32 %v668, 0.0
  %v717 = vmax.f32 %v669, 0.0
  %v718 = vmax.f32 %v670, 0.0
  %v719 = vmax.f32 %v671, 0.0
  %v720 = vmax.f32 %v672, 0.0
  %v721 = vmax.f32 %v673, 0.0
  %v722 = vmax.f32 %v674, 0.0
  %v723 = vmax.f32 %v675, 0.0
  %v724 = vmax.f32 %v676, 0.0
  %v725 = vmax.f32 %v677, 0.0
  %v726 = vmax.f32 %v678, 0.0
  %v727 = vmax.f32 %v679, 0.0
  %v728 = vmax.f32 %v680, 0.0
  %v729 = vmax.f32 %v681, 0.0
  %v730 = vmax.f32 %v682, 0.0
  %v731 = vmax.f32 %v683, 0.0
  %v732 = vmax.f32 %v684, 0.0
  %v733 = vmax.f32 %v685, 0.0
  %v734 = vmax.f32 %v686, 0.0
  %v735 = vmax.f32 %v687, 0.0
  %v736 = vmax.f32 %v688, 0.0
  %v737 = vmax.f32 %v689, 0.0
  %v738 = vmax.f32 %v690, 0.0
  %v739 = vmax.f32 %v691, 0.0
  %v740 = vmax.f32 %v692, 0.0
  %v741 = vmax.f32 %v693, 0.0
  %v742 = vmax.f32 %v694, 0.0
  %v743 = vmax.f32 %v695, 0.0
  %v744 = vmax.f32 %v696, 0.0
  %v745 = vmax.f32 %v697, 0.0
  %v746 = vmax.f32 %v698, 0.0
  %v747 = vmax.f32 %v699, 0.0
  %v748 = vmax.f32 %v700, 0.0
  %v749 = vmax.f32 %v701, 0.0
  %v750 = vmax.f32 %v702, 0.0
  %v751 = vmax.f32 %v703, 0.0
  %v752 = vmax.f32 %v704, 0.0
  %v753 = vmax.f32 %v705, 0.0
  %v754 = vmax.f32 %v706, 0.0
  %v755 = vmax.f32 %v707, 0.0
  %v756 = vmax.f32 %v708, 0.0
  %v757 = vmax.f32 %v709, 0.0
  %v758 = vmax.f32 %v710, 0.0
  %v759 = vmax.f32 %v711, 0.0
  %v760 = vmax.f32 %v712, 0.0
  %v761 = vmax.f32 %v713, 0.0
  %762 = vxpose.xlu0.b32.start [1/16] %v714, 128
  %763 = vxpose.xlu0.b32.cont [2/16] %v717, 128
  %764 = vxpose.xlu0.b32.cont [3/16] %v720, 128
  %765 = vxpose.xlu0.b32.cont [4/16] %v723, 128
  %766 = vxpose.xlu0.b32.cont [5/16] %v726, 128
  %767 = vxpose.xlu0.b32.cont [6/16] %v729, 128
  %768 = vxpose.xlu0.b32.cont [7/16] %v732, 128
  %769 = vxpose.xlu0.b32.cont [8/16] %v735, 128
  %770 = vxpose.xlu0.b32.cont [9/16] %v738, 128
  %771 = vxpose.xlu0.b32.cont [10/16] %v741, 128
  %772 = vxpose.xlu0.b32.cont [11/16] %v744, 128
  %773 = vxpose.xlu0.b32.cont [12/16] %v747, 128
  %774 = vxpose.xlu0.b32.cont [13/16] %v750, 128
  %775 = vxpose.xlu0.b32.cont [14/16] %v753, 128
  %776 = vxpose.xlu0.b32.cont [15/16] %v756, 128
  %777 = vxpose.xlu0.b32.end [16/16] %v759, 128
  %v778 = vpop.trf.xlu0
  %v779 = vpop.trf.xlu0
  %v780 = vpop.trf.xlu0
  %v781 = vpop.trf.xlu0
  %v782 = vpop.trf.xlu0
  %v783 = vpop.trf.xlu0
  %v784 = vpop.trf.xlu0
  %v785 = vpop.trf.xlu0
  %v786 = vpop.trf.xlu0
  %v787 = vpop.trf.xlu0
  %v788 = vpop.trf.xlu0
  %v789 = vpop.trf.xlu0
  %v790 = vpop.trf.xlu0
  %v791 = vpop.trf.xlu0
  %v792 = vpop.trf.xlu0
  %v793 = vpop.trf.xlu0
  %794 = vxpose.xlu0.b32.start [1/16] %v715, 128
  %795 = vxpose.xlu0.b32.cont [2/16] %v718, 128
  %796 = vxpose.xlu0.b32.cont [3/16] %v721, 128
  %797 = vxpose.xlu0.b32.cont [4/16] %v724, 128
  %798 = vxpose.xlu0.b32.cont [5/16] %v727, 128
  %799 = vxpose.xlu0.b32.cont [6/16] %v730, 128
  %800 = vxpose.xlu0.b32.cont [7/16] %v733, 128
  %801 = vxpose.xlu0.b32.cont [8/16] %v736, 128
  %802 = vxpose.xlu0.b32.cont [9/16] %v739, 128
  %803 = vxpose.xlu0.b32.cont [10/16] %v742, 128
  %804 = vxpose.xlu0.b32.cont [11/16] %v745, 128
  %805 = vxpose.xlu0.b32.cont [12/16] %v748, 128
  %806 = vxpose.xlu0.b32.cont [13/16] %v751, 128
  %807 = vxpose.xlu0.b32.cont [14/16] %v754, 128
  %808 = vxpose.xlu0.b32.cont [15/16] %v757, 128
  %809 = vxpose.xlu0.b32.end [16/16] %v760, 128
  %v810 = vpop.trf.xlu0
  %v811 = vpop.trf.xlu0
  %v812 = vpop.trf.xlu0
  %v813 = vpop.trf.xlu0
  %v814 = vpop.trf.xlu0
  %v815 = vpop.trf.xlu0
  %v816 = vpop.trf.xlu0
  %v817 = vpop.trf.xlu0
  %v818 = vpop.trf.xlu0
  %v819 = vpop.trf.xlu0
  %v820 = vpop.trf.xlu0
  %v821 = vpop.trf.xlu0
  %v822 = vpop.trf.xlu0
  %v823 = vpop.trf.xlu0
  %v824 = vpop.trf.xlu0
  %v825 = vpop.trf.xlu0
  %826 = vxpose.xlu0.b32.start [1/16] %v716, 128
  %827 = vxpose.xlu0.b32.cont [2/16] %v719, 128
  %828 = vxpose.xlu0.b32.cont [3/16] %v722, 128
  %829 = vxpose.xlu0.b32.cont [4/16] %v725, 128
  %830 = vxpose.xlu0.b32.cont [5/16] %v728, 128
  %831 = vxpose.xlu0.b32.cont [6/16] %v731, 128
  %832 = vxpose.xlu0.b32.cont [7/16] %v734, 128
  %833 = vxpose.xlu0.b32.cont [8/16] %v737, 128
  %834 = vxpose.xlu0.b32.cont [9/16] %v740, 128
  %835 = vxpose.xlu0.b32.cont [10/16] %v743, 128
  %836 = vxpose.xlu0.b32.cont [11/16] %v746, 128
  %837 = vxpose.xlu0.b32.cont [12/16] %v749, 128
  %838 = vxpose.xlu0.b32.cont [13/16] %v752, 128
  %839 = vxpose.xlu0.b32.cont [14/16] %v755, 128
  %840 = vxpose.xlu0.b32.cont [15/16] %v758, 128
  %841 = vxpose.xlu0.b32.end [16/16] %v761, 128
  %v842 = vpop.trf.xlu0
  %v843 = vpop.trf.xlu0
  %v844 = vpop.trf.xlu0
  %v845 = vpop.trf.xlu0
  %v846 = vpop.trf.xlu0
  %v847 = vpop.trf.xlu0
  %v848 = vpop.trf.xlu0
  %v849 = vpop.trf.xlu0
  %v850 = vpop.trf.xlu0
  %v851 = vpop.trf.xlu0
  %v852 = vpop.trf.xlu0
  %v853 = vpop.trf.xlu0
  %v854 = vpop.trf.xlu0
  %v855 = vpop.trf.xlu0
  %v856 = vpop.trf.xlu0
  %v857 = vpop.trf.xlu0
  %v858 = vpack.c.bf16 %v779, %v778
  %v859 = vpack.c.bf16 %v781, %v780
  %v860 = vpack.c.bf16 %v783, %v782
  %v861 = vpack.c.bf16 %v785, %v784
  %v862 = vpack.c.bf16 %v787, %v786
  %v863 = vpack.c.bf16 %v789, %v788
  %v864 = vpack.c.bf16 %v791, %v790
  %v865 = vpack.c.bf16 %v793, %v792
  %v866 = vpack.c.bf16 %v811, %v810
  %v867 = vpack.c.bf16 %v813, %v812
  %v868 = vpack.c.bf16 %v815, %v814
  %v869 = vpack.c.bf16 %v817, %v816
  %v870 = vpack.c.bf16 %v819, %v818
  %v871 = vpack.c.bf16 %v821, %v820
  %v872 = vpack.c.bf16 %v823, %v822
  %v873 = vpack.c.bf16 %v825, %v824
  %v874 = vpack.c.bf16 %v843, %v842
  %v875 = vpack.c.bf16 %v845, %v844
  %v876 = vpack.c.bf16 %v847, %v846
  %v877 = vpack.c.bf16 %v849, %v848
  %v878 = vpack.c.bf16 %v851, %v850
  %v879 = vpack.c.bf16 %v853, %v852
  %v880 = vpack.c.bf16 %v855, %v854
  %v881 = vpack.c.bf16 %v857, %v856
  %v882 = vld [vmem:[%s3] sm:$0xf]
  %v883 = vld [vmem:[%s3 + $0x4] sm:$0xf]
  %v884 = vld [vmem:[%s3 + $0x8] sm:$0xf]
  %v885 = vld [vmem:[%s3 + $0xc] sm:$0xf]
  %v886 = vld [vmem:[%s3 + $0x10] sm:$0xf]
  %v887 = vld [vmem:[%s3 + $0x14] sm:$0xf]
  %v888 = vld [vmem:[%s3 + $0x18] sm:$0xf]
  %v889 = vld [vmem:[%s3 + $0x1c] sm:$0xf]
  %v890 = vld [vmem:[%s3 + $0x20] sm:$0xf]
  %v891 = vld [vmem:[%s3 + $0x24] sm:$0xf]
  %v892 = vld [vmem:[%s3 + $0x28] sm:$0xf]
  %v893 = vld [vmem:[%s3 + $0x2c] sm:$0xf]
  %v894 = vld [vmem:[%s3 + $0x30] sm:$0xf]
  %v895 = vld [vmem:[%s3 + $0x34] sm:$0xf]
  %v896 = vld [vmem:[%s3 + $0x38] sm:$0xf]
  %v897 = vld [vmem:[%s3 + $0x3c] sm:$0xf]
  %v914 = vunpack.c.l.b16 %v882
  %v915 = vunpack.c.l.b16 %v883
  %v916 = vunpack.c.l.b16 %v884
  %v917 = vunpack.c.l.b16 %v885
  %v918 = vunpack.c.l.b16 %v886
  %v919 = vunpack.c.l.b16 %v887
  %v920 = vunpack.c.l.b16 %v888
  %v921 = vunpack.c.l.b16 %v889
  %v922 = vunpack.c.l.b16 %v890
  %v923 = vunpack.c.l.b16 %v891
  %v924 = vunpack.c.l.b16 %v892
  %v925 = vunpack.c.l.b16 %v893
  %v926 = vunpack.c.l.b16 %v894
  %v927 = vunpack.c.l.b16 %v895
  %v928 = vunpack.c.l.b16 %v896
  %v929 = vunpack.c.l.b16 %v897
  %v930 = vpack.c.b16 %v915, %v914
  %v931 = vpack.c.b16 %v917, %v916
  %v932 = vpack.c.b16 %v919, %v918
  %v933 = vpack.c.b16 %v921, %v920
  %v934 = vpack.c.b16 %v923, %v922
  %v935 = vpack.c.b16 %v925, %v924
  %v936 = vpack.c.b16 %v927, %v926
  %v937 = vpack.c.b16 %v929, %v928
  %946 = vmatprep.subr.bf16.mxu0 0
  %947 = vmatpush1.bf16.msra.mxu0 %v930
  %948 = vmatprep.subr.bf16.mxu0 0
  %949 = vmatpush1.bf16.msra.mxu0 %v931
  %950 = vmatprep.subr.bf16.mxu0 0
  %951 = vmatpush1.bf16.msra.mxu0 %v932
  %952 = vmatprep.subr.bf16.mxu0 0
  %953 = vmatpush1.bf16.msra.mxu0 %v933
  %954 = vmatprep.subr.bf16.mxu0 0
  %955 = vmatpush1.bf16.msra.mxu0 %v934
  %956 = vmatprep.subr.bf16.mxu0 0
  %957 = vmatpush1.bf16.msra.mxu0 %v935
  %958 = vmatprep.subr.bf16.mxu0 0
  %959 = vmatpush1.bf16.msra.mxu0 %v936
  %960 = vmatprep.subr.bf16.mxu0 0
  %961 = vmatpush1.bf16.msra.mxu0 %v937
  %962 = vmatprep.subr.bf16.mxu0 0
  %963 = vmatpush1.bf16.msra.mxu0 0
  %964 = vmatprep.subr.bf16.mxu0 0
  %965 = vmatpush1.bf16.msra.mxu0 0
  %966 = vmatprep.subr.bf16.mxu0 0
  %967 = vmatpush1.bf16.msra.mxu0 0
  %968 = vmatprep.subr.bf16.mxu0 0
  %969 = vmatpush1.bf16.msra.mxu0 0
  %970 = vmatprep.subr.bf16.mxu0 0
  %971 = vmatpush1.bf16.msra.mxu0 0
  %972 = vmatprep.subr.bf16.mxu0 0
  %973 = vmatpush1.bf16.msra.mxu0 0
  %974 = vmatprep.subr.bf16.mxu0 0
  %975 = vmatpush1.bf16.msra.mxu0 0
  %976 = vmatprep.subr.bf16.mxu0 0
  %977 = vmatpush1.bf16.msra.mxu0 0
  %978 = vmatprep.mubr.bf16.mxu0 0
  %979 = vmatmul.mubr.bf16.gmra.mrb[0].mxu0 %v858
  %v980 = vpop.f32.mrb[0].mxu0
  %v981 = vadd.f32 0.0, %v980
  %v982 = vpop.f32.mrb[0].mxu0
  %v983 = vpop.f32.mrb[0].mxu0
  %v984 = vadd.f32 0.0, %v983
  %v985 = vpop.f32.mrb[0].mxu0
  %986 = vmatprep.mubr.bf16.mxu0 0
  %987 = vmatmul.mubr.bf16.gmra.mrb[0].mxu0 %v859
  %v988 = vpop.f32.mrb[0].mxu0
  %v989 = vadd.f32 0.0, %v988
  %v990 = vpop.f32.mrb[0].mxu0
  %v991 = vpop.f32.mrb[0].mxu0
  %v992 = vadd.f32 0.0, %v991
  %v993 = vpop.f32.mrb[0].mxu0
  %994 = vmatprep.mubr.bf16.mxu0 0
  %995 = vmatmul.mubr.bf16.gmra.mrb[0].mxu0 %v860
  %v996 = vpop.f32.mrb[0].mxu0
  %v997 = vadd.f32 0.0, %v996
  %v998 = vpop.f32.mrb[0].mxu0
  %v999 = vpop.f32.mrb[0].mxu0
  %v1000 = vadd.f32 0.0, %v999
  %v1001 = vpop.f32.mrb[0].mxu0
  %1002 = vmatprep.mubr.bf16.mxu0 0
  %1003 = vmatmul.mubr.bf16.gmra.mrb[0].mxu0 %v861
  %v1004 = vpop.f32.mrb[0].mxu0
  %v1005 = vadd.f32 0.0, %v1004
  %v1006 = vpop.f32.mrb[0].mxu0
  %v1007 = vpop.f32.mrb[0].mxu0
  %v1008 = vadd.f32 0.0, %v1007
  %v1009 = vpop.f32.mrb[0].mxu0
  %1010 = vmatprep.mubr.bf16.mxu0 0
  %1011 = vmatmul.mubr.bf16.gmra.mrb[0].mxu0 %v862
  %v1012 = vpop.f32.mrb[0].mxu0
  %v1013 = vadd.f32 0.0, %v1012
  %v1014 = vpop.f32.mrb[0].mxu0
  %v1015 = vpop.f32.mrb[0].mxu0
  %v1016 = vadd.f32 0.0, %v1015
  %v1017 = vpop.f32.mrb[0].mxu0
  %1018 = vmatprep.mubr.bf16.mxu0 0
  %1019 = vmatmul.mubr.bf16.gmra.mrb[0].mxu0 %v863
  %v1020 = vpop.f32.mrb[0].mxu0
  %v1021 = vadd.f32 0.0, %v1020
  %v1022 = vpop.f32.mrb[0].mxu0
  %v1023 = vpop.f32.mrb[0].mxu0
  %v1024 = vadd.f32 0.0, %v1023
  %v1025 = vpop.f32.mrb[0].mxu0
  %1026 = vmatprep.mubr.bf16.mxu0 0
  %1027 = vmatmul.mubr.bf16.gmra.mrb[0].mxu0 %v864
  %v1028 = vpop.f32.mrb[0].mxu0
  %v1029 = vadd.f32 0.0, %v1028
  %v1030 = vpop.f32.mrb[0].mxu0
  %v1031 = vpop.f32.mrb[0].mxu0
  %v1032 = vadd.f32 0.0, %v1031
  %v1033 = vpop.f32.mrb[0].mxu0
  %1034 = vmatprep.mubr.bf16.mxu0 0
  %1035 = vmatmul.mubr.bf16.gmra.mrb[0].mxu0 %v865
  %v1036 = vpop.f32.mrb[0].mxu0
  %v1037 = vadd.f32 0.0, %v1036
  %v1038 = vpop.f32.mrb[0].mxu0
  %v1039 = vpop.f32.mrb[0].mxu0
  %v1040 = vadd.f32 0.0, %v1039
  %v1041 = vpop.f32.mrb[0].mxu0
  %1042 = vmatprep.mubr.bf16.mxu0 0
  %1043 = vmatmul.mubr.bf16.gmra.mrb[0].mxu0 %v866
  %v1044 = vpop.f32.mrb[0].mxu0
  %v1045 = vadd.f32 0.0, %v1044
  %v1046 = vpop.f32.mrb[0].mxu0
  %v1047 = vpop.f32.mrb[0].mxu0
  %v1048 = vadd.f32 0.0, %v1047
  %v1049 = vpop.f32.mrb[0].mxu0
  %1050 = vmatprep.mubr.bf16.mxu0 0
  %1051 = vmatmul.mubr.bf16.gmra.mrb[0].mxu0 %v867
  %v1052 = vpop.f32.mrb[0].mxu0
  %v1053 = vadd.f32 0.0, %v1052
  %v1054 = vpop.f32.mrb[0].mxu0
  %v1055 = vpop.f32.mrb[0].mxu0
  %v1056 = vadd.f32 0.0, %v1055
  %v1057 = vpop.f32.mrb[0].mxu0
  %1058 = vmatprep.mubr.bf16.mxu0 0
  %1059 = vmatmul.mubr.bf16.gmra.mrb[0].mxu0 %v868
  %v1060 = vpop.f32.mrb[0].mxu0
  %v1061 = vadd.f32 0.0, %v1060
  %v1062 = vpop.f32.mrb[0].mxu0
  %v1063 = vpop.f32.mrb[0].mxu0
  %v1064 = vadd.f32 0.0, %v1063
  %v1065 = vpop.f32.mrb[0].mxu0
  %1066 = vmatprep.mubr.bf16.mxu0 0
  %1067 = vmatmul.mubr.bf16.gmra.mrb[0].mxu0 %v869
  %v1068 = vpop.f32.mrb[0].mxu0
  %v1069 = vadd.f32 0.0, %v1068
  %v1070 = vpop.f32.mrb[0].mxu0
  %v1071 = vpop.f32.mrb[0].mxu0
  %v1072 = vadd.f32 0.0, %v1071
  %v1073 = vpop.f32.mrb[0].mxu0
  %1074 = vmatprep.mubr.bf16.mxu0 0
  %1075 = vmatmul.mubr.bf16.gmra.mrb[0].mxu0 %v870
  %v1076 = vpop.f32.mrb[0].mxu0
  %v1077 = vadd.f32 0.0, %v1076
  %v1078 = vpop.f32.mrb[0].mxu0
  %v1079 = vpop.f32.mrb[0].mxu0
  %v1080 = vadd.f32 0.0, %v1079
  %v1081 = vpop.f32.mrb[0].mxu0
  %1082 = vmatprep.mubr.bf16.mxu0 0
  %1083 = vmatmul.mubr.bf16.gmra.mrb[0].mxu0 %v871
  %v1084 = vpop.f32.mrb[0].mxu0
  %v1085 = vadd.f32 0.0, %v1084
  %v1086 = vpop.f32.mrb[0].mxu0
  %v1087 = vpop.f32.mrb[0].mxu0
  %v1088 = vadd.f32 0.0, %v1087
  %v1089 = vpop.f32.mrb[0].mxu0
  %1090 = vmatprep.mubr.bf16.mxu0 0
  %1091 = vmatmul.mubr.bf16.gmra.mrb[0].mxu0 %v872
  %v1092 = vpop.f32.mrb[0].mxu0
  %v1093 = vadd.f32 0.0, %v1092
  %v1094 = vpop.f32.mrb[0].mxu0
  %v1095 = vpop.f32.mrb[0].mxu0
  %v1096 = vadd.f32 0.0, %v1095
  %v1097 = vpop.f32.mrb[0].mxu0
  %1098 = vmatprep.mubr.bf16.mxu0 0
  %1099 = vmatmul.mubr.bf16.gmra.mrb[0].mxu0 %v873
  %v1100 = vpop.f32.mrb[0].mxu0
  %v1101 = vadd.f32 0.0, %v1100
  %v1102 = vpop.f32.mrb[0].mxu0
  %v1103 = vpop.f32.mrb[0].mxu0
  %v1104 = vadd.f32 0.0, %v1103
  %v1105 = vpop.f32.mrb[0].mxu0
  %1106 = vmatprep.mubr.bf16.mxu0 0
  %1107 = vmatmul.mubr.bf16.gmra.mrb[0].mxu0 %v874
  %v1108 = vpop.f32.mrb[0].mxu0
  %v1109 = vadd.f32 0.0, %v1108
  %v1110 = vpop.f32.mrb[0].mxu0
  %v1111 = vpop.f32.mrb[0].mxu0
  %v1112 = vadd.f32 0.0, %v1111
  %v1113 = vpop.f32.mrb[0].mxu0
  %1114 = vmatprep.mubr.bf16.mxu0 0
  %1115 = vmatmul.mubr.bf16.gmra.mrb[0].mxu0 %v875
  %v1116 = vpop.f32.mrb[0].mxu0
  %v1117 = vadd.f32 0.0, %v1116
  %v1118 = vpop.f32.mrb[0].mxu0
  %v1119 = vpop.f32.mrb[0].mxu0
  %v1120 = vadd.f32 0.0, %v1119
  %v1121 = vpop.f32.mrb[0].mxu0
  %1122 = vmatprep.mubr.bf16.mxu0 0
  %1123 = vmatmul.mubr.bf16.gmra.mrb[0].mxu0 %v876
  %v1124 = vpop.f32.mrb[0].mxu0
  %v1125 = vadd.f32 0.0, %v1124
  %v1126 = vpop.f32.mrb[0].mxu0
  %v1127 = vpop.f32.mrb[0].mxu0
  %v1128 = vadd.f32 0.0, %v1127
  %v1129 = vpop.f32.mrb[0].mxu0
  %1130 = vmatprep.mubr.bf16.mxu0 0
  %1131 = vmatmul.mubr.bf16.gmra.mrb[0].mxu0 %v877
  %v1132 = vpop.f32.mrb[0].mxu0
  %v1133 = vadd.f32 0.0, %v1132
  %v1134 = vpop.f32.mrb[0].mxu0
  %v1135 = vpop.f32.mrb[0].mxu0
  %v1136 = vadd.f32 0.0, %v1135
  %v1137 = vpop.f32.mrb[0].mxu0
  %1138 = vmatprep.mubr.bf16.mxu0 0
  %1139 = vmatmul.mubr.bf16.gmra.mrb[0].mxu0 %v878
  %v1140 = vpop.f32.mrb[0].mxu0
  %v1141 = vadd.f32 0.0, %v1140
  %v1142 = vpop.f32.mrb[0].mxu0
  %v1143 = vpop.f32.mrb[0].mxu0
  %v1144 = vadd.f32 0.0, %v1143
  %v1145 = vpop.f32.mrb[0].mxu0
  %1146 = vmatprep.mubr.bf16.mxu0 0
  %1147 = vmatmul.mubr.bf16.gmra.mrb[0].mxu0 %v879
  %v1148 = vpop.f32.mrb[0].mxu0
  %v1149 = vadd.f32 0.0, %v1148
  %v1150 = vpop.f32.mrb[0].mxu0
  %v1151 = vpop.f32.mrb[0].mxu0
  %v1152 = vadd.f32 0.0, %v1151
  %v1153 = vpop.f32.mrb[0].mxu0
  %1154 = vmatprep.mubr.bf16.mxu0 0
  %1155 = vmatmul.mubr.bf16.gmra.mrb[0].mxu0 %v880
  %v1156 = vpop.f32.mrb[0].mxu0
  %v1157 = vadd.f32 0.0, %v1156
  %v1158 = vpop.f32.mrb[0].mxu0
  %v1159 = vpop.f32.mrb[0].mxu0
  %v1160 = vadd.f32 0.0, %v1159
  %v1161 = vpop.f32.mrb[0].mxu0
  %1162 = vmatprep.mubr.bf16.mxu0 0
  %1163 = vmatmul.mubr.bf16.gmra.mrb[0].mxu0 %v881
  %v1164 = vpop.f32.mrb[0].mxu0
  %v1165 = vadd.f32 0.0, %v1164
  %v1166 = vpop.f32.mrb[0].mxu0
  %v1167 = vpop.f32.mrb[0].mxu0
  %v1168 = vadd.f32 0.0, %v1167
  %v1169 = vpop.f32.mrb[0].mxu0
  %1170 = vdwg.mxu0
  %v1171 = vmax.f32 %v981, %v984
  %v1172 = vrot.slane %v1171, 4
  %v1173 = vmax.f32 %v1171, %v1172
  %v1174 = vrot.slane %v1173, 2
  %v1175 = vmax.f32 %v1173, %v1174
  %v1176 = vrot.slane %v1175, 1
  %v1177 = vmax.f32 %v1175, %v1176
  %v1178 = vmax.f32 %v989, %v992
  %v1179 = vrot.slane %v1178, 4
  %v1180 = vmax.f32 %v1178, %v1179
  %v1181 = vrot.slane %v1180, 2
  %v1182 = vmax.f32 %v1180, %v1181
  %v1183 = vrot.slane %v1182, 1
  %v1184 = vmax.f32 %v1182, %v1183
  %v1185 = vmax.f32 %v997, %v1000
  %v1186 = vrot.slane %v1185, 4
  %v1187 = vmax.f32 %v1185, %v1186
  %v1188 = vrot.slane %v1187, 2
  %v1189 = vmax.f32 %v1187, %v1188
  %v1190 = vrot.slane %v1189, 1
  %v1191 = vmax.f32 %v1189, %v1190
  %v1192 = vmax.f32 %v1005, %v1008
  %v1193 = vrot.slane %v1192, 4
  %v1194 = vmax.f32 %v1192, %v1193
  %v1195 = vrot.slane %v1194, 2
  %v1196 = vmax.f32 %v1194, %v1195
  %v1197 = vrot.slane %v1196, 1
  %v1198 = vmax.f32 %v1196, %v1197
  %v1199 = vmax.f32 %v1013, %v1016
  %v1200 = vrot.slane %v1199, 4
  %v1201 = vmax.f32 %v1199, %v1200
  %v1202 = vrot.slane %v1201, 2
  %v1203 = vmax.f32 %v1201, %v1202
  %v1204 = vrot.slane %v1203, 1
  %v1205 = vmax.f32 %v1203, %v1204
  %v1206 = vmax.f32 %v1021, %v1024
  %v1207 = vrot.slane %v1206, 4
  %v1208 = vmax.f32 %v1206, %v1207
  %v1209 = vrot.slane %v1208, 2
  %v1210 = vmax.f32 %v1208, %v1209
  %v1211 = vrot.slane %v1210, 1
  %v1212 = vmax.f32 %v1210, %v1211
  %v1213 = vmax.f32 %v1029, %v1032
  %v1214 = vrot.slane %v1213, 4
  %v1215 = vmax.f32 %v1213, %v1214
  %v1216 = vrot.slane %v1215, 2
  %v1217 = vmax.f32 %v1215, %v1216
  %v1218 = vrot.slane %v1217, 1
  %v1219 = vmax.f32 %v1217, %v1218
  %v1220 = vmax.f32 %v1037, %v1040
  %v1221 = vrot.slane %v1220, 4
  %v1222 = vmax.f32 %v1220, %v1221
  %v1223 = vrot.slane %v1222, 2
  %v1224 = vmax.f32 %v1222, %v1223
  %v1225 = vrot.slane %v1224, 1
  %v1226 = vmax.f32 %v1224, %v1225
  %v1227 = vmax.f32 %v1045, %v1048
  %v1228 = vrot.slane %v1227, 4
  %v1229 = vmax.f32 %v1227, %v1228
  %v1230 = vrot.slane %v1229, 2
  %v1231 = vmax.f32 %v1229, %v1230
  %v1232 = vrot.slane %v1231, 1
  %v1233 = vmax.f32 %v1231, %v1232
  %v1234 = vmax.f32 %v1053, %v1056
  %v1235 = vrot.slane %v1234, 4
  %v1236 = vmax.f32 %v1234, %v1235
  %v1237 = vrot.slane %v1236, 2
  %v1238 = vmax.f32 %v1236, %v1237
  %v1239 = vrot.slane %v1238, 1
  %v1240 = vmax.f32 %v1238, %v1239
  %v1241 = vmax.f32 %v1061, %v1064
  %v1242 = vrot.slane %v1241, 4
  %v1243 = vmax.f32 %v1241, %v1242
  %v1244 = vrot.slane %v1243, 2
  %v1245 = vmax.f32 %v1243, %v1244
  %v1246 = vrot.slane %v1245, 1
  %v1247 = vmax.f32 %v1245, %v1246
  %v1248 = vmax.f32 %v1069, %v1072
  %v1249 = vrot.slane %v1248, 4
  %v1250 = vmax.f32 %v1248, %v1249
  %v1251 = vrot.slane %v1250, 2
  %v1252 = vmax.f32 %v1250, %v1251
  %v1253 = vrot.slane %v1252, 1
  %v1254 = vmax.f32 %v1252, %v1253
  %v1255 = vmax.f32 %v1077, %v1080
  %v1256 = vrot.slane %v1255, 4
  %v1257 = vmax.f32 %v1255, %v1256
  %v1258 = vrot.slane %v1257, 2
  %v1259 = vmax.f32 %v1257, %v1258
  %v1260 = vrot.slane %v1259, 1
  %v1261 = vmax.f32 %v1259, %v1260
  %v1262 = vmax.f32 %v1085, %v1088
  %v1263 = vrot.slane %v1262, 4
  %v1264 = vmax.f32 %v1262, %v1263
  %v1265 = vrot.slane %v1264, 2
  %v1266 = vmax.f32 %v1264, %v1265
  %v1267 = vrot.slane %v1266, 1
  %v1268 = vmax.f32 %v1266, %v1267
  %v1269 = vmax.f32 %v1093, %v1096
  %v1270 = vrot.slane %v1269, 4
  %v1271 = vmax.f32 %v1269, %v1270
  %v1272 = vrot.slane %v1271, 2
  %v1273 = vmax.f32 %v1271, %v1272
  %v1274 = vrot.slane %v1273, 1
  %v1275 = vmax.f32 %v1273, %v1274
  %v1276 = vmax.f32 %v1101, %v1104
  %v1277 = vrot.slane %v1276, 4
  %v1278 = vmax.f32 %v1276, %v1277
  %v1279 = vrot.slane %v1278, 2
  %v1280 = vmax.f32 %v1278, %v1279
  %v1281 = vrot.slane %v1280, 1
  %v1282 = vmax.f32 %v1280, %v1281
  %v1283 = vmax.f32 %v1109, %v1112
  %v1284 = vrot.slane %v1283, 4
  %v1285 = vmax.f32 %v1283, %v1284
  %v1286 = vrot.slane %v1285, 2
  %v1287 = vmax.f32 %v1285, %v1286
  %v1288 = vrot.slane %v1287, 1
  %v1289 = vmax.f32 %v1287, %v1288
  %v1290 = vmax.f32 %v1117, %v1120
  %v1291 = vrot.slane %v1290, 4
  %v1292 = vmax.f32 %v1290, %v1291
  %v1293 = vrot.slane %v1292, 2
  %v1294 = vmax.f32 %v1292, %v1293
  %v1295 = vrot.slane %v1294, 1
  %v1296 = vmax.f32 %v1294, %v1295
  %v1297 = vmax.f32 %v1125, %v1128
  %v1298 = vrot.slane %v1297, 4
  %v1299 = vmax.f32 %v1297, %v1298
  %v1300 = vrot.slane %v1299, 2
  %v1301 = vmax.f32 %v1299, %v1300
  %v1302 = vrot.slane %v1301, 1
  %v1303 = vmax.f32 %v1301, %v1302
  %v1304 = vmax.f32 %v1133, %v1136
  %v1305 = vrot.slane %v1304, 4
  %v1306 = vmax.f32 %v1304, %v1305
  %v1307 = vrot.slane %v1306, 2
  %v1308 = vmax.f32 %v1306, %v1307
  %v1309 = vrot.slane %v1308, 1
  %v1310 = vmax.f32 %v1308, %v1309
  %v1311 = vmax.f32 %v1141, %v1144
  %v1312 = vrot.slane %v1311, 4
  %v1313 = vmax.f32 %v1311, %v1312
  %v1314 = vrot.slane %v1313, 2
  %v1315 = vmax.f32 %v1313, %v1314
  %v1316 = vrot.slane %v1315, 1
  %v1317 = vmax.f32 %v1315, %v1316
  %v1318 = vmax.f32 %v1149, %v1152
  %v1319 = vrot.slane %v1318, 4
  %v1320 = vmax.f32 %v1318, %v1319
  %v1321 = vrot.slane %v1320, 2
  %v1322 = vmax.f32 %v1320, %v1321
  %v1323 = vrot.slane %v1322, 1
  %v1324 = vmax.f32 %v1322, %v1323
  %v1325 = vmax.f32 %v1157, %v1160
  %v1326 = vrot.slane %v1325, 4
  %v1327 = vmax.f32 %v1325, %v1326
  %v1328 = vrot.slane %v1327, 2
  %v1329 = vmax.f32 %v1327, %v1328
  %v1330 = vrot.slane %v1329, 1
  %v1331 = vmax.f32 %v1329, %v1330
  %v1332 = vmax.f32 %v1165, %v1168
  %v1333 = vrot.slane %v1332, 4
  %v1334 = vmax.f32 %v1332, %v1333
  %v1335 = vrot.slane %v1334, 2
  %v1336 = vmax.f32 %v1334, %v1335
  %v1337 = vrot.slane %v1336, 1
  %v1338 = vmax.f32 %v1336, %v1337
  %v1339 = vld [vmem:[%s4] sm:$0x1]
  %v1341 = vlaneseq
  %v1342 = vshrl.u32 %v1341, 7
  %v1343 = vsub.s32 0, %v1342
  %v1344 = vrot.slane %v1339, %v1343
  %v1346 = vadd.f32 %v1177, %v1344
  %v1347 = vadd.f32 %v1184, %v1344
  %v1348 = vadd.f32 %v1191, %v1344
  %v1349 = vadd.f32 %v1198, %v1344
  %v1350 = vadd.f32 %v1205, %v1344
  %v1351 = vadd.f32 %v1212, %v1344
  %v1352 = vadd.f32 %v1219, %v1344
  %v1353 = vadd.f32 %v1226, %v1344
  %v1354 = vadd.f32 %v1233, %v1344
  %v1355 = vadd.f32 %v1240, %v1344
  %v1356 = vadd.f32 %v1247, %v1344
  %v1357 = vadd.f32 %v1254, %v1344
  %v1358 = vadd.f32 %v1261, %v1344
  %v1359 = vadd.f32 %v1268, %v1344
  %v1360 = vadd.f32 %v1275, %v1344
  %v1361 = vadd.f32 %v1282, %v1344
  %v1362 = vadd.f32 %v1289, %v1344
  %v1363 = vadd.f32 %v1296, %v1344
  %v1364 = vadd.f32 %v1303, %v1344
  %v1365 = vadd.f32 %v1310, %v1344
  %v1366 = vadd.f32 %v1317, %v1344
  %v1367 = vadd.f32 %v1324, %v1344
  %v1368 = vadd.f32 %v1331, %v1344
  %v1369 = vadd.f32 %v1338, %v1344
  %v1370 = vmax.f32 %v1346, 0.0
  %v1371 = vmax.f32 %v1347, 0.0
  %v1372 = vmax.f32 %v1348, 0.0
  %v1373 = vmax.f32 %v1349, 0.0
  %v1374 = vmax.f32 %v1350, 0.0
  %v1375 = vmax.f32 %v1351, 0.0
  %v1376 = vmax.f32 %v1352, 0.0
  %v1377 = vmax.f32 %v1353, 0.0
  %v1378 = vmax.f32 %v1354, 0.0
  %v1379 = vmax.f32 %v1355, 0.0
  %v1380 = vmax.f32 %v1356, 0.0
  %v1381 = vmax.f32 %v1357, 0.0
  %v1382 = vmax.f32 %v1358, 0.0
  %v1383 = vmax.f32 %v1359, 0.0
  %v1384 = vmax.f32 %v1360, 0.0
  %v1385 = vmax.f32 %v1361, 0.0
  %v1386 = vmax.f32 %v1362, 0.0
  %v1387 = vmax.f32 %v1363, 0.0
  %v1388 = vmax.f32 %v1364, 0.0
  %v1389 = vmax.f32 %v1365, 0.0
  %v1390 = vmax.f32 %v1366, 0.0
  %v1391 = vmax.f32 %v1367, 0.0
  %v1392 = vmax.f32 %v1368, 0.0
  %v1393 = vmax.f32 %v1369, 0.0
  %v1418 = vrot.slane %v1371, 7
  %vm1419 = vcmask 1041409
  %v1420 = vsel %vm1419, %v1418, %v1370
  %v1421 = vrot.slane %v1372, 6
  %vm1422 = vcmask 1042434
  %v1423 = vsel %vm1422, %v1421, %v1420
  %v1424 = vrot.slane %v1373, 5
  %vm1425 = vcmask 1043459
  %v1426 = vsel %vm1425, %v1424, %v1423
  %v1427 = vrot.slane %v1374, 4
  %vm1428 = vcmask 1044484
  %v1429 = vsel %vm1428, %v1427, %v1426
  %v1430 = vrot.slane %v1375, 3
  %vm1431 = vcmask 1045509
  %v1432 = vsel %vm1431, %v1430, %v1429
  %v1433 = vrot.slane %v1376, 2
  %vm1434 = vcmask 1046534
  %v1435 = vsel %vm1434, %v1433, %v1432
  %v1436 = vrot.slane %v1377, 1
  %vm1437 = vcmask 1047559
  %v1438 = vsel %vm1437, %v1436, %v1435
  %v1439 = vrot.slane %v1379, 7
  %v1440 = vsel %vm1419, %v1439, %v1378
  %v1441 = vrot.slane %v1380, 6
  %v1442 = vsel %vm1422, %v1441, %v1440
  %v1443 = vrot.slane %v1381, 5
  %v1444 = vsel %vm1425, %v1443, %v1442
  %v1445 = vrot.slane %v1382, 4
  %v1446 = vsel %vm1428, %v1445, %v1444
  %v1447 = vrot.slane %v1383, 3
  %v1448 = vsel %vm1431, %v1447, %v1446
  %v1449 = vrot.slane %v1384, 2
  %v1450 = vsel %vm1434, %v1449, %v1448
  %v1451 = vrot.slane %v1385, 1
  %v1452 = vsel %vm1437, %v1451, %v1450
  %v1453 = vrot.slane %v1387, 7
  %v1454 = vsel %vm1419, %v1453, %v1386
  %v1455 = vrot.slane %v1388, 6
  %v1456 = vsel %vm1422, %v1455, %v1454
  %v1457 = vrot.slane %v1389, 5
  %v1458 = vsel %vm1425, %v1457, %v1456
  %v1459 = vrot.slane %v1390, 4
  %v1460 = vsel %vm1428, %v1459, %v1458
  %v1461 = vrot.slane %v1391, 3
  %v1462 = vsel %vm1431, %v1461, %v1460
  %v1463 = vrot.slane %v1392, 2
  %v1464 = vsel %vm1434, %v1463, %v1462
  %v1465 = vrot.slane %v1393, 1
  %v1466 = vsel %vm1437, %v1465, %v1464
  %1470 = vst [vmem:[%s5] sm:$0xff] %v1438
  %1471 = vst [vmem:[%s5 + $0x8] sm:$0xff] %v1452
  %1472 = vst [vmem:[%s5 + $0x10] sm:$0xff] %v1466
  // Predicated region
  $region22: #{sim_attention_multi_x_attn_forward.3} parent=0 // pred_check
    _
  $region23: #{sim_attention_multi_x_attn_forward.3} parent=0 // pred_check_branch
    %1474 = sbr.rel (0) target = $region25
  $region24: #{sim_attention_multi_x_attn_forward.3} parent=0 // pred_region
    _
  $region25: #{sim_attention_multi_x_attn_forward.3} parent=0 // pred_fallthru
    _
  // Predicated region
  $region26: #{sim_attention_multi_x_attn_forward.3} parent=0 // pred_check
    _
  $region27: #{sim_attention_multi_x_attn_forward.3} parent=0 // pred_check_branch
    %1476 = sbr.rel (0) target = $region29
  $region28: #{sim_attention_multi_x_attn_forward.3} parent=0 // pred_region
    _
  $region29: #{sim_attention_multi_x_attn_forward.3} parent=0 // pred_fallthru
    _

// kernel: sim_attention_multi_x_attn_forward.5
$region0: #{sim_attention_multi_x_attn_forward.5}
  #allocation0 [shape = 'u32[]', space=smem, size = 0x4, offset = 0x4, fixed_abs, tag = 'smem constant byte address 0x4 - core index']
  #allocation1 [shape = 'u32[144,128]{1,0:T(1,128)}', space=vmem, size = 0x12000, scoped, tag = 'internal scratch']
  %s0 = inlined_call_operand.vmem [shape: f32[2,12,128], index: 0, kind: input, shape index: {}]
  %s1 = inlined_call_operand.vmem [shape: bf16[128,768], index: 1, kind: input, shape index: {}]
  %s2 = inlined_call_operand.vmem [shape: bf16[128,256], index: 2, kind: input, shape index: {}]
  %s3 = inlined_call_operand.vmem [shape: f32[1,256], index: 3, kind: input, shape index: {}]
  %s4 = inlined_call_operand.vmem [shape: bf16[256,256], index: 4, kind: input, shape index: {}]
  %s5 = inlined_call_operand.vmem [shape: f32[1,256], index: 5, kind: input, shape index: {}]
  %s6 = inlined_call_operand.vmem [shape: bf16[128,128], index: 6, kind: input, shape index: {}]
  %s7 = inlined_call_operand.vmem [shape: f32[1,128], index: 7, kind: input, shape index: {}]
  %s8 = inlined_call_operand.vmem [shape: bf16[128,128], index: 8, kind: input, shape index: {}]
  %s9 = inlined_call_operand.vmem [shape: f32[1,128], index: 9, kind: input, shape index: {}]
  %s10 = inlined_call_operand.vmem [shape: f32[2,1,128], index: 10, kind: output, shape index: {}]
  %s11 = sld [smem:[#allocation0]]
  $region73: #{sim_attention_multi_x_attn_forward.5} parent=0
    _
  %s13 = ssub.s32 1, %s11
  %s14 = scalar_select 0, %s13, %s11
  loop: start=0, step=1, limit=4
  $region2: #{sim_attention_multi_x_attn_forward.5} parent=0 // loop_pre_header
    _
  $region3: #{sim_attention_multi_x_attn_forward.5} parent=0 // loop_header
    %s16 = sphi 0, %s20
    %p17 = scmp.ge.s32.totalorder %s16, 4
    %s26 = sphi 0, %s28
    %s29 = sphi 0, %s26
    %s30 = sphi 0, %s29
    %s46 = sphi 0, %s30
    %s50 = sphi 0, %s50
    %s52 = sphi 0, %s50
    %s53 = sphi 0, %s52
    %s67 = sphi 0, %s53
    %s71 = sphi 0, %s71
    %s73 = sphi 0, %s71
    %s74 = sphi 0, %s73
    %s88 = sphi 0, %s74
    %s92 = sphi 0, %s92
    %s94 = sphi 0, %s92
    %s95 = sphi 0, %s94
    %s109 = sphi 0, %s95
    %s113 = sphi 0, %s113
    %s115 = sphi 0, %s113
    %s116 = sphi 0, %s115
    %s130 = sphi 0, %s116
    %s134 = sphi 0, %s134
    %s136 = sphi 0, %s134
    %s137 = sphi 0, %s136
    %s151 = sphi 0, %s137
    %s155 = sphi 0, %s155
    %s157 = sphi 0, %s155
    %s158 = sphi 0, %s157
    %s172 = sphi 0, %s158
    %s176 = sphi 0, %s176
    %s178 = sphi 0, %s176
    %s179 = sphi 0, %s178
    %s193 = sphi 0, %s179
    %s197 = sphi 0, %s197
    %s199 = sphi 0, %s197
    %s200 = sphi 0, %s199
    %s214 = sphi 0, %s200
    %s218 = sphi 0, %s218
    %s220 = sphi 0, %s218
    %s221 = sphi 0, %s220
    %s235 = sphi 0, %s221
    %s241 = sphi 0, %s243
    %s244 = sphi 0, %s241
    %s245 = sphi 0, %s244
    %s261 = sphi 0, %s245
  $region4: #{sim_attention_multi_x_attn_forward.5} parent=0 // loop_header_branch
    %19 = sbr.rel (%p17) target = $region8
  $region5: #{sim_attention_multi_x_attn_forward.5} parent=0 // loop_body
    %s21 = ssub.s32 %s16, 1
    %s22 = ssub.s32 %s16, 2
    %s23 = sadd.s32 %s16, 1
    %s24 = ssub.s32 %s16, %s23
    %p25 = scmp.eq.s32.totalorder %s24, 0
    %s27 = sadd.s32 %s26, 1
    %s28 = scalar_select %p25, %s26, %s27
    %p31 = pneg %p25
    %p32 = scmp.eq.s32.totalorder %s16, 1
    %p33 = por %p31, %p32
    %p34 = scmp.ne.s32.totalorder %s26, %s29
    %p35 = scmp.eq.s32.totalorder %s16, 0
    %p36 = por %p34, %p35
    %p37 = scmp.ne.s32.totalorder %s26, %s29
    %p38 = scmp.eq.s32.totalorder %s21, 1
    %p39 = por %p37, %p38
    %p40 = scmp.ne.s32.totalorder %s29, %s30
    %p41 = scmp.eq.s32.totalorder %s21, 0
    %p42 = por %p40, %p41
    %p43 = scmp.ne.s32.totalorder %s29, %s30
    %p44 = scmp.eq.s32.totalorder %s22, 1
    %p45 = por %p43, %p44
    %p47 = scmp.ne.s32.totalorder %s30, %s46
    %p48 = scmp.eq.s32.totalorder %s22, 0
    %p49 = por %p47, %p48
    %s51 = sadd.s32 %s50, 1
    %p54 = scmp.eq.s32.totalorder %s16, 1
    %p55 = scmp.ne.s32.totalorder %s50, %s52
    %p56 = scmp.eq.s32.totalorder %s16, 0
    %p57 = por %p55, %p56
    %p58 = scmp.ne.s32.totalorder %s50, %s52
    %p59 = scmp.eq.s32.totalorder %s21, 1
    %p60 = por %p58, %p59
    %p61 = scmp.ne.s32.totalorder %s52, %s53
    %p62 = scmp.eq.s32.totalorder %s21, 0
    %p63 = por %p61, %p62
    %p64 = scmp.ne.s32.totalorder %s52, %s53
    %p65 = scmp.eq.s32.totalorder %s22, 1
    %p66 = por %p64, %p65
    %p68 = scmp.ne.s32.totalorder %s53, %s67
    %p69 = scmp.eq.s32.totalorder %s22, 0
    %p70 = por %p68, %p69
    %s72 = sadd.s32 %s71, 1
    %p75 = scmp.eq.s32.totalorder %s16, 1
    %p76 = scmp.ne.s32.totalorder %s71, %s73
    %p77 = scmp.eq.s32.totalorder %s16, 0
    %p78 = por %p76, %p77
    %p79 = scmp.ne.s32.totalorder %s71, %s73
    %p80 = scmp.eq.s32.totalorder %s21, 1
    %p81 = por %p79, %p80
    %p82 = scmp.ne.s32.totalorder %s73, %s74
    %p83 = scmp.eq.s32.totalorder %s21, 0
    %p84 = por %p82, %p83
    %p85 = scmp.ne.s32.totalorder %s73, %s74
    %p86 = scmp.eq.s32.totalorder %s22, 1
    %p87 = por %p85, %p86
    %p89 = scmp.ne.s32.totalorder %s74, %s88
    %p90 = scmp.eq.s32.totalorder %s22, 0
    %p91 = por %p89, %p90
    %s93 = sadd.s32 %s92, 1
    %p96 = scmp.eq.s32.totalorder %s16, 1
    %p97 = scmp.ne.s32.totalorder %s92, %s94
    %p98 = scmp.eq.s32.totalorder %s16, 0
    %p99 = por %p97, %p98
    %p100 = scmp.ne.s32.totalorder %s92, %s94
    %p101 = scmp.eq.s32.totalorder %s21, 1
    %p102 = por %p100, %p101
    %p103 = scmp.ne.s32.totalorder %s94, %s95
    %p104 = scmp.eq.s32.totalorder %s21, 0
    %p105 = por %p103, %p104
    %p106 = scmp.ne.s32.totalorder %s94, %s95
    %p107 = scmp.eq.s32.totalorder %s22, 1
    %p108 = por %p106, %p107
    %p110 = scmp.ne.s32.totalorder %s95, %s109
    %p111 = scmp.eq.s32.totalorder %s22, 0
    %p112 = por %p110, %p111
    %s114 = sadd.s32 %s113, 1
    %p117 = scmp.eq.s32.totalorder %s16, 1
    %p118 = scmp.ne.s32.totalorder %s113, %s115
    %p119 = scmp.eq.s32.totalorder %s16, 0
    %p120 = por %p118, %p119
    %p121 = scmp.ne.s32.totalorder %s113, %s115
    %p122 = scmp.eq.s32.totalorder %s21, 1
    %p123 = por %p121, %p122
    %p124 = scmp.ne.s32.totalorder %s115, %s116
    %p125 = scmp.eq.s32.totalorder %s21, 0
    %p126 = por %p124, %p125
    %p127 = scmp.ne.s32.totalorder %s115, %s116
    %p128 = scmp.eq.s32.totalorder %s22, 1
    %p129 = por %p127, %p128
    %p131 = scmp.ne.s32.totalorder %s116, %s130
    %p132 = scmp.eq.s32.totalorder %s22, 0
    %p133 = por %p131, %p132
    %s135 = sadd.s32 %s134, 1
    %p138 = scmp.eq.s32.totalorder %s16, 1
    %p139 = scmp.ne.s32.totalorder %s134, %s136
    %p140 = scmp.eq.s32.totalorder %s16, 0
    %p141 = por %p139, %p140
    %p142 = scmp.ne.s32.totalorder %s134, %s136
    %p143 = scmp.eq.s32.totalorder %s21, 1
    %p144 = por %p142, %p143
    %p145 = scmp.ne.s32.totalorder %s136, %s137
    %p146 = scmp.eq.s32.totalorder %s21, 0
    %p147 = por %p145, %p146
    %p148 = scmp.ne.s32.totalorder %s136, %s137
    %p149 = scmp.eq.s32.totalorder %s22, 1
    %p150 = por %p148, %p149
    %p152 = scmp.ne.s32.totalorder %s137, %s151
    %p153 = scmp.eq.s32.totalorder %s22, 0
    %p154 = por %p152, %p153
    %s156 = sadd.s32 %s155, 1
    %p159 = scmp.eq.s32.totalorder %s16, 1
    %p160 = scmp.ne.s32.totalorder %s155, %s157
    %p161 = scmp.eq.s32.totalorder %s16, 0
    %p162 = por %p160, %p161
    %p163 = scmp.ne.s32.totalorder %s155, %s157
    %p164 = scmp.eq.s32.totalorder %s21, 1
    %p165 = por %p163, %p164
    %p166 = scmp.ne.s32.totalorder %s157, %s158
    %p167 = scmp.eq.s32.totalorder %s21, 0
    %p168 = por %p166, %p167
    %p169 = scmp.ne.s32.totalorder %s157, %s158
    %p170 = scmp.eq.s32.totalorder %s22, 1
    %p171 = por %p169, %p170
    %p173 = scmp.ne.s32.totalorder %s158, %s172
    %p174 = scmp.eq.s32.totalorder %s22, 0
    %p175 = por %p173, %p174
    %s177 = sadd.s32 %s176, 1
    %p180 = scmp.eq.s32.totalorder %s16, 1
    %p181 = scmp.ne.s32.totalorder %s176, %s178
    %p182 = scmp.eq.s32.totalorder %s16, 0
    %p183 = por %p181, %p182
    %p184 = scmp.ne.s32.totalorder %s176, %s178
    %p185 = scmp.eq.s32.totalorder %s21, 1
    %p186 = por %p184, %p185
    %p187 = scmp.ne.s32.totalorder %s178, %s179
    %p188 = scmp.eq.s32.totalorder %s21, 0
    %p189 = por %p187, %p188
    %p190 = scmp.ne.s32.totalorder %s178, %s179
    %p191 = scmp.eq.s32.totalorder %s22, 1
    %p192 = por %p190, %p191
    %p194 = scmp.ne.s32.totalorder %s179, %s193
    %p195 = scmp.eq.s32.totalorder %s22, 0
    %p196 = por %p194, %p195
    %s198 = sadd.s32 %s197, 1
    %p201 = scmp.eq.s32.totalorder %s16, 1
    %p202 = scmp.ne.s32.totalorder %s197, %s199
    %p203 = scmp.eq.s32.totalorder %s16, 0
    %p204 = por %p202, %p203
    %p205 = scmp.ne.s32.totalorder %s197, %s199
    %p206 = scmp.eq.s32.totalorder %s21, 1
    %p207 = por %p205, %p206
    %p208 = scmp.ne.s32.totalorder %s199, %s200
    %p209 = scmp.eq.s32.totalorder %s21, 0
    %p210 = por %p208, %p209
    %p211 = scmp.ne.s32.totalorder %s199, %s200
    %p212 = scmp.eq.s32.totalorder %s22, 1
    %p213 = por %p211, %p212
    %p215 = scmp.ne.s32.totalorder %s200, %s214
    %p216 = scmp.eq.s32.totalorder %s22, 0
    %p217 = por %p215, %p216
    %s219 = sadd.s32 %s218, 1
    %p222 = scmp.eq.s32.totalorder %s16, 1
    %p223 = scmp.ne.s32.totalorder %s218, %s220
    %p224 = scmp.eq.s32.totalorder %s16, 0
    %p225 = por %p223, %p224
    %p226 = scmp.ne.s32.totalorder %s218, %s220
    %p227 = scmp.eq.s32.totalorder %s21, 1
    %p228 = por %p226, %p227
    %p229 = scmp.ne.s32.totalorder %s220, %s221
    %p230 = scmp.eq.s32.totalorder %s21, 0
    %p231 = por %p229, %p230
    %p232 = scmp.ne.s32.totalorder %s220, %s221
    %p233 = scmp.eq.s32.totalorder %s22, 1
    %p234 = por %p232, %p233
    %p236 = scmp.ne.s32.totalorder %s221, %s235
    %p237 = scmp.eq.s32.totalorder %s22, 0
    %p238 = por %p236, %p237
    %s239 = ssub.s32 %s16, %s23
    %p240 = scmp.eq.s32.totalorder %s239, 0
    %s242 = sadd.s32 %s241, 1
    %s243 = scalar_select %p240, %s241, %s242
    %p246 = pneg %p240
    %p247 = scmp.eq.s32.totalorder %s16, 1
    %p248 = por %p246, %p247
    %p249 = scmp.ne.s32.totalorder %s241, %s244
    %p250 = scmp.eq.s32.totalorder %s16, 0
    %p251 = por %p249, %p250
    %p252 = scmp.ne.s32.totalorder %s241, %s244
    %p253 = scmp.eq.s32.totalorder %s21, 1
    %p254 = por %p252, %p253
    %p255 = scmp.ne.s32.totalorder %s244, %s245
    %p256 = scmp.eq.s32.totalorder %s21, 0
    %p257 = por %p255, %p256
    %p258 = scmp.ne.s32.totalorder %s244, %s245
    %p259 = scmp.eq.s32.totalorder %s22, 1
    %p260 = por %p258, %p259
    %p262 = scmp.ne.s32.totalorder %s245, %s261
    %p263 = scmp.eq.s32.totalorder %s22, 0
    %p264 = por %p262, %p263
    %p265 = scmp.le.s32.totalorder 1, %s16
    %p266 = scmp.lt.s32.totalorder %s16, 3
    %p267 = pnand %p265, %p266
    %p268 = pneg %p267
    // Predicated region
    $region9: #{sim_attention_multi_x_attn_forward.5} parent=5 // pred_check
      _
    $region10: #{sim_attention_multi_x_attn_forward.5} parent=5 // pred_check_branch
      %270 = sbr.rel (%p267) target = $region12
    $region11: #{sim_attention_multi_x_attn_forward.5} parent=5 // pred_region
      %s271 = ssub.s32 %s16, 1
      // Predicated region
      $region13: #{sim_attention_multi_x_attn_forward.5} parent=11 // pred_check
        %p272 = pneg %p63
      $region14: #{sim_attention_multi_x_attn_forward.5} parent=11 // pred_check_branch
        %274 = sbr.rel (%p272) target = $region16
      $region15: #{sim_attention_multi_x_attn_forward.5} parent=11 // pred_region
        _
      $region16: #{sim_attention_multi_x_attn_forward.5} parent=11 // pred_fallthru
        _
      // Predicated region
      $region17: #{sim_attention_multi_x_attn_forward.5} parent=11 // pred_check
        %p275 = pneg %p84
      $region18: #{sim_attention_multi_x_attn_forward.5} parent=11 // pred_check_branch
        %277 = sbr.rel (%p275) target = $region20
      $region19: #{sim_attention_multi_x_attn_forward.5} parent=11 // pred_region
        _
      $region20: #{sim_attention_multi_x_attn_forward.5} parent=11 // pred_fallthru
        _
      // Predicated region
      $region21: #{sim_attention_multi_x_attn_forward.5} parent=11 // pred_check
        %p278 = pneg %p105
      $region22: #{sim_attention_multi_x_attn_forward.5} parent=11 // pred_check_branch
        %280 = sbr.rel (%p278) target = $region24
      $region23: #{sim_attention_multi_x_attn_forward.5} parent=11 // pred_region
        _
      $region24: #{sim_attention_multi_x_attn_forward.5} parent=11 // pred_fallthru
        _
      // Predicated region
      $region25: #{sim_attention_multi_x_attn_forward.5} parent=11 // pred_check
        %p281 = pneg %p126
      $region26: #{sim_attention_multi_x_attn_forward.5} parent=11 // pred_check_branch
        %283 = sbr.rel (%p281) target = $region28
      $region27: #{sim_attention_multi_x_attn_forward.5} parent=11 // pred_region
        _
      $region28: #{sim_attention_multi_x_attn_forward.5} parent=11 // pred_fallthru
        _
      // Predicated region
      $region29: #{sim_attention_multi_x_attn_forward.5} parent=11 // pred_check
        %p284 = pneg %p147
      $region30: #{sim_attention_multi_x_attn_forward.5} parent=11 // pred_check_branch
        %286 = sbr.rel (%p284) target = $region32
      $region31: #{sim_attention_multi_x_attn_forward.5} parent=11 // pred_region
        _
      $region32: #{sim_attention_multi_x_attn_forward.5} parent=11 // pred_fallthru
        _
      // Predicated region
      $region33: #{sim_attention_multi_x_attn_forward.5} parent=11 // pred_check
        %p287 = pneg %p168
      $region34: #{sim_attention_multi_x_attn_forward.5} parent=11 // pred_check_branch
        %289 = sbr.rel (%p287) target = $region36
      $region35: #{sim_attention_multi_x_attn_forward.5} parent=11 // pred_region
        _
      $region36: #{sim_attention_multi_x_attn_forward.5} parent=11 // pred_fallthru
        _
      // Predicated region
      $region37: #{sim_attention_multi_x_attn_forward.5} parent=11 // pred_check
        %p290 = pneg %p189
      $region38: #{sim_attention_multi_x_attn_forward.5} parent=11 // pred_check_branch
        %292 = sbr.rel (%p290) target = $region40
      $region39: #{sim_attention_multi_x_attn_forward.5} parent=11 // pred_region
        _
      $region40: #{sim_attention_multi_x_attn_forward.5} parent=11 // pred_fallthru
        _
      // Predicated region
      $region41: #{sim_attention_multi_x_attn_forward.5} parent=11 // pred_check
        %p293 = pneg %p210
      $region42: #{sim_attention_multi_x_attn_forward.5} parent=11 // pred_check_branch
        %295 = sbr.rel (%p293) target = $region44
      $region43: #{sim_attention_multi_x_attn_forward.5} parent=11 // pred_region
        _
      $region44: #{sim_attention_multi_x_attn_forward.5} parent=11 // pred_fallthru
        _
      // Predicated region
      $region45: #{sim_attention_multi_x_attn_forward.5} parent=11 // pred_check
        %p296 = pneg %p231
      $region46: #{sim_attention_multi_x_attn_forward.5} parent=11 // pred_check_branch
        %298 = sbr.rel (%p296) target = $region48
      $region47: #{sim_attention_multi_x_attn_forward.5} parent=11 // pred_region
        _
      $region48: #{sim_attention_multi_x_attn_forward.5} parent=11 // pred_fallthru
        _
    $region12: #{sim_attention_multi_x_attn_forward.5} parent=5 // pred_fallthru
      _
    %p299 = scmp.lt.s32.totalorder %s16, 2
    // Predicated region
    $region49: #{sim_attention_multi_x_attn_forward.5} parent=5 // pred_check
      %p300 = pneg %p299
    $region50: #{sim_attention_multi_x_attn_forward.5} parent=5 // pred_check_branch
      %302 = sbr.rel (%p300) target = $region52
    $region51: #{sim_attention_multi_x_attn_forward.5} parent=5 // pred_region
      // Predicated region
      $region53: #{sim_attention_multi_x_attn_forward.5} parent=51 // pred_check
        %p303 = pneg %p36
      $region54: #{sim_attention_multi_x_attn_forward.5} parent=51 // pred_check_branch
        %305 = sbr.rel (%p303) target = $region56
      $region55: #{sim_attention_multi_x_attn_forward.5} parent=51 // pred_region
        %p306 = scmp.lt.s32.totalorder %s16, 1
        %s307 = scalar_select %p306, %s16, 1
        %s308 = smul.addr %s307, 2
        %s309 = smul.addr %s308, 8
        %s310 = scalar_lea.vmem %s0, %s309
      $region56: #{sim_attention_multi_x_attn_forward.5} parent=51 // pred_fallthru
        _
    $region52: #{sim_attention_multi_x_attn_forward.5} parent=5 // pred_fallthru
      _
    %p311 = scmp.le.s32.totalorder 1, %s16
    %p312 = scmp.lt.s32.totalorder %s16, 3
    %p313 = pnand %p311, %p312
    %p314 = pneg %p313
    // Predicated region
    $region57: #{sim_attention_multi_x_attn_forward.5} parent=5 // pred_check
      _
    $region58: #{sim_attention_multi_x_attn_forward.5} parent=5 // pred_check_branch
      %316 = sbr.rel (%p313) target = $region60
    $region59: #{sim_attention_multi_x_attn_forward.5} parent=5 // pred_region
      %s317 = ssub.s32 %s16, 1
      %p318 = scmp.lt.s32.totalorder %s21, 1
      %s319 = scalar_select %p318, %s21, 1
      %s320 = smul.addr %s319, 2
      %s321 = smul.addr %s320, 8
      %s322 = scalar_lea.vmem %s0, %s321
      %p323 = pneg %p42
      %p324 = pneg %p39
      %p325 = pneg %p63
      %p326 = pneg %p60
      %p327 = pneg %p84
      %p328 = pneg %p81
      %p329 = pneg %p105
      %p330 = pneg %p102
      %p331 = pneg %p126
      %p332 = pneg %p123
      %p333 = pneg %p147
      %p334 = pneg %p144
      %p335 = pneg %p168
      %p336 = pneg %p165
      %p337 = pneg %p189
      %p338 = pneg %p186
      %p339 = pneg %p210
      %p340 = pneg %p207
      %p341 = pneg %p231
      %p342 = pneg %p228
      %p343 = pneg %p257
      %p344 = pneg %p254
      %p345 = scmp.lt.s32.totalorder %s21, 1
      %s346 = scalar_select %p345, %s21, 1
      %s347 = scalar_lea.vmem %s10, %s346
      %p348 = scmp.lt.s32.totalorder %s21, 1
      %s349 = scalar_select %p348, %s21, 1
      %s350 = smul.addr %s349, 2
      %s351 = smul.addr %s350, 8
      %s352 = scalar_lea.vmem %s0, %s351
      %p353 = scmp.lt.s32.totalorder %s21, 1
      %s354 = scalar_select %p353, %s21, 1
      %s355 = scalar_lea.vmem %s10, %s354
      %v357 = vld [vmem:[%s352] sm:$0xff]
      %v358 = vld [vmem:[%s352 + $0x8] sm:$0xf]
      %v359 = vpack.c.bf16 %v358, %v357
      %v360 = vld [vmem:[%s1] sm:$0xff]
      %v361 = vld [vmem:[%s1 + $0x8] sm:$0xff]
      %v362 = vld [vmem:[%s1 + $0x10] sm:$0xff]
      %v363 = vld [vmem:[%s1 + $0x18] sm:$0xff]
      %v364 = vld [vmem:[%s1 + $0x20] sm:$0xff]
      %v365 = vld [vmem:[%s1 + $0x28] sm:$0xff]
      %v366 = vld [vmem:[%s1 + $0x30] sm:$0xff]
      %v367 = vld [vmem:[%s1 + $0x38] sm:$0xff]
      %v368 = vld [vmem:[%s1 + $0x40] sm:$0xff]
      %v369 = vld [vmem:[%s1 + $0x48] sm:$0xff]
      %v370 = vld [vmem:[%s1 + $0x50] sm:$0xff]
      %v371 = vld [vmem:[%s1 + $0x58] sm:$0xff]
      %v372 = vld [vmem:[%s1 + $0x60] sm:$0xff]
      %v373 = vld [vmem:[%s1 + $0x68] sm:$0xff]
      %v374 = vld [vmem:[%s1 + $0x70] sm:$0xff]
      %v375 = vld [vmem:[%s1 + $0x78] sm:$0xff]
      %v376 = vld [vmem:[%s1 + $0x80] sm:$0xff]
      %v377 = vld [vmem:[%s1 + $0x88] sm:$0xff]
      %v378 = vld [vmem:[%s1 + $0x90] sm:$0xff]
      %v379 = vld [vmem:[%s1 + $0x98] sm:$0xff]
      %v380 = vld [vmem:[%s1 + $0xa0] sm:$0xff]
      %v381 = vld [vmem:[%s1 + $0xa8] sm:$0xff]
      %v382 = vld [vmem:[%s1 + $0xb0] sm:$0xff]
      %v383 = vld [vmem:[%s1 + $0xb8] sm:$0xff]
      %v384 = vld [vmem:[%s1 + $0xc0] sm:$0xff]
      %v385 = vld [vmem:[%s1 + $0xc8] sm:$0xff]
      %v386 = vld [vmem:[%s1 + $0xd0] sm:$0xff]
      %v387 = vld [vmem:[%s1 + $0xd8] sm:$0xff]
      %v388 = vld [vmem:[%s1 + $0xe0] sm:$0xff]
      %v389 = vld [vmem:[%s1 + $0xe8] sm:$0xff]
      %v390 = vld [vmem:[%s1 + $0xf0] sm:$0xff]
      %v391 = vld [vmem:[%s1 + $0xf8] sm:$0xff]
      %v392 = vld [vmem:[%s1 + $0x100] sm:$0xff]
      %v393 = vld [vmem:[%s1 + $0x108] sm:$0xff]
      %v394 = vld [vmem:[%s1 + $0x110] sm:$0xff]
      %v395 = vld [vmem:[%s1 + $0x118] sm:$0xff]
      %v396 = vld [vmem:[%s1 + $0x120] sm:$0xff]
      %v397 = vld [vmem:[%s1 + $0x128] sm:$0xff]
      %v398 = vld [vmem:[%s1 + $0x130] sm:$0xff]
      %v399 = vld [vmem:[%s1 + $0x138] sm:$0xff]
      %v400 = vld [vmem:[%s1 + $0x140] sm:$0xff]
      %v401 = vld [vmem:[%s1 + $0x148] sm:$0xff]
      %v402 = vld [vmem:[%s1 + $0x150] sm:$0xff]
      %v403 = vld [vmem:[%s1 + $0x158] sm:$0xff]
      %v404 = vld [vmem:[%s1 + $0x160] sm:$0xff]
      %v405 = vld [vmem:[%s1 + $0x168] sm:$0xff]
      %v406 = vld [vmem:[%s1 + $0x170] sm:$0xff]
      %v407 = vld [vmem:[%s1 + $0x178] sm:$0xff]
      %v456 = vunpack.c.l.b16 %v360
      %v457 = vunpack.c.h.b16 %v360
      %v458 = vunpack.c.l.b16 %v361
      %v459 = vunpack.c.h.b16 %v361
      %v460 = vunpack.c.l.b16 %v362
      %v461 = vunpack.c.h.b16 %v362
      %v462 = vunpack.c.l.b16 %v363
      %v463 = vunpack.c.h.b16 %v363
      %v464 = vunpack.c.l.b16 %v364
      %v465 = vunpack.c.h.b16 %v364
      %v466 = vunpack.c.l.b16 %v365
      %v467 = vunpack.c.h.b16 %v365
      %v468 = vunpack.c.l.b16 %v366
      %v469 = vunpack.c.h.b16 %v366
      %v470 = vunpack.c.l.b16 %v367
      %v471 = vunpack.c.h.b16 %v367
      %v472 = vunpack.c.l.b16 %v368
      %v473 = vunpack.c.h.b16 %v368
      %v474 = vunpack.c.l.b16 %v369
      %v475 = vunpack.c.h.b16 %v369
      %v476 = vunpack.c.l.b16 %v370
      %v477 = vunpack.c.h.b16 %v370
      %v478 = vunpack.c.l.b16 %v371
      %v479 = vunpack.c.h.b16 %v371
      %v480 = vunpack.c.l.b16 %v372
      %v481 = vunpack.c.h.b16 %v372
      %v482 = vunpack.c.l.b16 %v373
      %v483 = vunpack.c.h.b16 %v373
      %v484 = vunpack.c.l.b16 %v374
      %v485 = vunpack.c.h.b16 %v374
      %v486 = vunpack.c.l.b16 %v375
      %v487 = vunpack.c.h.b16 %v375
      %v488 = vunpack.c.l.b16 %v376
      %v489 = vunpack.c.h.b16 %v376
      %v490 = vunpack.c.l.b16 %v377
      %v491 = vunpack.c.h.b16 %v377
      %v492 = vunpack.c.l.b16 %v378
      %v493 = vunpack.c.h.b16 %v378
      %v494 = vunpack.c.l.b16 %v379
      %v495 = vunpack.c.h.b16 %v379
      %v496 = vunpack.c.l.b16 %v380
      %v497 = vunpack.c.h.b16 %v380
      %v498 = vunpack.c.l.b16 %v381
      %v499 = vunpack.c.h.b16 %v381
      %v500 = vunpack.c.l.b16 %v382
      %v501 = vunpack.c.h.b16 %v382
      %v502 = vunpack.c.l.b16 %v383
      %v503 = vunpack.c.h.b16 %v383
      %v504 = vunpack.c.l.b16 %v384
      %v505 = vunpack.c.h.b16 %v384
      %v506 = vunpack.c.l.b16 %v385
      %v507 = vunpack.c.h.b16 %v385
      %v508 = vunpack.c.l.b16 %v386
      %v509 = vunpack.c.h.b16 %v386
      %v510 = vunpack.c.l.b16 %v387
      %v511 = vunpack.c.h.b16 %v387
      %v512 = vunpack.c.l.b16 %v388
      %v513 = vunpack.c.h.b16 %v388
      %v514 = vunpack.c.l.b16 %v389
      %v515 = vunpack.c.h.b16 %v389
      %v516 = vunpack.c.l.b16 %v390
      %v517 = vunpack.c.h.b16 %v390
      %v518 = vunpack.c.l.b16 %v391
      %v519 = vunpack.c.h.b16 %v391
      %v520 = vunpack.c.l.b16 %v392
      %v521 = vunpack.c.h.b16 %v392
      %v522 = vunpack.c.l.b16 %v393
      %v523 = vunpack.c.h.b16 %v393
      %v524 = vunpack.c.l.b16 %v394
      %v525 = vunpack.c.h.b16 %v394
      %v526 = vunpack.c.l.b16 %v395
      %v527 = vunpack.c.h.b16 %v395
      %v528 = vunpack.c.l.b16 %v396
      %v529 = vunpack.c.h.b16 %v396
      %v530 = vunpack.c.l.b16 %v397
      %v531 = vunpack.c.h.b16 %v397
      %v532 = vunpack.c.l.b16 %v398
      %v533 = vunpack.c.h.b16 %v398
      %v534 = vunpack.c.l.b16 %v399
      %v535 = vunpack.c.h.b16 %v399
      %v536 = vunpack.c.l.b16 %v400
      %v537 = vunpack.c.h.b16 %v400
      %v538 = vunpack.c.l.b16 %v401
      %v539 = vunpack.c.h.b16 %v401
      %v540 = vunpack.c.l.b16 %v402
      %v541 = vunpack.c.h.b16 %v402
      %v542 = vunpack.c.l.b16 %v403
      %v543 = vunpack.c.h.b16 %v403
      %v544 = vunpack.c.l.b16 %v404
      %v545 = vunpack.c.h.b16 %v404
      %v546 = vunpack.c.l.b16 %v405
      %v547 = vunpack.c.h.b16 %v405
      %v548 = vunpack.c.l.b16 %v406
      %v549 = vunpack.c.h.b16 %v406
      %v550 = vunpack.c.l.b16 %v407
      %v551 = vunpack.c.h.b16 %v407
      %v552 = vpack.c.b16 %v462, %v456
      %v553 = vpack.c.b16 %v463, %v457
      %v554 = vpack.c.b16 %v464, %v458
      %v555 = vpack.c.b16 %v465, %v459
      %v556 = vpack.c.b16 %v466, %v460
      %v557 = vpack.c.b16 %v467, %v461
      %v558 = vpack.c.b16 %v474, %v468
      %v559 = vpack.c.b16 %v475, %v469
      %v560 = vpack.c.b16 %v476, %v470
      %v561 = vpack.c.b16 %v477, %v471
      %v562 = vpack.c.b16 %v478, %v472
      %v563 = vpack.c.b16 %v479, %v473
      %v564 = vpack.c.b16 %v486, %v480
      %v565 = vpack.c.b16 %v487, %v481
      %v566 = vpack.c.b16 %v488, %v482
      %v567 = vpack.c.b16 %v489, %v483
      %v568 = vpack.c.b16 %v490, %v484
      %v569 = vpack.c.b16 %v491, %v485
      %v570 = vpack.c.b16 %v498, %v492
      %v571 = vpack.c.b16 %v499, %v493
      %v572 = vpack.c.b16 %v500, %v494
      %v573 = vpack.c.b16 %v501, %v495
      %v574 = vpack.c.b16 %v502, %v496
      %v575 = vpack.c.b16 %v503, %v497
      %v576 = vpack.c.b16 %v510, %v504
      %v577 = vpack.c.b16 %v511, %v505
      %v578 = vpack.c.b16 %v512, %v506
      %v579 = vpack.c.b16 %v513, %v507
      %v580 = vpack.c.b16 %v514, %v508
      %v581 = vpack.c.b16 %v515, %v509
      %v582 = vpack.c.b16 %v522, %v516
      %v583 = vpack.c.b16 %v523, %v517
      %v584 = vpack.c.b16 %v524, %v518
      %v585 = vpack.c.b16 %v525, %v519
      %v586 = vpack.c.b16 %v526, %v520
      %v587 = vpack.c.b16 %v527, %v521
      %v588 = vpack.c.b16 %v534, %v528
      %v589 = vpack.c.b16 %v535, %v529
      %v590 = vpack.c.b16 %v536, %v530
      %v591 = vpack.c.b16 %v537, %v531
      %v592 = vpack.c.b16 %v538, %v532
      %v593 = vpack.c.b16 %v539, %v533
      %v594 = vpack.c.b16 %v546, %v540
      %v595 = vpack.c.b16 %v547, %v541
      %v596 = vpack.c.b16 %v548, %v542
      %v597 = vpack.c.b16 %v549, %v543
      %v598 = vpack.c.b16 %v550, %v544
      %v599 = vpack.c.b16 %v551, %v545
      %648 = vmatprep.subr.bf16.mxu0 %v553
      %649 = vmatpush1.bf16.msra.mxu0 %v552
      %650 = vmatprep.subr.bf16.mxu0 %v559
      %651 = vmatpush1.bf16.msra.mxu0 %v558
      %652 = vmatprep.subr.bf16.mxu0 %v565
      %653 = vmatpush1.bf16.msra.mxu0 %v564
      %654 = vmatprep.subr.bf16.mxu0 %v571
      %655 = vmatpush1.bf16.msra.mxu0 %v570
      %656 = vmatprep.subr.bf16.mxu0 %v577
      %657 = vmatpush1.bf16.msra.mxu0 %v576
      %658 = vmatprep.subr.bf16.mxu0 %v583
      %659 = vmatpush1.bf16.msra.mxu0 %v582
      %660 = vmatprep.subr.bf16.mxu0 %v589
      %661 = vmatpush1.bf16.msra.mxu0 %v588
      %662 = vmatprep.subr.bf16.mxu0 %v595
      %663 = vmatpush1.bf16.msra.mxu0 %v594
      %664 = vmatprep.subr.bf16.mxu0 0
      %665 = vmatpush1.bf16.msra.mxu0 0
      %666 = vmatprep.subr.bf16.mxu0 0
      %667 = vmatpush1.bf16.msra.mxu0 0
      %668 = vmatprep.subr.bf16.mxu0 0
      %669 = vmatpush1.bf16.msra.mxu0 0
      %670 = vmatprep.subr.bf16.mxu0 0
      %671 = vmatpush1.bf16.msra.mxu0 0
      %672 = vmatprep.subr.bf16.mxu0 0
      %673 = vmatpush1.bf16.msra.mxu0 0
      %674 = vmatprep.subr.bf16.mxu0 0
      %675 = vmatpush1.bf16.msra.mxu0 0
      %676 = vmatprep.subr.bf16.mxu0 0
      %677 = vmatpush1.bf16.msra.mxu0 0
      %678 = vmatprep.subr.bf16.mxu0 0
      %679 = vmatpush1.bf16.msra.mxu0 0
      %680 = vmatprep.mubr.bf16.mxu0 0
      %681 = vmatmul.mubr.bf16.gmra.mrb[0].mxu0 %v359
      %v682 = vpop.f32.mrb[0].mxu0
      %v683 = vadd.f32 0.0, %v682
      %v684 = vpop.f32.mrb[0].mxu0
      %v685 = vadd.f32 0.0, %v684
      %v686 = vpop.f32.mrb[0].mxu0
      %v687 = vpop.f32.mrb[0].mxu0
      %v688 = vadd.f32 0.0, %v687
      %689 = vdwg.mxu0
      %690 = vmatprep.subr.bf16.mxu0 %v555
      %691 = vmatpush1.bf16.msra.mxu0 %v554
      %692 = vmatprep.subr.bf16.mxu0 %v561
      %693 = vmatpush1.bf16.msra.mxu0 %v560
      %694 = vmatprep.subr.bf16.mxu0 %v567
      %695 = vmatpush1.bf16.msra.mxu0 %v566
      %696 = vmatprep.subr.bf16.mxu0 %v573
      %697 = vmatpush1.bf16.msra.mxu0 %v572
      %698 = vmatprep.subr.bf16.mxu0 %v579
      %699 = vmatpush1.bf16.msra.mxu0 %v578
      %700 = vmatprep.subr.bf16.mxu0 %v585
      %701 = vmatpush1.bf16.msra.mxu0 %v584
      %702 = vmatprep.subr.bf16.mxu0 %v591
      %703 = vmatpush1.bf16.msra.mxu0 %v590
      %704 = vmatprep.subr.bf16.mxu0 %v597
      %705 = vmatpush1.bf16.msra.mxu0 %v596
      %706 = vmatprep.subr.bf16.mxu0 0
      %707 = vmatpush1.bf16.msra.mxu0 0
      %708 = vmatprep.subr.bf16.mxu0 0
      %709 = vmatpush1.bf16.msra.mxu0 0
      %710 = vmatprep.subr.bf16.mxu0 0
      %711 = vmatpush1.bf16.msra.mxu0 0
      %712 = vmatprep.subr.bf16.mxu0 0
      %713 = vmatpush1.bf16.msra.mxu0 0
      %714 = vmatprep.subr.bf16.mxu0 0
      %715 = vmatpush1.bf16.msra.mxu0 0
      %716 = vmatprep.subr.bf16.mxu0 0
      %717 = vmatpush1.bf16.msra.mxu0 0
      %718 = vmatprep.subr.bf16.mxu0 0
      %719 = vmatpush1.bf16.msra.mxu0 0
      %720 = vmatprep.subr.bf16.mxu0 0
      %721 = vmatpush1.bf16.msra.mxu0 0
      %722 = vmatprep.mubr.bf16.mxu0 0
      %723 = vmatmul.mubr.bf16.gmra.mrb[0].mxu0 %v359
      %v724 = vpop.f32.mrb[0].mxu0
      %v725 = vadd.f32 0.0, %v724
      %v726 = vpop.f32.mrb[0].mxu0
      %v727 = vadd.f32 0.0, %v726
      %v728 = vpop.f32.mrb[0].mxu0
      %v729 = vadd.f32 0.0, %v728
      %v730 = vpop.f32.mrb[0].mxu0
      %731 = vdwg.mxu0
      %732 = vmatprep.subr.bf16.mxu0 %v557
      %733 = vmatpush1.bf16.msra.mxu0 %v556
      %734 = vmatprep.subr.bf16.mxu0 %v563
      %735 = vmatpush1.bf16.msra.mxu0 %v562
      %736 = vmatprep.subr.bf16.mxu0 %v569
      %737 = vmatpush1.bf16.msra.mxu0 %v568
      %738 = vmatprep.subr.bf16.mxu0 %v575
      %739 = vmatpush1.bf16.msra.mxu0 %v574
      %740 = vmatprep.subr.bf16.mxu0 %v581
      %741 = vmatpush1.bf16.msra.mxu0 %v580
      %742 = vmatprep.subr.bf16.mxu0 %v587
      %743 = vmatpush1.bf16.msra.mxu0 %v586
      %744 = vmatprep.subr.bf16.mxu0 %v593
      %745 = vmatpush1.bf16.msra.mxu0 %v592
      %746 = vmatprep.subr.bf16.mxu0 %v599
      %747 = vmatpush1.bf16.msra.mxu0 %v598
      %748 = vmatprep.subr.bf16.mxu0 0
      %749 = vmatpush1.bf16.msra.mxu0 0
      %750 = vmatprep.subr.bf16.mxu0 0
      %751 = vmatpush1.bf16.msra.mxu0 0
      %752 = vmatprep.subr.bf16.mxu0 0
      %753 = vmatpush1.bf16.msra.mxu0 0
      %754 = vmatprep.subr.bf16.mxu0 0
      %755 = vmatpush1.bf16.msra.mxu0 0
      %756 = vmatprep.subr.bf16.mxu0 0
      %757 = vmatpush1.bf16.msra.mxu0 0
      %758 = vmatprep.subr.bf16.mxu0 0
      %759 = vmatpush1.bf16.msra.mxu0 0
      %760 = vmatprep.subr.bf16.mxu0 0
      %761 = vmatpush1.bf16.msra.mxu0 0
      %762 = vmatprep.subr.bf16.mxu0 0
      %763 = vmatpush1.bf16.msra.mxu0 0
      %764 = vmatprep.mubr.bf16.mxu0 0
      %765 = vmatmul.mubr.bf16.gmra.mrb[0].mxu0 %v359
      %v766 = vpop.f32.mrb[0].mxu0
      %v767 = vadd.f32 0.0, %v766
      %v768 = vpop.f32.mrb[0].mxu0
      %v769 = vadd.f32 0.0, %v768
      %v770 = vpop.f32.mrb[0].mxu0
      %v771 = vadd.f32 0.0, %v770
      %v772 = vpop.f32.mrb[0].mxu0
      %v773 = vadd.f32 0.0, %v772
      %774 = vdwg.mxu0
      %v775 = vpack.c.bf16 %v683, %v683
      %v776 = vpack.c.bf16 %v688, %v685
      %v778 = vrot.slane %v776, 1
      %780 = vmatprep.subr.bf16.mxu0 0
      %781 = vmatpush1.bf16.xpose.msra.mxu0 %v778
      %782 = vmatprep.subr.bf16.mxu0 0
      %783 = vmatpush1.bf16.xpose.msra.mxu0 0
      %784 = vmatprep.subr.bf16.mxu0 0
      %785 = vmatpush1.bf16.xpose.msra.mxu0 0
      %786 = vmatprep.subr.bf16.mxu0 0
      %787 = vmatpush1.bf16.xpose.msra.mxu0 0
      %788 = vmatprep.subr.bf16.mxu0 0
      %789 = vmatpush1.bf16.xpose.msra.mxu0 0
      %790 = vmatprep.subr.bf16.mxu0 0
      %791 = vmatpush1.bf16.xpose.msra.mxu0 0
      %792 = vmatprep.subr.bf16.mxu0 0
      %793 = vmatpush1.bf16.xpose.msra.mxu0 0
      %794 = vmatprep.subr.bf16.mxu0 0
      %795 = vmatpush1.bf16.xpose.msra.mxu0 0
      %796 = vmatprep.subr.bf16.mxu0 0
      %797 = vmatpush1.bf16.xpose.msra.mxu0 0
      %798 = vmatprep.subr.bf16.mxu0 0
      %799 = vmatpush1.bf16.xpose.msra.mxu0 0
      %800 = vmatprep.subr.bf16.mxu0 0
      %801 = vmatpush1.bf16.xpose.msra.mxu0 0
      %802 = vmatprep.subr.bf16.mxu0 0
      %803 = vmatpush1.bf16.xpose.msra.mxu0 0
      %804 = vmatprep.subr.bf16.mxu0 0
      %805 = vmatpush1.bf16.xpose.msra.mxu0 0
      %806 = vmatprep.subr.bf16.mxu0 0
      %807 = vmatpush1.bf16.xpose.msra.mxu0 0
      %808 = vmatprep.subr.bf16.mxu0 0
      %809 = vmatpush1.bf16.xpose.msra.mxu0 0
      %810 = vmatprep.subr.bf16.mxu0 0
      %811 = vmatpush1.bf16.xpose.msra.mxu0 0
      %812 = vmatprep.mubr.bf16.mxu0 0
      %813 = vmatmul.mubr.bf16.gmra.mrb[0].mxu0 %v775
      %v814 = vpop.f32.mrb[0].mxu0
      %v815 = vadd.f32 0.0, %v814
      %v816 = vpop.f32.mrb[0].mxu0
      %v817 = vpop.f32.mrb[0].mxu0
      %v818 = vpop.f32.mrb[0].mxu0
      %819 = vdwg.mxu0
      %v820 = vmul.f32 %v815, 0.088388346
      %vm821 = vcmask 74752
      %v822 = vsel %vm821, %v820, -inf
      %823 = vmax.xlane.f32.xlu0 %v822
      %v824 = vpop.xlane.xlu0 %823
      %v825 = vsub.f32 %v820, %v824
      %v826 = vmul.f32 %v825, 1.442695
      %v827 = vpow.pop %v826
      %v828 = vsel %vm821, %v827, 0.0
      %829 = vadd.xlane.f32.xlu0 %v828
      %v830 = vpop.xlane.xlu0 %829
      %v831 = vrcp.pop %v830
      %v832 = vmul.f32 %v827, %v831
      %v833 = vpack.c.bf16 %v832, %v832
      %v834 = vpack.c.bf16 %v729, %v725
      %v836 = vrot.slane %v834, 1
      %vm837 = vcmask 80896
      %v839 = vsel %vm837, %v833, 0
      %vm841 = vcmask 1044480
      %v843 = vsel %vm841, %v836, 0
      %845 = vmatprep.subr.bf16.mxu0 0
      %846 = vmatpush1.bf16.msra.mxu0 %v843
      %847 = vmatprep.subr.bf16.mxu0 0
      %848 = vmatpush1.bf16.msra.mxu0 0
      %849 = vmatprep.subr.bf16.mxu0 0
      %850 = vmatpush1.bf16.msra.mxu0 0
      %851 = vmatprep.subr.bf16.mxu0 0
      %852 = vmatpush1.bf16.msra.mxu0 0
      %853 = vmatprep.subr.bf16.mxu0 0
      %854 = vmatpush1.bf16.msra.mxu0 0
      %855 = vmatprep.subr.bf16.mxu0 0
      %856 = vmatpush1.bf16.msra.mxu0 0
      %857 = vmatprep.subr.bf16.mxu0 0
      %858 = vmatpush1.bf16.msra.mxu0 0
      %859 = vmatprep.subr.bf16.mxu0 0
      %860 = vmatpush1.bf16.msra.mxu0 0
      %861 = vmatprep.subr.bf16.mxu0 0
      %862 = vmatpush1.bf16.msra.mxu0 0
      %863 = vmatprep.subr.bf16.mxu0 0
      %864 = vmatpush1.bf16.msra.mxu0 0
      %865 = vmatprep.subr.bf16.mxu0 0
      %866 = vmatpush1.bf16.msra.mxu0 0
      %867 = vmatprep.subr.bf16.mxu0 0
      %868 = vmatpush1.bf16.msra.mxu0 0
      %869 = vmatprep.subr.bf16.mxu0 0
      %870 = vmatpush1.bf16.msra.mxu0 0
      %871 = vmatprep.subr.bf16.mxu0 0
      %872 = vmatpush1.bf16.msra.mxu0 0
      %873 = vmatprep.subr.bf16.mxu0 0
      %874 = vmatpush1.bf16.msra.mxu0 0
      %875 = vmatprep.subr.bf16.mxu0 0
      %876 = vmatpush1.bf16.msra.mxu0 0
      %877 = vmatprep.mubr.bf16.mxu0 0
      %878 = vmatmul.mubr.bf16.gmra.mrb[0].mxu0 %v839
      %v879 = vpop.f32.mrb[0].mxu0
      %v880 = vadd.f32 0.0, %v879
      %v881 = vpop.f32.mrb[0].mxu0
      %v882 = vpop.f32.mrb[0].mxu0
      %v883 = vpop.f32.mrb[0].mxu0
      %884 = vdwg.mxu0
      %v885 = vpack.c.bf16 %v727, %v727
      %v886 = vpack.c.bf16 %v771, %v767
      %v888 = vrot.slane %v886, 1
      %890 = vmatprep.subr.bf16.mxu0 0
      %891 = vmatpush1.bf16.xpose.msra.mxu0 %v888
      %892 = vmatprep.subr.bf16.mxu0 0
      %893 = vmatpush1.bf16.xpose.msra.mxu0 0
      %894 = vmatprep.subr.bf16.mxu0 0
      %895 = vmatpush1.bf16.xpose.msra.mxu0 0
      %896 = vmatprep.subr.bf16.mxu0 0
      %897 = vmatpush1.bf16.xpose.msra.mxu0 0
      %898 = vmatprep.subr.bf16.mxu0 0
      %899 = vmatpush1.bf16.xpose.msra.mxu0 0
      %900 = vmatprep.subr.bf16.mxu0 0
      %901 = vmatpush1.bf16.xpose.msra.mxu0 0
      %902 = vmatprep.subr.bf16.mxu0 0
      %903 = vmatpush1.bf16.xpose.msra.mxu0 0
      %904 = vmatprep.subr.bf16.mxu0 0
      %905 = vmatpush1.bf16.xpose.msra.mxu0 0
      %906 = vmatprep.subr.bf16.mxu0 0
      %907 = vmatpush1.bf16.xpose.msra.mxu0 0
      %908 = vmatprep.subr.bf16.mxu0 0
      %909 = vmatpush1.bf16.xpose.msra.mxu0 0
      %910 = vmatprep.subr.bf16.mxu0 0
      %911 = vmatpush1.bf16.xpose.msra.mxu0 0
      %912 = vmatprep.subr.bf16.mxu0 0
      %913 = vmatpush1.bf16.xpose.msra.mxu0 0
      %914 = vmatprep.subr.bf16.mxu0 0
      %915 = vmatpush1.bf16.xpose.msra.mxu0 0
      %916 = vmatprep.subr.bf16.mxu0 0
      %917 = vmatpush1.bf16.xpose.msra.mxu0 0
      %918 = vmatprep.subr.bf16.mxu0 0
      %919 = vmatpush1.bf16.xpose.msra.mxu0 0
      %920 = vmatprep.subr.bf16.mxu0 0
      %921 = vmatpush1.bf16.xpose.msra.mxu0 0
      %922 = vmatprep.mubr.bf16.mxu0 0
      %923 = vmatmul.mubr.bf16.gmra.mrb[0].mxu0 %v885
      %v924 = vpop.f32.mrb[0].mxu0
      %v925 = vadd.f32 0.0, %v924
      %v926 = vpop.f32.mrb[0].mxu0
      %v927 = vpop.f32.mrb[0].mxu0
      %v928 = vpop.f32.mrb[0].mxu0
      %929 = vdwg.mxu0
      %v930 = vmul.f32 %v925, 0.088388346
      %v931 = vsel %vm821, %v930, -inf
      %932 = vmax.xlane.f32.xlu0 %v931
      %v933 = vpop.xlane.xlu0 %932
      %v934 = vsub.f32 %v930, %v933
      %v935 = vmul.f32 %v934, 1.442695
      %v936 = vpow.pop %v935
      %v937 = vsel %vm821, %v936, 0.0
      %938 = vadd.xlane.f32.xlu0 %v937
      %v939 = vpop.xlane.xlu0 %938
      %v940 = vrcp.pop %v939
      %v941 = vmul.f32 %v936, %v940
      %v942 = vpack.c.bf16 %v941, %v941
      %v943 = vpack.c.bf16 %v773, %v769
      %v945 = vrot.slane %v943, 1
      %v947 = vsel %vm837, %v942, 0
      %v950 = vsel %vm841, %v945, 0
      %952 = vmatprep.subr.bf16.mxu0 0
      %953 = vmatpush1.bf16.msra.mxu0 %v950
      %954 = vmatprep.subr.bf16.mxu0 0
      %955 = vmatpush1.bf16.msra.mxu0 0
      %956 = vmatprep.subr.bf16.mxu0 0
      %957 = vmatpush1.bf16.msra.mxu0 0
      %958 = vmatprep.subr.bf16.mxu0 0
      %959 = vmatpush1.bf16.msra.mxu0 0
      %960 = vmatprep.subr.bf16.mxu0 0
      %961 = vmatpush1.bf16.msra.mxu0 0
      %962 = vmatprep.subr.bf16.mxu0 0
      %963 = vmatpush1.bf16.msra.mxu0 0
      %964 = vmatprep.subr.bf16.mxu0 0
      %965 = vmatpush1.bf16.msra.mxu0 0
      %966 = vmatprep.subr.bf16.mxu0 0
      %967 = vmatpush1.bf16.msra.mxu0 0
      %968 = vmatprep.subr.bf16.mxu0 0
      %969 = vmatpush1.bf16.msra.mxu0 0
      %970 = vmatprep.subr.bf16.mxu0 0
      %971 = vmatpush1.bf16.msra.mxu0 0
      %972 = vmatprep.subr.bf16.mxu0 0
      %973 = vmatpush1.bf16.msra.mxu0 0
      %974 = vmatprep.subr.bf16.mxu0 0
      %975 = vmatpush1.bf16.msra.mxu0 0
      %976 = vmatprep.subr.bf16.mxu0 0
      %977 = vmatpush1.bf16.msra.mxu0 0
      %978 = vmatprep.subr.bf16.mxu0 0
      %979 = vmatpush1.bf16.msra.mxu0 0
      %980 = vmatprep.subr.bf16.mxu0 0
      %981 = vmatpush1.bf16.msra.mxu0 0
      %982 = vmatprep.subr.bf16.mxu0 0
      %983 = vmatpush1.bf16.msra.mxu0 0
      %984 = vmatprep.mubr.bf16.mxu0 0
      %985 = vmatmul.mubr.bf16.gmra.mrb[0].mxu0 %v947
      %v986 = vpop.f32.mrb[0].mxu0
      %v987 = vadd.f32 0.0, %v986
      %v988 = vpop.f32.mrb[0].mxu0
      %v989 = vpop.f32.mrb[0].mxu0
      %v990 = vpop.f32.mrb[0].mxu0
      %991 = vdwg.mxu0
      %v993 = vrot.slane %v987, 6
      %vm995 = vcmask 1041408
      %v996 = vsel %vm995, %v880, %v993
      %v997 = vpack.c.bf16 %v996, %v996
      %v998 = vld [vmem:[%s2] sm:$0xff]
      %v999 = vld [vmem:[%s2 + $0x8] sm:$0xff]
      %v1000 = vld [vmem:[%s2 + $0x10] sm:$0xff]
      %v1001 = vld [vmem:[%s2 + $0x18] sm:$0xff]
      %v1002 = vld [vmem:[%s2 + $0x20] sm:$0xff]
      %v1003 = vld [vmem:[%s2 + $0x28] sm:$0xff]
      %v1004 = vld [vmem:[%s2 + $0x30] sm:$0xff]
      %v1005 = vld [vmem:[%s2 + $0x38] sm:$0xff]
      %v1006 = vld [vmem:[%s2 + $0x40] sm:$0xff]
      %v1007 = vld [vmem:[%s2 + $0x48] sm:$0xff]
      %v1008 = vld [vmem:[%s2 + $0x50] sm:$0xff]
      %v1009 = vld [vmem:[%s2 + $0x58] sm:$0xff]
      %v1010 = vld [vmem:[%s2 + $0x60] sm:$0xff]
      %v1011 = vld [vmem:[%s2 + $0x68] sm:$0xff]
      %v1012 = vld [vmem:[%s2 + $0x70] sm:$0xff]
      %v1013 = vld [vmem:[%s2 + $0x78] sm:$0xff]
      %v1014 = vld [vmem:[%s3] sm:$0x3]
      %v1016 = vlaneseq
      %v1017 = vshrl.u32 %v1016, 7
      %v1018 = vsub.s32 0, %v1017
      %v1019 = vrot.slane %v1014, %v1018
      %v1020 = vlaneseq
      %v1021 = vshrl.u32 %v1020, 7
      %v1022 = vsub.s32 1, %v1021
      %v1023 = vrot.slane %v1014, %v1022
      %v1042 = vunpack.c.l.b16 %v998
      %v1043 = vunpack.c.h.b16 %v998
      %v1044 = vunpack.c.l.b16 %v999
      %v1045 = vunpack.c.h.b16 %v999
      %v1046 = vunpack.c.l.b16 %v1000
      %v1047 = vunpack.c.h.b16 %v1000
      %v1048 = vunpack.c.l.b16 %v1001
      %v1049 = vunpack.c.h.b16 %v1001
      %v1050 = vunpack.c.l.b16 %v1002
      %v1051 = vunpack.c.h.b16 %v1002
      %v1052 = vunpack.c.l.b16 %v1003
      %v1053 = vunpack.c.h.b16 %v1003
      %v1054 = vunpack.c.l.b16 %v1004
      %v1055 = vunpack.c.h.b16 %v1004
      %v1056 = vunpack.c.l.b16 %v1005
      %v1057 = vunpack.c.h.b16 %v1005
      %v1058 = vunpack.c.l.b16 %v1006
      %v1059 = vunpack.c.h.b16 %v1006
      %v1060 = vunpack.c.l.b16 %v1007
      %v1061 = vunpack.c.h.b16 %v1007
      %v1062 = vunpack.c.l.b16 %v1008
      %v1063 = vunpack.c.h.b16 %v1008
      %v1064 = vunpack.c.l.b16 %v1009
      %v1065 = vunpack.c.h.b16 %v1009
      %v1066 = vunpack.c.l.b16 %v1010
      %v1067 = vunpack.c.h.b16 %v1010
      %v1068 = vunpack.c.l.b16 %v1011
      %v1069 = vunpack.c.h.b16 %v1011
      %v1070 = vunpack.c.l.b16 %v1012
      %v1071 = vunpack.c.h.b16 %v1012
      %v1072 = vunpack.c.l.b16 %v1013
      %v1073 = vunpack.c.h.b16 %v1013
      %v1074 = vpack.c.b16 %v1044, %v1042
      %v1075 = vpack.c.b16 %v1045, %v1043
      %v1076 = vpack.c.b16 %v1048, %v1046
      %v1077 = vpack.c.b16 %v1049, %v1047
      %v1078 = vpack.c.b16 %v1052, %v1050
      %v1079 = vpack.c.b16 %v1053, %v1051
      %v1080 = vpack.c.b16 %v1056, %v1054
      %v1081 = vpack.c.b16 %v1057, %v1055
      %v1082 = vpack.c.b16 %v1060, %v1058
      %v1083 = vpack.c.b16 %v1061, %v1059
      %v1084 = vpack.c.b16 %v1064, %v1062
      %v1085 = vpack.c.b16 %v1065, %v1063
      %v1086 = vpack.c.b16 %v1068, %v1066
      %v1087 = vpack.c.b16 %v1069, %v1067
      %v1088 = vpack.c.b16 %v1072, %v1070
      %v1089 = vpack.c.b16 %v1073, %v1071
      %1106 = vmatprep.subr.bf16.mxu0 %v1075
      %1107 = vmatpush1.bf16.msra.mxu0 %v1074
      %1108 = vmatprep.subr.bf16.mxu0 %v1077
      %1109 = vmatpush1.bf16.msra.mxu0 %v1076
      %1110 = vmatprep.subr.bf16.mxu0 %v1079
      %1111 = vmatpush1.bf16.msra.mxu0 %v1078
      %1112 = vmatprep.subr.bf16.mxu0 %v1081
      %1113 = vmatpush1.bf16.msra.mxu0 %v1080
      %1114 = vmatprep.subr.bf16.mxu0 %v1083
      %1115 = vmatpush1.bf16.msra.mxu0 %v1082
      %1116 = vmatprep.subr.bf16.mxu0 %v1085
      %1117 = vmatpush1.bf16.msra.mxu0 %v1084
      %1118 = vmatprep.subr.bf16.mxu0 %v1087
      %1119 = vmatpush1.bf16.msra.mxu0 %v1086
      %1120 = vmatprep.subr.bf16.mxu0 %v1089
      %1121 = vmatpush1.bf16.msra.mxu0 %v1088
      %1122 = vmatprep.subr.bf16.mxu0 0
      %1123 = vmatpush1.bf16.msra.mxu0 0
      %1124 = vmatprep.subr.bf16.mxu0 0
      %1125 = vmatpush1.bf16.msra.mxu0 0
      %1126 = vmatprep.subr.bf16.mxu0 0
      %1127 = vmatpush1.bf16.msra.mxu0 0
      %1128 = vmatprep.subr.bf16.mxu0 0
      %1129 = vmatpush1.bf16.msra.mxu0 0
      %1130 = vmatprep.subr.bf16.mxu0 0
      %1131 = vmatpush1.bf16.msra.mxu0 0
      %1132 = vmatprep.subr.bf16.mxu0 0
      %1133 = vmatpush1.bf16.msra.mxu0 0
      %1134 = vmatprep.subr.bf16.mxu0 0
      %1135 = vmatpush1.bf16.msra.mxu0 0
      %1136 = vmatprep.subr.bf16.mxu0 0
      %1137 = vmatpush1.bf16.msra.mxu0 0
      %1138 = vmatprep.mubr.bf16.mxu0 0
      %1139 = vmatmul.mubr.bf16.gmra.mrb[0].mxu0 %v997
      %v1140 = vpop.f32.mrb[0].mxu0
      %v1141 = vadd.f32 %v1019, %v1140
      %v1142 = vpop.f32.mrb[0].mxu0
      %v1143 = vadd.f32 %v1023, %v1142
      %v1144 = vpop.f32.mrb[0].mxu0
      %v1145 = vpop.f32.mrb[0].mxu0
      %1146 = vdwg.mxu0
      %v1147 = vmax.f32 %v1141, 0.0
      %v1148 = vmax.f32 %v1143, 0.0
      %v1149 = vpack.c.bf16 %v1147, %v1147
      %v1150 = vpack.c.bf16 %v1148, %v1148
      %v1151 = vld [vmem:[%s4] sm:$0xff]
      %v1152 = vld [vmem:[%s4 + $0x8] sm:$0xff]
      %v1153 = vld [vmem:[%s4 + $0x10] sm:$0xff]
      %v1154 = vld [vmem:[%s4 + $0x18] sm:$0xff]
      %v1155 = vld [vmem:[%s4 + $0x20] sm:$0xff]
      %v1156 = vld [vmem:[%s4 + $0x28] sm:$0xff]
      %v1157 = vld [vmem:[%s4 + $0x30] sm:$0xff]
      %v1158 = vld [vmem:[%s4 + $0x38] sm:$0xff]
      %v1159 = vld [vmem:[%s4 + $0x40] sm:$0xff]
      %v1160 = vld [vmem:[%s4 + $0x48] sm:$0xff]
      %v1161 = vld [vmem:[%s4 + $0x50] sm:$0xff]
      %v1162 = vld [vmem:[%s4 + $0x58] sm:$0xff]
      %v1163 = vld [vmem:[%s4 + $0x60] sm:$0xff]
      %v1164 = vld [vmem:[%s4 + $0x68] sm:$0xff]
      %v1165 = vld [vmem:[%s4 + $0x70] sm:$0xff]
      %v1166 = vld [vmem:[%s4 + $0x78] sm:$0xff]
      %v1167 = vld [vmem:[%s4 + $0x80] sm:$0xff]
      %v1168 = vld [vmem:[%s4 + $0x88] sm:$0xff]
      %v1169 = vld [vmem:[%s4 + $0x90] sm:$0xff]
      %v1170 = vld [vmem:[%s4 + $0x98] sm:$0xff]
      %v1171 = vld [vmem:[%s4 + $0xa0] sm:$0xff]
      %v1172 = vld [vmem:[%s4 + $0xa8] sm:$0xff]
      %v1173 = vld [vmem:[%s4 + $0xb0] sm:$0xff]
      %v1174 = vld [vmem:[%s4 + $0xb8] sm:$0xff]
      %v1175 = vld [vmem:[%s4 + $0xc0] sm:$0xff]
      %v1176 = vld [vmem:[%s4 + $0xc8] sm:$0xff]
      %v1177 = vld [vmem:[%s4 + $0xd0] sm:$0xff]
      %v1178 = vld [vmem:[%s4 + $0xd8] sm:$0xff]
      %v1179 = vld [vmem:[%s4 + $0xe0] sm:$0xff]
      %v1180 = vld [vmem:[%s4 + $0xe8] sm:$0xff]
      %v1181 = vld [vmem:[%s4 + $0xf0] sm:$0xff]
      %v1182 = vld [vmem:[%s4 + $0xf8] sm:$0xff]
      %v1183 = vld [vmem:[%s5] sm:$0x3]
      %v1185 = vlaneseq
      %v1186 = vshrl.u32 %v1185, 7
      %v1187 = vsub.s32 0, %v1186
      %v1188 = vrot.slane %v1183, %v1187
      %v1189 = vlaneseq
      %v1190 = vshrl.u32 %v1189, 7
      %v1191 = vsub.s32 1, %v1190
      %v1192 = vrot.slane %v1183, %v1191
      %v1227 = vunpack.c.l.b16 %v1151
      %v1228 = vunpack.c.h.b16 %v1151
      %v1229 = vunpack.c.l.b16 %v1152
      %v1230 = vunpack.c.h.b16 %v1152
      %v1231 = vunpack.c.l.b16 %v1153
      %v1232 = vunpack.c.h.b16 %v1153
      %v1233 = vunpack.c.l.b16 %v1154
      %v1234 = vunpack.c.h.b16 %v1154
      %v1235 = vunpack.c.l.b16 %v1155
      %v1236 = vunpack.c.h.b16 %v1155
      %v1237 = vunpack.c.l.b16 %v1156
      %v1238 = vunpack.c.h.b16 %v1156
      %v1239 = vunpack.c.l.b16 %v1157
      %v1240 = vunpack.c.h.b16 %v1157
      %v1241 = vunpack.c.l.b16 %v1158
      %v1242 = vunpack.c.h.b16 %v1158
      %v1243 = vunpack.c.l.b16 %v1159
      %v1244 = vunpack.c.h.b16 %v1159
      %v1245 = vunpack.c.l.b16 %v1160
      %v1246 = vunpack.c.h.b16 %v1160
      %v1247 = vunpack.c.l.b16 %v1161
      %v1248 = vunpack.c.h.b16 %v1161
      %v1249 = vunpack.c.l.b16 %v1162
      %v1250 = vunpack.c.h.b16 %v1162
      %v1251 = vunpack.c.l.b16 %v1163
      %v1252 = vunpack.c.h.b16 %v1163
      %v1253 = vunpack.c.l.b16 %v1164
      %v1254 = vunpack.c.h.b16 %v1164
      %v1255 = vunpack.c.l.b16 %v1165
      %v1256 = vunpack.c.h.b16 %v1165
      %v1257 = vunpack.c.l.b16 %v1166
      %v1258 = vunpack.c.h.b16 %v1166
      %v1259 = vunpack.c.l.b16 %v1167
      %v1260 = vunpack.c.h.b16 %v1167
      %v1261 = vunpack.c.l.b16 %v1168
      %v1262 = vunpack.c.h.b16 %v1168
      %v1263 = vunpack.c.l.b16 %v1169
      %v1264 = vunpack.c.h.b16 %v1169
      %v1265 = vunpack.c.l.b16 %v1170
      %v1266 = vunpack.c.h.b16 %v1170
      %v1267 = vunpack.c.l.b16 %v1171
      %v1268 = vunpack.c.h.b16 %v1171
      %v1269 = vunpack.c.l.b16 %v1172
      %v1270 = vunpack.c.h.b16 %v1172
      %v1271 = vunpack.c.l.b16 %v1173
      %v1272 = vunpack.c.h.b16 %v1173
      %v1273 = vunpack.c.l.b16 %v1174
      %v1274 = vunpack.c.h.b16 %v1174
      %v1275 = vunpack.c.l.b16 %v1175
      %v1276 = vunpack.c.h.b16 %v1175
      %v1277 = vunpack.c.l.b16 %v1176
      %v1278 = vunpack.c.h.b16 %v1176
      %v1279 = vunpack.c.l.b16 %v1177
      %v1280 = vunpack.c.h.b16 %v1177
      %v1281 = vunpack.c.l.b16 %v1178
      %v1282 = vunpack.c.h.b16 %v1178
      %v1283 = vunpack.c.l.b16 %v1179
      %v1284 = vunpack.c.h.b16 %v1179
      %v1285 = vunpack.c.l.b16 %v1180
      %v1286 = vunpack.c.h.b16 %v1180
      %v1287 = vunpack.c.l.b16 %v1181
      %v1288 = vunpack.c.h.b16 %v1181
      %v1289 = vunpack.c.l.b16 %v1182
      %v1290 = vunpack.c.h.b16 %v1182
      %v1291 = vpack.c.b16 %v1229, %v1227
      %v1292 = vpack.c.b16 %v1230, %v1228
      %v1293 = vpack.c.b16 %v1233, %v1231
      %v1294 = vpack.c.b16 %v1234, %v1232
      %v1295 = vpack.c.b16 %v1237, %v1235
      %v1296 = vpack.c.b16 %v1238, %v1236
      %v1297 = vpack.c.b16 %v1241, %v1239
      %v1298 = vpack.c.b16 %v1242, %v1240
      %v1299 = vpack.c.b16 %v1245, %v1243
      %v1300 = vpack.c.b16 %v1246, %v1244
      %v1301 = vpack.c.b16 %v1249, %v1247
      %v1302 = vpack.c.b16 %v1250, %v1248
      %v1303 = vpack.c.b16 %v1253, %v1251
      %v1304 = vpack.c.b16 %v1254, %v1252
      %v1305 = vpack.c.b16 %v1257, %v1255
      %v1306 = vpack.c.b16 %v1258, %v1256
      %v1307 = vpack.c.b16 %v1261, %v1259
      %v1308 = vpack.c.b16 %v1262, %v1260
      %v1309 = vpack.c.b16 %v1265, %v1263
      %v1310 = vpack.c.b16 %v1266, %v1264
      %v1311 = vpack.c.b16 %v1269, %v1267
      %v1312 = vpack.c.b16 %v1270, %v1268
      %v1313 = vpack.c.b16 %v1273, %v1271
      %v1314 = vpack.c.b16 %v1274, %v1272
      %v1315 = vpack.c.b16 %v1277, %v1275
      %v1316 = vpack.c.b16 %v1278, %v1276
      %v1317 = vpack.c.b16 %v1281, %v1279
      %v1318 = vpack.c.b16 %v1282, %v1280
      %v1319 = vpack.c.b16 %v1285, %v1283
      %v1320 = vpack.c.b16 %v1286, %v1284
      %v1321 = vpack.c.b16 %v1289, %v1287
      %v1322 = vpack.c.b16 %v1290, %v1288
      %1355 = vmatprep.subr.bf16.mxu0 %v1292
      %1356 = vmatpush1.bf16.msra.mxu0 %v1291
      %1357 = vmatprep.subr.bf16.mxu0 %v1294
      %1358 = vmatpush1.bf16.msra.mxu0 %v1293
      %1359 = vmatprep.subr.bf16.mxu0 %v1296
      %1360 = vmatpush1.bf16.msra.mxu0 %v1295
      %1361 = vmatprep.subr.bf16.mxu0 %v1298
      %1362 = vmatpush1.bf16.msra.mxu0 %v1297
      %1363 = vmatprep.subr.bf16.mxu0 %v1300
      %1364 = vmatpush1.bf16.msra.mxu0 %v1299
      %1365 = vmatprep.subr.bf16.mxu0 %v1302
      %1366 = vmatpush1.bf16.msra.mxu0 %v1301
      %1367 = vmatprep.subr.bf16.mxu0 %v1304
      %1368 = vmatpush1.bf16.msra.mxu0 %v1303
      %1369 = vmatprep.subr.bf16.mxu0 %v1306
      %1370 = vmatpush1.bf16.msra.mxu0 %v1305
      %1371 = vmatprep.subr.bf16.mxu0 %v1308
      %1372 = vmatpush1.bf16.msra.mxu0 %v1307
      %1373 = vmatprep.subr.bf16.mxu0 %v1310
      %1374 = vmatpush1.bf16.msra.mxu0 %v1309
      %1375 = vmatprep.subr.bf16.mxu0 %v1312
      %1376 = vmatpush1.bf16.msra.mxu0 %v1311
      %1377 = vmatprep.subr.bf16.mxu0 %v1314
      %1378 = vmatpush1.bf16.msra.mxu0 %v1313
      %1379 = vmatprep.subr.bf16.mxu0 %v1316
      %1380 = vmatpush1.bf16.msra.mxu0 %v1315
      %1381 = vmatprep.subr.bf16.mxu0 %v1318
      %1382 = vmatpush1.bf16.msra.mxu0 %v1317
      %1383 = vmatprep.subr.bf16.mxu0 %v1320
      %1384 = vmatpush1.bf16.msra.mxu0 %v1319
      %1385 = vmatprep.subr.bf16.mxu0 %v1322
      %1386 = vmatpush1.bf16.msra.mxu0 %v1321
      %1387 = vmatprep.mubr.bf16.mxu0 %v1150
      %1388 = vmatmul.mubr.bf16.gmra.mrb[0].mxu0 %v1149
      %v1389 = vpop.f32.mrb[0].mxu0
      %v1390 = vadd.f32 %v1188, %v1389
      %v1391 = vpop.f32.mrb[0].mxu0
      %v1392 = vadd.f32 %v1192, %v1391
      %v1393 = vpop.f32.mrb[0].mxu0
      %v1394 = vpop.f32.mrb[0].mxu0
      %1395 = vdwg.mxu0
      %v1396 = vpack.c.bf16 %v1390, %v1390
      %v1397 = vld [vmem:[%s6] sm:$0xf]
      %v1398 = vld [vmem:[%s6 + $0x4] sm:$0xf]
      %v1399 = vld [vmem:[%s6 + $0x8] sm:$0xf]
      %v1400 = vld [vmem:[%s6 + $0xc] sm:$0xf]
      %v1401 = vld [vmem:[%s6 + $0x10] sm:$0xf]
      %v1402 = vld [vmem:[%s6 + $0x14] sm:$0xf]
      %v1403 = vld [vmem:[%s6 + $0x18] sm:$0xf]
      %v1404 = vld [vmem:[%s6 + $0x1c] sm:$0xf]
      %v1405 = vld [vmem:[%s6 + $0x20] sm:$0xf]
      %v1406 = vld [vmem:[%s6 + $0x24] sm:$0xf]
      %v1407 = vld [vmem:[%s6 + $0x28] sm:$0xf]
      %v1408 = vld [vmem:[%s6 + $0x2c] sm:$0xf]
      %v1409 = vld [vmem:[%s6 + $0x30] sm:$0xf]
      %v1410 = vld [vmem:[%s6 + $0x34] sm:$0xf]
      %v1411 = vld [vmem:[%s6 + $0x38] sm:$0xf]
      %v1412 = vld [vmem:[%s6 + $0x3c] sm:$0xf]
      %v1413 = vld [vmem:[%s7] sm:$0x1]
      %v1415 = vlaneseq
      %v1416 = vshrl.u32 %v1415, 7
      %v1417 = vsub.s32 0, %v1416
      %v1418 = vrot.slane %v1413, %v1417
      %v1436 = vunpack.c.l.b16 %v1397
      %v1437 = vunpack.c.l.b16 %v1398
      %v1438 = vunpack.c.l.b16 %v1399
      %v1439 = vunpack.c.l.b16 %v1400
      %v1440 = vunpack.c.l.b16 %v1401
      %v1441 = vunpack.c.l.b16 %v1402
      %v1442 = vunpack.c.l.b16 %v1403
      %v1443 = vunpack.c.l.b16 %v1404
      %v1444 = vunpack.c.l.b16 %v1405
      %v1445 = vunpack.c.l.b16 %v1406
      %v1446 = vunpack.c.l.b16 %v1407
      %v1447 = vunpack.c.l.b16 %v1408
      %v1448 = vunpack.c.l.b16 %v1409
      %v1449 = vunpack.c.l.b16 %v1410
      %v1450 = vunpack.c.l.b16 %v1411
      %v1451 = vunpack.c.l.b16 %v1412
      %v1452 = vpack.c.b16 %v1437, %v1436
      %v1453 = vpack.c.b16 %v1439, %v1438
      %v1454 = vpack.c.b16 %v1441, %v1440
      %v1455 = vpack.c.b16 %v1443, %v1442
      %v1456 = vpack.c.b16 %v1445, %v1444
      %v1457 = vpack.c.b16 %v1447, %v1446
      %v1458 = vpack.c.b16 %v1449, %v1448
      %v1459 = vpack.c.b16 %v1451, %v1450
      %1468 = vmatprep.subr.bf16.mxu0 0
      %1469 = vmatpush1.bf16.msra.mxu0 %v1452
      %1470 = vmatprep.subr.bf16.mxu0 0
      %1471 = vmatpush1.bf16.msra.mxu0 %v1453
      %1472 = vmatprep.subr.bf16.mxu0 0
      %1473 = vmatpush1.bf16.msra.mxu0 %v1454
      %1474 = vmatprep.subr.bf16.mxu0 0
      %1475 = vmatpush1.bf16.msra.mxu0 %v1455
      %1476 = vmatprep.subr.bf16.mxu0 0
      %1477 = vmatpush1.bf16.msra.mxu0 %v1456
      %1478 = vmatprep.subr.bf16.mxu0 0
      %1479 = vmatpush1.bf16.msra.mxu0 %v1457
      %1480 = vmatprep.subr.bf16.mxu0 0
      %1481 = vmatpush1.bf16.msra.mxu0 %v1458
      %1482 = vmatprep.subr.bf16.mxu0 0
      %1483 = vmatpush1.bf16.msra.mxu0 %v1459
      %1484 = vmatprep.subr.bf16.mxu0 0
      %1485 = vmatpush1.bf16.msra.mxu0 0
      %1486 = vmatprep.subr.bf16.mxu0 0
      %1487 = vmatpush1.bf16.msra.mxu0 0
      %1488 = vmatprep.subr.bf16.mxu0 0
      %1489 = vmatpush1.bf16.msra.mxu0 0
      %1490 = vmatprep.subr.bf16.mxu0 0
      %1491 = vmatpush1.bf16.msra.mxu0 0
      %1492 = vmatprep.subr.bf16.mxu0 0
      %1493 = vmatpush1.bf16.msra.mxu0 0
      %1494 = vmatprep.subr.bf16.mxu0 0
      %1495 = vmatpush1.bf16.msra.mxu0 0
      %1496 = vmatprep.subr.bf16.mxu0 0
      %1497 = vmatpush1.bf16.msra.mxu0 0
      %1498 = vmatprep.subr.bf16.mxu0 0
      %1499 = vmatpush1.bf16.msra.mxu0 0
      %1500 = vmatprep.mubr.bf16.mxu0 0
      %1501 = vmatmul.mubr.bf16.gmra.mrb[0].mxu0 %v1396
      %v1502 = vpop.f32.mrb[0].mxu0
      %v1503 = vadd.f32 %v1418, %v1502
      %v1504 = vpop.f32.mrb[0].mxu0
      %v1505 = vpop.f32.mrb[0].mxu0
      %v1506 = vpop.f32.mrb[0].mxu0
      %1507 = vdwg.mxu0
      %v1508 = vmax.f32 %v1503, 0.0
      %v1509 = vpack.c.bf16 %v1508, %v1508
      %v1510 = vld [vmem:[%s8] sm:$0xf]
      %v1511 = vld [vmem:[%s8 + $0x4] sm:$0xf]
      %v1512 = vld [vmem:[%s8 + $0x8] sm:$0xf]
      %v1513 = vld [vmem:[%s8 + $0xc] sm:$0xf]
      %v1514 = vld [vmem:[%s8 + $0x10] sm:$0xf]
      %v1515 = vld [vmem:[%s8 + $0x14] sm:$0xf]
      %v1516 = vld [vmem:[%s8 + $0x18] sm:$0xf]
      %v1517 = vld [vmem:[%s8 + $0x1c] sm:$0xf]
      %v1518 = vld [vmem:[%s8 + $0x20] sm:$0xf]
      %v1519 = vld [vmem:[%s8 + $0x24] sm:$0xf]
      %v1520 = vld [vmem:[%s8 + $0x28] sm:$0xf]
      %v1521 = vld [vmem:[%s8 + $0x2c] sm:$0xf]
      %v1522 = vld [vmem:[%s8 + $0x30] sm:$0xf]
      %v1523 = vld [vmem:[%s8 + $0x34] sm:$0xf]
      %v1524 = vld [vmem:[%s8 + $0x38] sm:$0xf]
      %v1525 = vld [vmem:[%s8 + $0x3c] sm:$0xf]
      %v1526 = vld [vmem:[%s9] sm:$0x1]
      %v1528 = vlaneseq
      %v1529 = vshrl.u32 %v1528, 7
      %v1530 = vsub.s32 0, %v1529
      %v1531 = vrot.slane %v1526, %v1530
      %v1549 = vunpack.c.l.b16 %v1510
      %v1550 = vunpack.c.l.b16 %v1511
      %v1551 = vunpack.c.l.b16 %v1512
      %v1552 = vunpack.c.l.b16 %v1513
      %v1553 = vunpack.c.l.b16 %v1514
      %v1554 = vunpack.c.l.b16 %v1515
      %v1555 = vunpack.c.l.b16 %v1516
      %v1556 = vunpack.c.l.b16 %v1517
      %v1557 = vunpack.c.l.b16 %v1518
      %v1558 = vunpack.c.l.b16 %v1519
      %v1559 = vunpack.c.l.b16 %v1520
      %v1560 = vunpack.c.l.b16 %v1521
      %v1561 = vunpack.c.l.b16 %v1522
      %v1562 = vunpack.c.l.b16 %v1523
      %v1563 = vunpack.c.l.b16 %v1524
      %v1564 = vunpack.c.l.b16 %v1525
      %v1565 = vpack.c.b16 %v1550, %v1549
      %v1566 = vpack.c.b16 %v1552, %v1551
      %v1567 = vpack.c.b16 %v1554, %v1553
      %v1568 = vpack.c.b16 %v1556, %v1555
      %v1569 = vpack.c.b16 %v1558, %v1557
      %v1570 = vpack.c.b16 %v1560, %v1559
      %v1571 = vpack.c.b16 %v1562, %v1561
      %v1572 = vpack.c.b16 %v1564, %v1563
      %1581 = vmatprep.subr.bf16.mxu0 0
      %1582 = vmatpush1.bf16.msra.mxu0 %v1565
      %1583 = vmatprep.subr.bf16.mxu0 0
      %1584 = vmatpush1.bf16.msra.mxu0 %v1566
      %1585 = vmatprep.subr.bf16.mxu0 0
      %1586 = vmatpush1.bf16.msra.mxu0 %v1567
      %1587 = vmatprep.subr.bf16.mxu0 0
      %1588 = vmatpush1.bf16.msra.mxu0 %v1568
      %1589 = vmatprep.subr.bf16.mxu0 0
      %1590 = vmatpush1.bf16.msra.mxu0 %v1569
      %1591 = vmatprep.subr.bf16.mxu0 0
      %1592 = vmatpush1.bf16.msra.mxu0 %v1570
      %1593 = vmatprep.subr.bf16.mxu0 0
      %1594 = vmatpush1.bf16.msra.mxu0 %v1571
      %1595 = vmatprep.subr.bf16.mxu0 0
      %1596 = vmatpush1.bf16.msra.mxu0 %v1572
      %1597 = vmatprep.subr.bf16.mxu0 0
      %1598 = vmatpush1.bf16.msra.mxu0 0
      %1599 = vmatprep.subr.bf16.mxu0 0
      %1600 = vmatpush1.bf16.msra.mxu0 0
      %1601 = vmatprep.subr.bf16.mxu0 0
      %1602 = vmatpush1.bf16.msra.mxu0 0
      %1603 = vmatprep.subr.bf16.mxu0 0
      %1604 = vmatpush1.bf16.msra.mxu0 0
      %1605 = vmatprep.subr.bf16.mxu0 0
      %1606 = vmatpush1.bf16.msra.mxu0 0
      %1607 = vmatprep.subr.bf16.mxu0 0
      %1608 = vmatpush1.bf16.msra.mxu0 0
      %1609 = vmatprep.subr.bf16.mxu0 0
      %1610 = vmatpush1.bf16.msra.mxu0 0
      %1611 = vmatprep.subr.bf16.mxu0 0
      %1612 = vmatpush1.bf16.msra.mxu0 0
      %1613 = vmatprep.mubr.bf16.mxu0 0
      %1614 = vmatmul.mubr.bf16.gmra.mrb[0].mxu0 %v1509
      %v1615 = vpop.f32.mrb[0].mxu0
      %v1616 = vadd.f32 %v1531, %v1615
      %v1617 = vpop.f32.mrb[0].mxu0
      %v1618 = vpop.f32.mrb[0].mxu0
      %v1619 = vpop.f32.mrb[0].mxu0
      %1620 = vdwg.mxu0
      %v1621 = vmul.f32 %v1616, %v1616
      %vm1622 = vcmask 1040384
      %v1623 = vsel %vm1622, %v1621, 0.0
      %1624 = vadd.xlane.f32.xlu0 %v1623
      %v1625 = vpop.xlane.xlu0 %1624
      %v1626 = vmax.f32 %v1625, 1e-16
      %v1627 = vrsqrt.pop %v1626
      %v1628 = vmul.f32 %v1616, %v1627
      %v1629 = vmul.f32 %v1392, %v1392
      %vm1630 = vcmask 1043459
      %v1631 = vsel %vm1630, %v1629, 0.0
      %1632 = vadd.xlane.f32.xlu0 %v1631
      %v1633 = vpop.xlane.xlu0 %1632
      %v1634 = vmax.f32 %v1633, 1e-16
      %v1635 = vrsqrt.pop %v1634
      %v1636 = vmul.f32 %v1392, %v1635
      %v1638 = vrot.slane %v1636, 3
      %v1640 = vmul.f32 %v1628, %v1638
      %v1641 = vsel %vm1622, %v1640, 0.0
      %1642 = vadd.xlane.f32.xlu0 %v1641
      %v1643 = vpop.xlane.xlu0 %1642
      %v1644 = vmul.f32 %v1643, 2.0
      %v1645 = vsub.f32 2.0, %v1644
      %vm1646 = vcmask 1041409
      %v1647 = vsel %vm1646, %v1621, 0.0
      %1648 = vadd.xlane.f32.xlu0 %v1647
      %v1649 = vpop.xlane.xlu0 %1648
      %v1650 = vmax.f32 %v1649, 1e-16
      %v1651 = vrsqrt.pop %v1650
      %v1652 = vmul.f32 %v1616, %v1651
      %vm1653 = vcmask 1042434
      %v1654 = vsel %vm1653, %v1629, 0.0
      %1655 = vadd.xlane.f32.xlu0 %v1654
      %v1656 = vpop.xlane.xlu0 %1655
      %v1657 = vmax.f32 %v1656, 1e-16
      %v1658 = vrsqrt.pop %v1657
      %v1659 = vmul.f32 %v1392, %v1658
      %v1661 = vrot.slane %v1659, 1
      %v1663 = vmul.f32 %v1652, %v1661
      %v1664 = vsel %vm1646, %v1663, 0.0
      %1665 = vadd.xlane.f32.xlu0 %v1664
      %v1666 = vpop.xlane.xlu0 %1665
      %v1667 = vmul.f32 %v1666, 2.0
      %v1668 = vsub.f32 2.0, %v1667
      %v1670 = vrot.slane %v1668, 1
      %v1672 = vadd.f32 %v1645, %v1670
      %1674 = vset.pattern.permute.xlu0 0
      %1675 = vperm.xlu0 %1674, %v1672
      %v1676 = vpop.permute.xlu0 %1675
      %1678 = vst [vmem:[%s355] sm:$0x1] %v1676
      %p1679 = scmp.lt.s32.totalorder %s21, 1
      %s1680 = scalar_select %p1679, %s21, 1
      %s1681 = scalar_lea.vmem %s10, %s1680
      // Predicated region
      $region61: #{sim_attention_multi_x_attn_forward.5} parent=59 // pred_check
        %p1682 = pneg %p254
      $region62: #{sim_attention_multi_x_attn_forward.5} parent=59 // pred_check_branch
        %1684 = sbr.rel (%p1682) target = $region64
      $region63: #{sim_attention_multi_x_attn_forward.5} parent=59 // pred_region
        _
      $region64: #{sim_attention_multi_x_attn_forward.5} parent=59 // pred_fallthru
        _
    $region60: #{sim_attention_multi_x_attn_forward.5} parent=5 // pred_fallthru
      _
    %p1685 = scmp.le.s32.totalorder 2, %s16
    // Predicated region
    $region65: #{sim_attention_multi_x_attn_forward.5} parent=5 // pred_check
      %p1686 = pneg %p1685
    $region66: #{sim_attention_multi_x_attn_forward.5} parent=5 // pred_check_branch
      %1688 = sbr.rel (%p1686) target = $region68
    $region67: #{sim_attention_multi_x_attn_forward.5} parent=5 // pred_region
      %s1689 = ssub.s32 %s16, 2
      // Predicated region
      $region69: #{sim_attention_multi_x_attn_forward.5} parent=67 // pred_check
        %p1690 = pneg %p260
      $region70: #{sim_attention_multi_x_attn_forward.5} parent=67 // pred_check_branch
        %1692 = sbr.rel (%p1690) target = $region72
      $region71: #{sim_attention_multi_x_attn_forward.5} parent=67 // pred_region
        %p1693 = scmp.lt.s32.totalorder %s22, 1
        %s1694 = scalar_select %p1693, %s22, 1
        %s1695 = scalar_lea.vmem %s10, %s1694
      $region72: #{sim_attention_multi_x_attn_forward.5} parent=67 // pred_fallthru
        _
    $region68: #{sim_attention_multi_x_attn_forward.5} parent=5 // pred_fallthru
      _
  $region6: #{sim_attention_multi_x_attn_forward.5} parent=0 // loop_footer
    %s20 = sadd.s32 1, %s16
  $region7: #{sim_attention_multi_x_attn_forward.5} parent=0 // loop_footer_branch
    %15 = sbr.rel target = $region3
  $region8: #{sim_attention_multi_x_attn_forward.5} parent=0 // loop_exit
    _

</llo_original>
